<compile_context>
chip_gen: v5e
topology: v5e:2x2
jax: 0.10.0
libtpu: 0.0.40
codegen_flags: <defaults>
</compile_context>

<pallas_src>
import jax
import jax.numpy as jnp
from jax.experimental import pallas as pl
from jax.experimental.pallas import tpu as pltpu

# ----------------------------- logical model sizes -----------------------------
VOCAB = 64          # vocabulary size
HID = 32            # hidden size == embedding size (as in the tutorial)
SEQ = 8             # encoder input length
NUM_LAYERS = 1      # decoder.num_layers
SOS = 1
EOS = 2
MAX_LENGTH = 6

# ------------------------------ lane-padded sizes -------------------------------
HID_P = 128         # hidden padded to the TPU lane width
VOCAB_P = 128       # vocab padded to the TPU lane width
NEG_INF = -1e30     # bias for padded vocab columns (never wins argmax, exp() == 0)

_VMEM = pl.BlockSpec(memory_space=pltpu.MemorySpace.VMEM)
_SMEM = pl.BlockSpec(memory_space=pltpu.MemorySpace.SMEM)


# ------------------------------ fused greedy kernel ------------------------------
def _greedy_decode_kernel(
    seq_ref,                                                # SMEM [T] i32 token ids
    emb_enc_wih_ref, enc_whh_ref, enc_bih_ref, enc_bhh_ref, # encoder params
    emb_dec_wih_ref, dec_whh_ref, dec_bih_ref, dec_bhh_ref, # decoder GRU params
    wc_rnn_ref, wc_ctx_ref, bc_ref,                         # concat layer (split weights)
    wo_ref, bo_ref,                                         # output projection
    tok_ref, score_ref,                                     # outputs [1,ML] i32 / f32
):
    f32 = jnp.float32
    bf16 = jnp.bfloat16
    T = seq_ref.shape[0]
    Vp = emb_enc_wih_ref.shape[0]
    Hp = wc_rnn_ref.shape[0]
    ML = tok_ref.shape[1]

    vocab_cols = jax.lax.broadcasted_iota(jnp.int32, (1, Vp), 1)

    # ---------------- encoder: embedding + input projection, fused ----------------
    # Build the [T,Vp] one-hot of the input tokens in-register (1 vreg, 8 selects).
    row_iota_tv = jax.lax.broadcasted_iota(jnp.int32, (T, Vp), 0)
    col_iota_tv = jax.lax.broadcasted_iota(jnp.int32, (T, Vp), 1)
    x_onehot = jnp.zeros((T, Vp), f32)
    for t in range(T):
        hit = jnp.logical_and(row_iota_tv == t, col_iota_tv == seq_ref[t])
        x_onehot = jnp.where(hit, 1.0, x_onehot)

    # One [T,Vp]@[Vp,3Hp] matmul == embedding lookup + GRU input projection hoisted
    # out of the recurrence.  Kept as a value (3 vregs); sliced statically below.
    gx_all = jnp.dot(x_onehot.astype(bf16), emb_enc_wih_ref[...],
                     preferred_element_type=f32) + enc_bih_ref[...]      # [T, 3Hp]

    # ---------------- encoder GRU recurrence (fully unrolled, T=8) ----------------
    enc_bhh = enc_bhh_ref[...]
    row_iota_th = jax.lax.broadcasted_iota(jnp.int32, (T, Hp), 0)
    h = jnp.zeros((1, Hp), f32)
    enc_out = jnp.zeros((T, Hp), f32)
    for t in range(T):
        gx = gx_all[t:t + 1, :]                                           # static slice
        gh = jnp.dot(h.astype(bf16), enc_whh_ref[...],
                     preferred_element_type=f32) + enc_bhh
        # PyTorch GRU gate ordering: [reset, update, new]
        r = jax.nn.sigmoid(gx[:, 0:Hp] + gh[:, 0:Hp])
        z = jax.nn.sigmoid(gx[:, Hp:2 * Hp] + gh[:, Hp:2 * Hp])
        n = jnp.tanh(gx[:, 2 * Hp:3 * Hp] + r * gh[:, 2 * Hp:3 * Hp])
        h = (1.0 - z) * n + z * h                                         # [1, Hp]
        enc_out = jnp.where(row_iota_th == t, h, enc_out)                 # register-resident

    # Loop-invariant pre-projection of the attention values through wc_ctx: the
    # per-step `context @ wc_ctx` collapses into a single `attn @ enc_ctx`.
    enc_ctx = jnp.dot(enc_out.astype(bf16), wc_ctx_ref[...],
                      preferred_element_type=f32)                          # [T, Hp]

    # ---------------- greedy decoding: all MAX_LENGTH steps fused ----------------
    dec_bih = dec_bih_ref[...]
    dec_bhh = dec_bhh_ref[...]
    bc = bc_ref[...]
    bo = bo_ref[...]
    out_cols = jax.lax.broadcasted_iota(jnp.int32, (1, ML), 1)

    tokens = jnp.zeros((1, ML), jnp.int32)
    scores = jnp.zeros((1, ML), f32)
    prev_tok = jnp.full((1, 1), SOS, jnp.int32)      # SOS baked as a constant
    done = jnp.zeros((1, 1), jnp.int32)
    # h carries over: decoder_hidden = encoder_hidden[:num_layers], num_layers == 1

    for i in range(ML):
        active = done == 0                                                 # [1,1] bool

        # Embedding lookup fused into the GRU input projection: one_hot @ (emb @ W_ih).
        one_hot = (vocab_cols == prev_tok).astype(f32)                     # [1, Vp]
        gx = jnp.dot(one_hot.astype(bf16), emb_dec_wih_ref[...],
                     preferred_element_type=f32) + dec_bih
        gh = jnp.dot(h.astype(bf16), dec_whh_ref[...],
                     preferred_element_type=f32) + dec_bhh
        r = jax.nn.sigmoid(gx[:, 0:Hp] + gh[:, 0:Hp])
        z = jax.nn.sigmoid(gx[:, Hp:2 * Hp] + gh[:, Hp:2 * Hp])
        n = jnp.tanh(gx[:, 2 * Hp:3 * Hp] + r * gh[:, 2 * Hp:3 * Hp])
        h_new = (1.0 - z) * n + z * h                                      # [1, Hp]

        # Luong "dot" attention.  NT dot_general (contract last axes): no transpose of
        # enc_out is materialized; softmax normalization via EUP reciprocal.
        energies = jax.lax.dot_general(
            h_new, enc_out, (((1,), (1,)), ((), ())),
            preferred_element_type=f32)                                    # [1, T]
        e_max = jnp.max(energies, axis=1, keepdims=True)
        e_exp = jnp.exp(energies - e_max)
        attn = e_exp * pl.reciprocal(
            jnp.sum(e_exp, axis=1, keepdims=True), approx=True)           # [1, T]

        # Concat layer: attn @ (enc_out @ wc_ctx)  +  h_new @ wc_rnn.
        ctx_term = jnp.dot(attn, enc_ctx, preferred_element_type=f32)      # [1, Hp]
        rnn_term = jnp.dot(h_new.astype(bf16), wc_rnn_ref[...],
                           preferred_element_type=f32)                     # [1, Hp]
        concat_out = jnp.tanh(rnn_term + ctx_term + bc)
        logits = jnp.dot(concat_out.astype(bf16), wo_ref[...],
                         preferred_element_type=f32) + bo                  # [1, Vp]

        # argmax(softmax(x)) == argmax(x); score = max prob = 1 / sum(exp(x - max)).
        l_max = jnp.max(logits, axis=1, keepdims=True)                     # [1,1]
        idx = jnp.min(jnp.where(logits >= l_max, vocab_cols, Vp),
                      axis=1, keepdims=True)                               # [1,1] i32
        sum_exp = jnp.sum(jnp.exp(logits - l_max), axis=1, keepdims=True)
        score = pl.reciprocal(sum_exp)     # exact recip; off the token-selection path

        # Record token/score at position i while not done (masked updates).
        wmask = jnp.logical_and(out_cols == i, active)                     # [1,ML]
        tokens = jnp.where(wmask, idx, tokens)
        scores = jnp.where(wmask, score, scores)

        is_eos = jnp.logical_and(active, idx == EOS)                       # EOS constant
        done = jnp.where(is_eos, jnp.int32(1), done)
        h = jnp.where(active, h_new, h)
        prev_tok = jnp.where(active, idx, prev_tok)

    # Single writes of the whole result rows.
    tok_ref[...] = tokens
    score_ref[...] = scores


# ------------------------------- parameter init ---------------------------------
def init_params(key):
    ks = jax.random.split(key, 12)
    s = 0.2
    return {
        "embedding": jax.random.normal(ks[0], (VOCAB, HID), jnp.float32) * s,
        "enc_wih": jax.random.normal(ks[1], (HID, 3 * HID), jnp.float32) * s,
        "enc_whh": jax.random.normal(ks[2], (HID, 3 * HID), jnp.float32) * s,
        "enc_bih": jax.random.normal(ks[3], (1, 3 * HID), jnp.float32) * s,
        "enc_bhh": jax.random.normal(ks[4], (1, 3 * HID), jnp.float32) * s,
        "dec_wih": jax.random.normal(ks[5], (HID, 3 * HID), jnp.float32) * s,
        "dec_whh": jax.random.normal(ks[6], (HID, 3 * HID), jnp.float32) * s,
        "dec_bih": jax.random.normal(ks[7], (1, 3 * HID), jnp.float32) * s,
        "dec_bhh": jax.random.normal(ks[8], (1, 3 * HID), jnp.float32) * s,
        "wc": jax.random.normal(ks[9], (2 * HID, HID), jnp.float32) * s,
        "bc": jnp.zeros((1, HID), jnp.float32),
        "wo": jax.random.normal(ks[10], (HID, VOCAB), jnp.float32) * s,
        "bo": jnp.zeros((1, VOCAB), jnp.float32),
    }


def pad_params(p):
    """Pad to lane width, fold the embedding into the GRU input projections, and cast
    matmul weights to bf16 (biases stay f32).

    Padded hidden lanes stay exactly zero through the GRU/attention/concat math
    (zero weight columns + zero biases), and padded vocab columns get a -1e30 output
    bias so argmax/softmax ignore them."""
    H, Hp, V, Vp = HID, HID_P, VOCAB, VOCAB_P
    f32, bf16 = jnp.float32, jnp.bfloat16

    def pad_gru_w(w):                                   # [H,3H] -> [Hp,3Hp] (per gate)
        out = jnp.zeros((Hp, 3 * Hp), f32)
        for g in range(3):
            out = out.at[:H, g * Hp:g * Hp + H].set(w[:, g * H:(g + 1) * H])
        return out

    def pad_gru_b(b):                                   # [1,3H] -> [1,3Hp]
        out = jnp.zeros((1, 3 * Hp), f32)
        for g in range(3):
            out = out.at[:, g * Hp:g * Hp + H].set(b[:, g * H:(g + 1) * H])
        return out

    emb_p = jnp.zeros((Vp, Hp), f32).at[:V, :H].set(p["embedding"])

    # Fold embedding lookup into the input projections: one matmul per GRU instead of two.
    emb_enc_wih = jnp.dot(emb_p, pad_gru_w(p["enc_wih"])).astype(bf16)     # [Vp, 3Hp]
    emb_dec_wih = jnp.dot(emb_p, pad_gru_w(p["dec_wih"])).astype(bf16)     # [Vp, 3Hp]

    wc_rnn = jnp.zeros((Hp, Hp), f32).at[:H, :H].set(p["wc"][:H]).astype(bf16)
    wc_ctx = jnp.zeros((Hp, Hp), f32).at[:H, :H].set(p["wc"][H:]).astype(bf16)
    bc = jnp.zeros((1, Hp), f32).at[:, :H].set(p["bc"])
    wo = jnp.zeros((Hp, Vp), f32).at[:H, :V].set(p["wo"]).astype(bf16)
    bo = jnp.full((1, Vp), NEG_INF, f32).at[:, :V].set(p["bo"])

    return {
        "emb_enc_wih": emb_enc_wih, "emb_dec_wih": emb_dec_wih,
        "enc_whh": pad_gru_w(p["enc_whh"]).astype(bf16),
        "dec_whh": pad_gru_w(p["dec_whh"]).astype(bf16),
        "enc_bih": pad_gru_b(p["enc_bih"]), "enc_bhh": pad_gru_b(p["enc_bhh"]),
        "dec_bih": pad_gru_b(p["dec_bih"]), "dec_bhh": pad_gru_b(p["dec_bhh"]),
        "wc_rnn": wc_rnn, "wc_ctx": wc_ctx, "bc": bc, "wo": wo, "bo": bo,
    }


# --------------------------------- jitted glue -----------------------------------
@jax.jit
def _greedy_decode_device(pp, input_seq):
    # TODO(synk): input_length / pack_padded_sequence has no effect for a single
    # full-length sequence; the whole sequence is encoded.
    return pl.pallas_call(
        _greedy_decode_kernel,
        out_shape=(jax.ShapeDtypeStruct((1, MAX_LENGTH), jnp.int32),
                   jax.ShapeDtypeStruct((1, MAX_LENGTH), jnp.float32)),
        in_specs=[_SMEM] + [_VMEM] * 13,
        out_specs=(_VMEM, _VMEM),
    )(input_seq.astype(jnp.int32),
      pp["emb_enc_wih"], pp["enc_whh"], pp["enc_bih"], pp["enc_bhh"],
      pp["emb_dec_wih"], pp["dec_whh"], pp["dec_bih"], pp["dec_bhh"],
      pp["wc_rnn"], pp["wc_ctx"], pp["bc"], pp["wo"], pp["bo"])


def greedy_search_decode(padded_params, sos, eos, input_seq, input_length, max_length):
    """Mirrors GreedySearchDecoder.forward (batch=1, num_layers=1).

    The whole greedy loop runs inside one fused Pallas kernel; a single device_get
    fetches the fixed-size result, which is truncated at the first EOS (inclusive),
    reproducing the reference early break."""
    assert max_length == MAX_LENGTH          # kernel output width is compile-time static
    assert sos == SOS and eos == EOS         # baked into the kernel as constants
    tokens_dev, scores_dev = _greedy_decode_device(padded_params, input_seq)
    tokens, scores = jax.device_get((tokens_dev, scores_dev))     # ONE host sync
    tokens = tokens[0]
    scores = scores[0]
    n = max_length
    for i, t in enumerate(tokens.tolist()):
        if int(t) == eos:
            n = i + 1
            break
    return (jnp.array(tokens[:n], dtype=jnp.int32),
            jnp.array(scores[:n], dtype=jnp.float32))


# ------------------------------------ main ---------------------------------------
if __name__ == "__main__":
    key = jax.random.PRNGKey(0)
    pkey, skey = jax.random.split(key)
    params = init_params(pkey)
    padded = pad_params(params)

    input_seq = jax.random.randint(skey, (SEQ,), 3, VOCAB, dtype=jnp.int32)
    input_length = jnp.array([SEQ], dtype=jnp.int32)

    all_tokens, all_scores = greedy_search_decode(
        padded, SOS, EOS, input_seq, input_length, MAX_LENGTH)
    jax.block_until_ready((all_tokens, all_scores))

    assert all_tokens.shape == all_scores.shape
    assert 1 <= all_tokens.shape[0] <= MAX_LENGTH
    assert bool(jnp.all((all_tokens >= 0) & (all_tokens < VOCAB)))
    assert bool(jnp.all((all_scores > 0.0) & (all_scores <= 1.001)))
    print("KERNEL_OK")
</pallas_src>

<mosaic_0001>
module attributes {stable_mosaic.version = 11 : i64} {
  func.func @_greedy_decode_kernel(%arg0: memref<8xi32, #tpu.memory_space<smem>>, %arg1: memref<128x384xbf16, #tpu.memory_space<vmem>>, %arg2: memref<128x384xbf16, #tpu.memory_space<vmem>>, %arg3: memref<1x384xf32, #tpu.memory_space<vmem>>, %arg4: memref<1x384xf32, #tpu.memory_space<vmem>>, %arg5: memref<128x384xbf16, #tpu.memory_space<vmem>>, %arg6: memref<128x384xbf16, #tpu.memory_space<vmem>>, %arg7: memref<1x384xf32, #tpu.memory_space<vmem>>, %arg8: memref<1x384xf32, #tpu.memory_space<vmem>>, %arg9: memref<128x128xbf16, #tpu.memory_space<vmem>>, %arg10: memref<128x128xbf16, #tpu.memory_space<vmem>>, %arg11: memref<1x128xf32, #tpu.memory_space<vmem>>, %arg12: memref<128x128xbf16, #tpu.memory_space<vmem>>, %arg13: memref<1x128xf32, #tpu.memory_space<vmem>>, %arg14: memref<1x6xi32, #tpu.memory_space<vmem>>, %arg15: memref<1x6xf32, #tpu.memory_space<vmem>>) attributes {dimension_semantics = [], scalar_prefetch = 0 : i64, scratch_operands = 0 : i64, tpu.core_type = #tpu.core_type<tc>} {
    %0 = tpu.iota {dimensions = array<i32: 1>} : vector<1x128xi32>
    %1 = tpu.iota {dimensions = array<i32: 0>} : vector<8x128xi32>
    %2 = tpu.iota {dimensions = array<i32: 1>} : vector<8x128xi32>
    %cst = arith.constant 0.000000e+00 : f32
    %3 = vector.broadcast %cst : f32 to vector<8x128xf32>
    %c0_i32 = arith.constant 0 : i32
    %4 = vector.broadcast %c0_i32 : i32 to vector<8x128xi32>
    %5 = arith.cmpi eq, %1, %4 : vector<8x128xi32>
    %c0 = arith.constant 0 : index
    %6 = memref.load %arg0[%c0] : memref<8xi32, #tpu.memory_space<smem>>
    %7 = vector.broadcast %6 : i32 to vector<8x128xi32>
    %8 = arith.cmpi eq, %2, %7 : vector<8x128xi32>
    %9 = arith.andi %5, %8 : vector<8x128xi1>
    %cst_0 = arith.constant 1.000000e+00 : f32
    %10 = vector.broadcast %cst_0 : f32 to vector<8x128xf32>
    %11 = arith.select %9, %10, %3 : vector<8x128xi1>, vector<8x128xf32>
    %c1_i32 = arith.constant 1 : i32
    %12 = vector.broadcast %c1_i32 : i32 to vector<8x128xi32>
    %13 = arith.cmpi eq, %1, %12 : vector<8x128xi32>
    %c1 = arith.constant 1 : index
    %14 = memref.load %arg0[%c1] : memref<8xi32, #tpu.memory_space<smem>>
    %15 = vector.broadcast %14 : i32 to vector<8x128xi32>
    %16 = arith.cmpi eq, %2, %15 : vector<8x128xi32>
    %17 = arith.andi %13, %16 : vector<8x128xi1>
    %cst_1 = arith.constant 1.000000e+00 : f32
    %18 = vector.broadcast %cst_1 : f32 to vector<8x128xf32>
    %19 = arith.select %17, %18, %11 : vector<8x128xi1>, vector<8x128xf32>
    %c2_i32 = arith.constant 2 : i32
    %20 = vector.broadcast %c2_i32 : i32 to vector<8x128xi32>
    %21 = arith.cmpi eq, %1, %20 : vector<8x128xi32>
    %c2 = arith.constant 2 : index
    %22 = memref.load %arg0[%c2] : memref<8xi32, #tpu.memory_space<smem>>
    %23 = vector.broadcast %22 : i32 to vector<8x128xi32>
    %24 = arith.cmpi eq, %2, %23 : vector<8x128xi32>
    %25 = arith.andi %21, %24 : vector<8x128xi1>
    %cst_2 = arith.constant 1.000000e+00 : f32
    %26 = vector.broadcast %cst_2 : f32 to vector<8x128xf32>
    %27 = arith.select %25, %26, %19 : vector<8x128xi1>, vector<8x128xf32>
    %c3_i32 = arith.constant 3 : i32
    %28 = vector.broadcast %c3_i32 : i32 to vector<8x128xi32>
    %29 = arith.cmpi eq, %1, %28 : vector<8x128xi32>
    %c3 = arith.constant 3 : index
    %30 = memref.load %arg0[%c3] : memref<8xi32, #tpu.memory_space<smem>>
    %31 = vector.broadcast %30 : i32 to vector<8x128xi32>
    %32 = arith.cmpi eq, %2, %31 : vector<8x128xi32>
    %33 = arith.andi %29, %32 : vector<8x128xi1>
    %cst_3 = arith.constant 1.000000e+00 : f32
    %34 = vector.broadcast %cst_3 : f32 to vector<8x128xf32>
    %35 = arith.select %33, %34, %27 : vector<8x128xi1>, vector<8x128xf32>
    %c4_i32 = arith.constant 4 : i32
    %36 = vector.broadcast %c4_i32 : i32 to vector<8x128xi32>
    %37 = arith.cmpi eq, %1, %36 : vector<8x128xi32>
    %c4 = arith.constant 4 : index
    %38 = memref.load %arg0[%c4] : memref<8xi32, #tpu.memory_space<smem>>
    %39 = vector.broadcast %38 : i32 to vector<8x128xi32>
    %40 = arith.cmpi eq, %2, %39 : vector<8x128xi32>
    %41 = arith.andi %37, %40 : vector<8x128xi1>
    %cst_4 = arith.constant 1.000000e+00 : f32
    %42 = vector.broadcast %cst_4 : f32 to vector<8x128xf32>
    %43 = arith.select %41, %42, %35 : vector<8x128xi1>, vector<8x128xf32>
    %c5_i32 = arith.constant 5 : i32
    %44 = vector.broadcast %c5_i32 : i32 to vector<8x128xi32>
    %45 = arith.cmpi eq, %1, %44 : vector<8x128xi32>
    %c5 = arith.constant 5 : index
    %46 = memref.load %arg0[%c5] : memref<8xi32, #tpu.memory_space<smem>>
    %47 = vector.broadcast %46 : i32 to vector<8x128xi32>
    %48 = arith.cmpi eq, %2, %47 : vector<8x128xi32>
    %49 = arith.andi %45, %48 : vector<8x128xi1>
    %cst_5 = arith.constant 1.000000e+00 : f32
    %50 = vector.broadcast %cst_5 : f32 to vector<8x128xf32>
    %51 = arith.select %49, %50, %43 : vector<8x128xi1>, vector<8x128xf32>
    %c6_i32 = arith.constant 6 : i32
    %52 = vector.broadcast %c6_i32 : i32 to vector<8x128xi32>
    %53 = arith.cmpi eq, %1, %52 : vector<8x128xi32>
    %c6 = arith.constant 6 : index
    %54 = memref.load %arg0[%c6] : memref<8xi32, #tpu.memory_space<smem>>
    %55 = vector.broadcast %54 : i32 to vector<8x128xi32>
    %56 = arith.cmpi eq, %2, %55 : vector<8x128xi32>
    %57 = arith.andi %53, %56 : vector<8x128xi1>
    %cst_6 = arith.constant 1.000000e+00 : f32
    %58 = vector.broadcast %cst_6 : f32 to vector<8x128xf32>
    %59 = arith.select %57, %58, %51 : vector<8x128xi1>, vector<8x128xf32>
    %c7_i32 = arith.constant 7 : i32
    %60 = vector.broadcast %c7_i32 : i32 to vector<8x128xi32>
    %61 = arith.cmpi eq, %1, %60 : vector<8x128xi32>
    %c7 = arith.constant 7 : index
    %62 = memref.load %arg0[%c7] : memref<8xi32, #tpu.memory_space<smem>>
    %63 = vector.broadcast %62 : i32 to vector<8x128xi32>
    %64 = arith.cmpi eq, %2, %63 : vector<8x128xi32>
    %65 = arith.andi %61, %64 : vector<8x128xi1>
    %cst_7 = arith.constant 1.000000e+00 : f32
    %66 = vector.broadcast %cst_7 : f32 to vector<8x128xf32>
    %67 = arith.select %65, %66, %59 : vector<8x128xi1>, vector<8x128xf32>
    %68 = arith.truncf %67 : vector<8x128xf32> to vector<8x128xbf16>
    %c0_8 = arith.constant 0 : index
    %c0_9 = arith.constant 0 : index
    %69 = vector.load %arg1[%c0_8, %c0_9] : memref<128x384xbf16, #tpu.memory_space<vmem>>, vector<128x384xbf16>
    %cst_10 = arith.constant dense<0.000000e+00> : vector<8x384xf32>
    %70 = tpu.matmul %68, %69, %cst_10 {dimension_numbers = #tpu.dot_dimension_numbers<[1], [0], [0], [1], [0, 0, 1, 1], [], []>} : vector<8x128xbf16>, vector<128x384xbf16>, vector<8x384xf32> -> vector<8x384xf32>
    %c0_11 = arith.constant 0 : index
    %c0_12 = arith.constant 0 : index
    %71 = vector.load %arg3[%c0_11, %c0_12] : memref<1x384xf32, #tpu.memory_space<vmem>>, vector<1x384xf32>
    %72 = vector.broadcast %71 : vector<1x384xf32> to vector<8x384xf32>
    %73 = arith.addf %70, %72 : vector<8x384xf32>
    %c0_13 = arith.constant 0 : index
    %c0_14 = arith.constant 0 : index
    %74 = vector.load %arg4[%c0_13, %c0_14] : memref<1x384xf32, #tpu.memory_space<vmem>>, vector<1x384xf32>
    %75 = tpu.iota {dimensions = array<i32: 0>} : vector<8x128xi32>
    %cst_15 = arith.constant 0.000000e+00 : f32
    %76 = vector.broadcast %cst_15 : f32 to vector<1x128xf32>
    %cst_16 = arith.constant 0.000000e+00 : f32
    %77 = vector.broadcast %cst_16 : f32 to vector<8x128xf32>
    %78 = vector.extract_strided_slice %73 {offsets = [0, 0], sizes = [1, 384], strides = [1, 1]} : vector<8x384xf32> to vector<1x384xf32>
    %79 = arith.truncf %76 : vector<1x128xf32> to vector<1x128xbf16>
    %c0_17 = arith.constant 0 : index
    %c0_18 = arith.constant 0 : index
    %80 = vector.load %arg2[%c0_17, %c0_18] : memref<128x384xbf16, #tpu.memory_space<vmem>>, vector<128x384xbf16>
    %cst_19 = arith.constant dense<0.000000e+00> : vector<1x384xf32>
    %81 = tpu.matmul %79, %80, %cst_19 {dimension_numbers = #tpu.dot_dimension_numbers<[1], [0], [0], [1], [0, 0, 1, 1], [], []>} : vector<1x128xbf16>, vector<128x384xbf16>, vector<1x384xf32> -> vector<1x384xf32>
    %82 = arith.addf %81, %74 : vector<1x384xf32>
    %83 = vector.extract_strided_slice %78 {offsets = [0, 0], sizes = [1, 128], strides = [1, 1]} : vector<1x384xf32> to vector<1x128xf32>
    %84 = vector.extract_strided_slice %82 {offsets = [0, 0], sizes = [1, 128], strides = [1, 1]} : vector<1x384xf32> to vector<1x128xf32>
    %85 = arith.addf %83, %84 : vector<1x128xf32>
    %86 = arith.negf %85 : vector<1x128xf32>
    %87 = math.exp %86 : vector<1x128xf32>
    %cst_20 = arith.constant 1.000000e+00 : f32
    %88 = vector.broadcast %cst_20 : f32 to vector<1x128xf32>
    %89 = arith.addf %88, %87 : vector<1x128xf32>
    %90 = arith.divf %88, %89 : vector<1x128xf32>
    %91 = vector.extract_strided_slice %78 {offsets = [0, 128], sizes = [1, 128], strides = [1, 1]} : vector<1x384xf32> to vector<1x128xf32>
    %92 = vector.extract_strided_slice %82 {offsets = [0, 128], sizes = [1, 128], strides = [1, 1]} : vector<1x384xf32> to vector<1x128xf32>
    %93 = arith.addf %91, %92 : vector<1x128xf32>
    %94 = arith.negf %93 : vector<1x128xf32>
    %95 = math.exp %94 : vector<1x128xf32>
    %cst_21 = arith.constant 1.000000e+00 : f32
    %96 = vector.broadcast %cst_21 : f32 to vector<1x128xf32>
    %97 = arith.addf %96, %95 : vector<1x128xf32>
    %98 = arith.divf %96, %97 : vector<1x128xf32>
    %99 = vector.extract_strided_slice %78 {offsets = [0, 256], sizes = [1, 128], strides = [1, 1]} : vector<1x384xf32> to vector<1x128xf32>
    %100 = vector.extract_strided_slice %82 {offsets = [0, 256], sizes = [1, 128], strides = [1, 1]} : vector<1x384xf32> to vector<1x128xf32>
    %101 = arith.mulf %90, %100 : vector<1x128xf32>
    %102 = arith.addf %99, %101 : vector<1x128xf32>
    %103 = math.tanh %102 : vector<1x128xf32>
    %cst_22 = arith.constant 1.000000e+00 : f32
    %104 = vector.broadcast %cst_22 : f32 to vector<1x128xf32>
    %105 = arith.subf %104, %98 : vector<1x128xf32>
    %106 = arith.mulf %105, %103 : vector<1x128xf32>
    %107 = arith.mulf %98, %76 : vector<1x128xf32>
    %108 = arith.addf %106, %107 : vector<1x128xf32>
    %c0_i32_23 = arith.constant 0 : i32
    %109 = vector.broadcast %c0_i32_23 : i32 to vector<8x128xi32>
    %110 = arith.cmpi eq, %75, %109 : vector<8x128xi32>
    %111 = vector.shape_cast %108 : vector<1x128xf32> to vector<1x128xf32>
    %112 = vector.broadcast %111 : vector<1x128xf32> to vector<8x128xf32>
    %113 = arith.select %110, %112, %77 : vector<8x128xi1>, vector<8x128xf32>
    %114 = vector.extract_strided_slice %73 {offsets = [1, 0], sizes = [1, 384], strides = [1, 1]} : vector<8x384xf32> to vector<1x384xf32>
    %115 = arith.truncf %108 : vector<1x128xf32> to vector<1x128xbf16>
    %c0_24 = arith.constant 0 : index
    %c0_25 = arith.constant 0 : index
    %116 = vector.load %arg2[%c0_24, %c0_25] : memref<128x384xbf16, #tpu.memory_space<vmem>>, vector<128x384xbf16>
    %cst_26 = arith.constant dense<0.000000e+00> : vector<1x384xf32>
    %117 = tpu.matmul %115, %116, %cst_26 {dimension_numbers = #tpu.dot_dimension_numbers<[1], [0], [0], [1], [0, 0, 1, 1], [], []>} : vector<1x128xbf16>, vector<128x384xbf16>, vector<1x384xf32> -> vector<1x384xf32>
    %118 = arith.addf %117, %74 : vector<1x384xf32>
    %119 = vector.extract_strided_slice %114 {offsets = [0, 0], sizes = [1, 128], strides = [1, 1]} : vector<1x384xf32> to vector<1x128xf32>
    %120 = vector.extract_strided_slice %118 {offsets = [0, 0], sizes = [1, 128], strides = [1, 1]} : vector<1x384xf32> to vector<1x128xf32>
    %121 = arith.addf %119, %120 : vector<1x128xf32>
    %122 = arith.negf %121 : vector<1x128xf32>
    %123 = math.exp %122 : vector<1x128xf32>
    %cst_27 = arith.constant 1.000000e+00 : f32
    %124 = vector.broadcast %cst_27 : f32 to vector<1x128xf32>
    %125 = arith.addf %124, %123 : vector<1x128xf32>
    %126 = arith.divf %124, %125 : vector<1x128xf32>
    %127 = vector.extract_strided_slice %114 {offsets = [0, 128], sizes = [1, 128], strides = [1, 1]} : vector<1x384xf32> to vector<1x128xf32>
    %128 = vector.extract_strided_slice %118 {offsets = [0, 128], sizes = [1, 128], strides = [1, 1]} : vector<1x384xf32> to vector<1x128xf32>
    %129 = arith.addf %127, %128 : vector<1x128xf32>
    %130 = arith.negf %129 : vector<1x128xf32>
    %131 = math.exp %130 : vector<1x128xf32>
    %cst_28 = arith.constant 1.000000e+00 : f32
    %132 = vector.broadcast %cst_28 : f32 to vector<1x128xf32>
    %133 = arith.addf %132, %131 : vector<1x128xf32>
    %134 = arith.divf %132, %133 : vector<1x128xf32>
    %135 = vector.extract_strided_slice %114 {offsets = [0, 256], sizes = [1, 128], strides = [1, 1]} : vector<1x384xf32> to vector<1x128xf32>
    %136 = vector.extract_strided_slice %118 {offsets = [0, 256], sizes = [1, 128], strides = [1, 1]} : vector<1x384xf32> to vector<1x128xf32>
    %137 = arith.mulf %126, %136 : vector<1x128xf32>
    %138 = arith.addf %135, %137 : vector<1x128xf32>
    %139 = math.tanh %138 : vector<1x128xf32>
    %cst_29 = arith.constant 1.000000e+00 : f32
    %140 = vector.broadcast %cst_29 : f32 to vector<1x128xf32>
    %141 = arith.subf %140, %134 : vector<1x128xf32>
    %142 = arith.mulf %141, %139 : vector<1x128xf32>
    %143 = arith.mulf %134, %108 : vector<1x128xf32>
    %144 = arith.addf %142, %143 : vector<1x128xf32>
    %c1_i32_30 = arith.constant 1 : i32
    %145 = vector.broadcast %c1_i32_30 : i32 to vector<8x128xi32>
    %146 = arith.cmpi eq, %75, %145 : vector<8x128xi32>
    %147 = vector.shape_cast %144 : vector<1x128xf32> to vector<1x128xf32>
    %148 = vector.broadcast %147 : vector<1x128xf32> to vector<8x128xf32>
    %149 = arith.select %146, %148, %113 : vector<8x128xi1>, vector<8x128xf32>
    %150 = vector.extract_strided_slice %73 {offsets = [2, 0], sizes = [1, 384], strides = [1, 1]} : vector<8x384xf32> to vector<1x384xf32>
    %151 = arith.truncf %144 : vector<1x128xf32> to vector<1x128xbf16>
    %c0_31 = arith.constant 0 : index
    %c0_32 = arith.constant 0 : index
    %152 = vector.load %arg2[%c0_31, %c0_32] : memref<128x384xbf16, #tpu.memory_space<vmem>>, vector<128x384xbf16>
    %cst_33 = arith.constant dense<0.000000e+00> : vector<1x384xf32>
    %153 = tpu.matmul %151, %152, %cst_33 {dimension_numbers = #tpu.dot_dimension_numbers<[1], [0], [0], [1], [0, 0, 1, 1], [], []>} : vector<1x128xbf16>, vector<128x384xbf16>, vector<1x384xf32> -> vector<1x384xf32>
    %154 = arith.addf %153, %74 : vector<1x384xf32>
    %155 = vector.extract_strided_slice %150 {offsets = [0, 0], sizes = [1, 128], strides = [1, 1]} : vector<1x384xf32> to vector<1x128xf32>
    %156 = vector.extract_strided_slice %154 {offsets = [0, 0], sizes = [1, 128], strides = [1, 1]} : vector<1x384xf32> to vector<1x128xf32>
    %157 = arith.addf %155, %156 : vector<1x128xf32>
    %158 = arith.negf %157 : vector<1x128xf32>
    %159 = math.exp %158 : vector<1x128xf32>
    %cst_34 = arith.constant 1.000000e+00 : f32
    %160 = vector.broadcast %cst_34 : f32 to vector<1x128xf32>
    %161 = arith.addf %160, %159 : vector<1x128xf32>
    %162 = arith.divf %160, %161 : vector<1x128xf32>
    %163 = vector.extract_strided_slice %150 {offsets = [0, 128], sizes = [1, 128], strides = [1, 1]} : vector<1x384xf32> to vector<1x128xf32>
    %164 = vector.extract_strided_slice %154 {offsets = [0, 128], sizes = [1, 128], strides = [1, 1]} : vector<1x384xf32> to vector<1x128xf32>
    %165 = arith.addf %163, %164 : vector<1x128xf32>
    %166 = arith.negf %165 : vector<1x128xf32>
    %167 = math.exp %166 : vector<1x128xf32>
    %cst_35 = arith.constant 1.000000e+00 : f32
    %168 = vector.broadcast %cst_35 : f32 to vector<1x128xf32>
    %169 = arith.addf %168, %167 : vector<1x128xf32>
    %170 = arith.divf %168, %169 : vector<1x128xf32>
    %171 = vector.extract_strided_slice %150 {offsets = [0, 256], sizes = [1, 128], strides = [1, 1]} : vector<1x384xf32> to vector<1x128xf32>
    %172 = vector.extract_strided_slice %154 {offsets = [0, 256], sizes = [1, 128], strides = [1, 1]} : vector<1x384xf32> to vector<1x128xf32>
    %173 = arith.mulf %162, %172 : vector<1x128xf32>
    %174 = arith.addf %171, %173 : vector<1x128xf32>
    %175 = math.tanh %174 : vector<1x128xf32>
    %cst_36 = arith.constant 1.000000e+00 : f32
    %176 = vector.broadcast %cst_36 : f32 to vector<1x128xf32>
    %177 = arith.subf %176, %170 : vector<1x128xf32>
    %178 = arith.mulf %177, %175 : vector<1x128xf32>
    %179 = arith.mulf %170, %144 : vector<1x128xf32>
    %180 = arith.addf %178, %179 : vector<1x128xf32>
    %c2_i32_37 = arith.constant 2 : i32
    %181 = vector.broadcast %c2_i32_37 : i32 to vector<8x128xi32>
    %182 = arith.cmpi eq, %75, %181 : vector<8x128xi32>
    %183 = vector.shape_cast %180 : vector<1x128xf32> to vector<1x128xf32>
    %184 = vector.broadcast %183 : vector<1x128xf32> to vector<8x128xf32>
    %185 = arith.select %182, %184, %149 : vector<8x128xi1>, vector<8x128xf32>
    %186 = vector.extract_strided_slice %73 {offsets = [3, 0], sizes = [1, 384], strides = [1, 1]} : vector<8x384xf32> to vector<1x384xf32>
    %187 = arith.truncf %180 : vector<1x128xf32> to vector<1x128xbf16>
    %c0_38 = arith.constant 0 : index
    %c0_39 = arith.constant 0 : index
    %188 = vector.load %arg2[%c0_38, %c0_39] : memref<128x384xbf16, #tpu.memory_space<vmem>>, vector<128x384xbf16>
    %cst_40 = arith.constant dense<0.000000e+00> : vector<1x384xf32>
    %189 = tpu.matmul %187, %188, %cst_40 {dimension_numbers = #tpu.dot_dimension_numbers<[1], [0], [0], [1], [0, 0, 1, 1], [], []>} : vector<1x128xbf16>, vector<128x384xbf16>, vector<1x384xf32> -> vector<1x384xf32>
    %190 = arith.addf %189, %74 : vector<1x384xf32>
    %191 = vector.extract_strided_slice %186 {offsets = [0, 0], sizes = [1, 128], strides = [1, 1]} : vector<1x384xf32> to vector<1x128xf32>
    %192 = vector.extract_strided_slice %190 {offsets = [0, 0], sizes = [1, 128], strides = [1, 1]} : vector<1x384xf32> to vector<1x128xf32>
    %193 = arith.addf %191, %192 : vector<1x128xf32>
    %194 = arith.negf %193 : vector<1x128xf32>
    %195 = math.exp %194 : vector<1x128xf32>
    %cst_41 = arith.constant 1.000000e+00 : f32
    %196 = vector.broadcast %cst_41 : f32 to vector<1x128xf32>
    %197 = arith.addf %196, %195 : vector<1x128xf32>
    %198 = arith.divf %196, %197 : vector<1x128xf32>
    %199 = vector.extract_strided_slice %186 {offsets = [0, 128], sizes = [1, 128], strides = [1, 1]} : vector<1x384xf32> to vector<1x128xf32>
    %200 = vector.extract_strided_slice %190 {offsets = [0, 128], sizes = [1, 128], strides = [1, 1]} : vector<1x384xf32> to vector<1x128xf32>
    %201 = arith.addf %199, %200 : vector<1x128xf32>
    %202 = arith.negf %201 : vector<1x128xf32>
    %203 = math.exp %202 : vector<1x128xf32>
    %cst_42 = arith.constant 1.000000e+00 : f32
    %204 = vector.broadcast %cst_42 : f32 to vector<1x128xf32>
    %205 = arith.addf %204, %203 : vector<1x128xf32>
    %206 = arith.divf %204, %205 : vector<1x128xf32>
    %207 = vector.extract_strided_slice %186 {offsets = [0, 256], sizes = [1, 128], strides = [1, 1]} : vector<1x384xf32> to vector<1x128xf32>
    %208 = vector.extract_strided_slice %190 {offsets = [0, 256], sizes = [1, 128], strides = [1, 1]} : vector<1x384xf32> to vector<1x128xf32>
    %209 = arith.mulf %198, %208 : vector<1x128xf32>
    %210 = arith.addf %207, %209 : vector<1x128xf32>
    %211 = math.tanh %210 : vector<1x128xf32>
    %cst_43 = arith.constant 1.000000e+00 : f32
    %212 = vector.broadcast %cst_43 : f32 to vector<1x128xf32>
    %213 = arith.subf %212, %206 : vector<1x128xf32>
    %214 = arith.mulf %213, %211 : vector<1x128xf32>
    %215 = arith.mulf %206, %180 : vector<1x128xf32>
    %216 = arith.addf %214, %215 : vector<1x128xf32>
    %c3_i32_44 = arith.constant 3 : i32
    %217 = vector.broadcast %c3_i32_44 : i32 to vector<8x128xi32>
    %218 = arith.cmpi eq, %75, %217 : vector<8x128xi32>
    %219 = vector.shape_cast %216 : vector<1x128xf32> to vector<1x128xf32>
    %220 = vector.broadcast %219 : vector<1x128xf32> to vector<8x128xf32>
    %221 = arith.select %218, %220, %185 : vector<8x128xi1>, vector<8x128xf32>
    %222 = vector.extract_strided_slice %73 {offsets = [4, 0], sizes = [1, 384], strides = [1, 1]} : vector<8x384xf32> to vector<1x384xf32>
    %223 = arith.truncf %216 : vector<1x128xf32> to vector<1x128xbf16>
    %c0_45 = arith.constant 0 : index
    %c0_46 = arith.constant 0 : index
    %224 = vector.load %arg2[%c0_45, %c0_46] : memref<128x384xbf16, #tpu.memory_space<vmem>>, vector<128x384xbf16>
    %cst_47 = arith.constant dense<0.000000e+00> : vector<1x384xf32>
    %225 = tpu.matmul %223, %224, %cst_47 {dimension_numbers = #tpu.dot_dimension_numbers<[1], [0], [0], [1], [0, 0, 1, 1], [], []>} : vector<1x128xbf16>, vector<128x384xbf16>, vector<1x384xf32> -> vector<1x384xf32>
    %226 = arith.addf %225, %74 : vector<1x384xf32>
    %227 = vector.extract_strided_slice %222 {offsets = [0, 0], sizes = [1, 128], strides = [1, 1]} : vector<1x384xf32> to vector<1x128xf32>
    %228 = vector.extract_strided_slice %226 {offsets = [0, 0], sizes = [1, 128], strides = [1, 1]} : vector<1x384xf32> to vector<1x128xf32>
    %229 = arith.addf %227, %228 : vector<1x128xf32>
    %230 = arith.negf %229 : vector<1x128xf32>
    %231 = math.exp %230 : vector<1x128xf32>
    %cst_48 = arith.constant 1.000000e+00 : f32
    %232 = vector.broadcast %cst_48 : f32 to vector<1x128xf32>
    %233 = arith.addf %232, %231 : vector<1x128xf32>
    %234 = arith.divf %232, %233 : vector<1x128xf32>
    %235 = vector.extract_strided_slice %222 {offsets = [0, 128], sizes = [1, 128], strides = [1, 1]} : vector<1x384xf32> to vector<1x128xf32>
    %236 = vector.extract_strided_slice %226 {offsets = [0, 128], sizes = [1, 128], strides = [1, 1]} : vector<1x384xf32> to vector<1x128xf32>
    %237 = arith.addf %235, %236 : vector<1x128xf32>
    %238 = arith.negf %237 : vector<1x128xf32>
    %239 = math.exp %238 : vector<1x128xf32>
    %cst_49 = arith.constant 1.000000e+00 : f32
    %240 = vector.broadcast %cst_49 : f32 to vector<1x128xf32>
    %241 = arith.addf %240, %239 : vector<1x128xf32>
    %242 = arith.divf %240, %241 : vector<1x128xf32>
    %243 = vector.extract_strided_slice %222 {offsets = [0, 256], sizes = [1, 128], strides = [1, 1]} : vector<1x384xf32> to vector<1x128xf32>
    %244 = vector.extract_strided_slice %226 {offsets = [0, 256], sizes = [1, 128], strides = [1, 1]} : vector<1x384xf32> to vector<1x128xf32>
    %245 = arith.mulf %234, %244 : vector<1x128xf32>
    %246 = arith.addf %243, %245 : vector<1x128xf32>
    %247 = math.tanh %246 : vector<1x128xf32>
    %cst_50 = arith.constant 1.000000e+00 : f32
    %248 = vector.broadcast %cst_50 : f32 to vector<1x128xf32>
    %249 = arith.subf %248, %242 : vector<1x128xf32>
    %250 = arith.mulf %249, %247 : vector<1x128xf32>
    %251 = arith.mulf %242, %216 : vector<1x128xf32>
    %252 = arith.addf %250, %251 : vector<1x128xf32>
    %c4_i32_51 = arith.constant 4 : i32
    %253 = vector.broadcast %c4_i32_51 : i32 to vector<8x128xi32>
    %254 = arith.cmpi eq, %75, %253 : vector<8x128xi32>
    %255 = vector.shape_cast %252 : vector<1x128xf32> to vector<1x128xf32>
    %256 = vector.broadcast %255 : vector<1x128xf32> to vector<8x128xf32>
    %257 = arith.select %254, %256, %221 : vector<8x128xi1>, vector<8x128xf32>
    %258 = vector.extract_strided_slice %73 {offsets = [5, 0], sizes = [1, 384], strides = [1, 1]} : vector<8x384xf32> to vector<1x384xf32>
    %259 = arith.truncf %252 : vector<1x128xf32> to vector<1x128xbf16>
    %c0_52 = arith.constant 0 : index
    %c0_53 = arith.constant 0 : index
    %260 = vector.load %arg2[%c0_52, %c0_53] : memref<128x384xbf16, #tpu.memory_space<vmem>>, vector<128x384xbf16>
    %cst_54 = arith.constant dense<0.000000e+00> : vector<1x384xf32>
    %261 = tpu.matmul %259, %260, %cst_54 {dimension_numbers = #tpu.dot_dimension_numbers<[1], [0], [0], [1], [0, 0, 1, 1], [], []>} : vector<1x128xbf16>, vector<128x384xbf16>, vector<1x384xf32> -> vector<1x384xf32>
    %262 = arith.addf %261, %74 : vector<1x384xf32>
    %263 = vector.extract_strided_slice %258 {offsets = [0, 0], sizes = [1, 128], strides = [1, 1]} : vector<1x384xf32> to vector<1x128xf32>
    %264 = vector.extract_strided_slice %262 {offsets = [0, 0], sizes = [1, 128], strides = [1, 1]} : vector<1x384xf32> to vector<1x128xf32>
    %265 = arith.addf %263, %264 : vector<1x128xf32>
    %266 = arith.negf %265 : vector<1x128xf32>
    %267 = math.exp %266 : vector<1x128xf32>
    %cst_55 = arith.constant 1.000000e+00 : f32
    %268 = vector.broadcast %cst_55 : f32 to vector<1x128xf32>
    %269 = arith.addf %268, %267 : vector<1x128xf32>
    %270 = arith.divf %268, %269 : vector<1x128xf32>
    %271 = vector.extract_strided_slice %258 {offsets = [0, 128], sizes = [1, 128], strides = [1, 1]} : vector<1x384xf32> to vector<1x128xf32>
    %272 = vector.extract_strided_slice %262 {offsets = [0, 128], sizes = [1, 128], strides = [1, 1]} : vector<1x384xf32> to vector<1x128xf32>
    %273 = arith.addf %271, %272 : vector<1x128xf32>
    %274 = arith.negf %273 : vector<1x128xf32>
    %275 = math.exp %274 : vector<1x128xf32>
    %cst_56 = arith.constant 1.000000e+00 : f32
    %276 = vector.broadcast %cst_56 : f32 to vector<1x128xf32>
    %277 = arith.addf %276, %275 : vector<1x128xf32>
    %278 = arith.divf %276, %277 : vector<1x128xf32>
    %279 = vector.extract_strided_slice %258 {offsets = [0, 256], sizes = [1, 128], strides = [1, 1]} : vector<1x384xf32> to vector<1x128xf32>
    %280 = vector.extract_strided_slice %262 {offsets = [0, 256], sizes = [1, 128], strides = [1, 1]} : vector<1x384xf32> to vector<1x128xf32>
    %281 = arith.mulf %270, %280 : vector<1x128xf32>
    %282 = arith.addf %279, %281 : vector<1x128xf32>
    %283 = math.tanh %282 : vector<1x128xf32>
    %cst_57 = arith.constant 1.000000e+00 : f32
    %284 = vector.broadcast %cst_57 : f32 to vector<1x128xf32>
    %285 = arith.subf %284, %278 : vector<1x128xf32>
    %286 = arith.mulf %285, %283 : vector<1x128xf32>
    %287 = arith.mulf %278, %252 : vector<1x128xf32>
    %288 = arith.addf %286, %287 : vector<1x128xf32>
    %c5_i32_58 = arith.constant 5 : i32
    %289 = vector.broadcast %c5_i32_58 : i32 to vector<8x128xi32>
    %290 = arith.cmpi eq, %75, %289 : vector<8x128xi32>
    %291 = vector.shape_cast %288 : vector<1x128xf32> to vector<1x128xf32>
    %292 = vector.broadcast %291 : vector<1x128xf32> to vector<8x128xf32>
    %293 = arith.select %290, %292, %257 : vector<8x128xi1>, vector<8x128xf32>
    %294 = vector.extract_strided_slice %73 {offsets = [6, 0], sizes = [1, 384], strides = [1, 1]} : vector<8x384xf32> to vector<1x384xf32>
    %295 = arith.truncf %288 : vector<1x128xf32> to vector<1x128xbf16>
    %c0_59 = arith.constant 0 : index
    %c0_60 = arith.constant 0 : index
    %296 = vector.load %arg2[%c0_59, %c0_60] : memref<128x384xbf16, #tpu.memory_space<vmem>>, vector<128x384xbf16>
    %cst_61 = arith.constant dense<0.000000e+00> : vector<1x384xf32>
    %297 = tpu.matmul %295, %296, %cst_61 {dimension_numbers = #tpu.dot_dimension_numbers<[1], [0], [0], [1], [0, 0, 1, 1], [], []>} : vector<1x128xbf16>, vector<128x384xbf16>, vector<1x384xf32> -> vector<1x384xf32>
    %298 = arith.addf %297, %74 : vector<1x384xf32>
    %299 = vector.extract_strided_slice %294 {offsets = [0, 0], sizes = [1, 128], strides = [1, 1]} : vector<1x384xf32> to vector<1x128xf32>
    %300 = vector.extract_strided_slice %298 {offsets = [0, 0], sizes = [1, 128], strides = [1, 1]} : vector<1x384xf32> to vector<1x128xf32>
    %301 = arith.addf %299, %300 : vector<1x128xf32>
    %302 = arith.negf %301 : vector<1x128xf32>
    %303 = math.exp %302 : vector<1x128xf32>
    %cst_62 = arith.constant 1.000000e+00 : f32
    %304 = vector.broadcast %cst_62 : f32 to vector<1x128xf32>
    %305 = arith.addf %304, %303 : vector<1x128xf32>
    %306 = arith.divf %304, %305 : vector<1x128xf32>
    %307 = vector.extract_strided_slice %294 {offsets = [0, 128], sizes = [1, 128], strides = [1, 1]} : vector<1x384xf32> to vector<1x128xf32>
    %308 = vector.extract_strided_slice %298 {offsets = [0, 128], sizes = [1, 128], strides = [1, 1]} : vector<1x384xf32> to vector<1x128xf32>
    %309 = arith.addf %307, %308 : vector<1x128xf32>
    %310 = arith.negf %309 : vector<1x128xf32>
    %311 = math.exp %310 : vector<1x128xf32>
    %cst_63 = arith.constant 1.000000e+00 : f32
    %312 = vector.broadcast %cst_63 : f32 to vector<1x128xf32>
    %313 = arith.addf %312, %311 : vector<1x128xf32>
    %314 = arith.divf %312, %313 : vector<1x128xf32>
    %315 = vector.extract_strided_slice %294 {offsets = [0, 256], sizes = [1, 128], strides = [1, 1]} : vector<1x384xf32> to vector<1x128xf32>
    %316 = vector.extract_strided_slice %298 {offsets = [0, 256], sizes = [1, 128], strides = [1, 1]} : vector<1x384xf32> to vector<1x128xf32>
    %317 = arith.mulf %306, %316 : vector<1x128xf32>
    %318 = arith.addf %315, %317 : vector<1x128xf32>
    %319 = math.tanh %318 : vector<1x128xf32>
    %cst_64 = arith.constant 1.000000e+00 : f32
    %320 = vector.broadcast %cst_64 : f32 to vector<1x128xf32>
    %321 = arith.subf %320, %314 : vector<1x128xf32>
    %322 = arith.mulf %321, %319 : vector<1x128xf32>
    %323 = arith.mulf %314, %288 : vector<1x128xf32>
    %324 = arith.addf %322, %323 : vector<1x128xf32>
    %c6_i32_65 = arith.constant 6 : i32
    %325 = vector.broadcast %c6_i32_65 : i32 to vector<8x128xi32>
    %326 = arith.cmpi eq, %75, %325 : vector<8x128xi32>
    %327 = vector.shape_cast %324 : vector<1x128xf32> to vector<1x128xf32>
    %328 = vector.broadcast %327 : vector<1x128xf32> to vector<8x128xf32>
    %329 = arith.select %326, %328, %293 : vector<8x128xi1>, vector<8x128xf32>
    %330 = vector.extract_strided_slice %73 {offsets = [7, 0], sizes = [1, 384], strides = [1, 1]} : vector<8x384xf32> to vector<1x384xf32>
    %331 = arith.truncf %324 : vector<1x128xf32> to vector<1x128xbf16>
    %c0_66 = arith.constant 0 : index
    %c0_67 = arith.constant 0 : index
    %332 = vector.load %arg2[%c0_66, %c0_67] : memref<128x384xbf16, #tpu.memory_space<vmem>>, vector<128x384xbf16>
    %cst_68 = arith.constant dense<0.000000e+00> : vector<1x384xf32>
    %333 = tpu.matmul %331, %332, %cst_68 {dimension_numbers = #tpu.dot_dimension_numbers<[1], [0], [0], [1], [0, 0, 1, 1], [], []>} : vector<1x128xbf16>, vector<128x384xbf16>, vector<1x384xf32> -> vector<1x384xf32>
    %334 = arith.addf %333, %74 : vector<1x384xf32>
    %335 = vector.extract_strided_slice %330 {offsets = [0, 0], sizes = [1, 128], strides = [1, 1]} : vector<1x384xf32> to vector<1x128xf32>
    %336 = vector.extract_strided_slice %334 {offsets = [0, 0], sizes = [1, 128], strides = [1, 1]} : vector<1x384xf32> to vector<1x128xf32>
    %337 = arith.addf %335, %336 : vector<1x128xf32>
    %338 = arith.negf %337 : vector<1x128xf32>
    %339 = math.exp %338 : vector<1x128xf32>
    %cst_69 = arith.constant 1.000000e+00 : f32
    %340 = vector.broadcast %cst_69 : f32 to vector<1x128xf32>
    %341 = arith.addf %340, %339 : vector<1x128xf32>
    %342 = arith.divf %340, %341 : vector<1x128xf32>
    %343 = vector.extract_strided_slice %330 {offsets = [0, 128], sizes = [1, 128], strides = [1, 1]} : vector<1x384xf32> to vector<1x128xf32>
    %344 = vector.extract_strided_slice %334 {offsets = [0, 128], sizes = [1, 128], strides = [1, 1]} : vector<1x384xf32> to vector<1x128xf32>
    %345 = arith.addf %343, %344 : vector<1x128xf32>
    %346 = arith.negf %345 : vector<1x128xf32>
    %347 = math.exp %346 : vector<1x128xf32>
    %cst_70 = arith.constant 1.000000e+00 : f32
    %348 = vector.broadcast %cst_70 : f32 to vector<1x128xf32>
    %349 = arith.addf %348, %347 : vector<1x128xf32>
    %350 = arith.divf %348, %349 : vector<1x128xf32>
    %351 = vector.extract_strided_slice %330 {offsets = [0, 256], sizes = [1, 128], strides = [1, 1]} : vector<1x384xf32> to vector<1x128xf32>
    %352 = vector.extract_strided_slice %334 {offsets = [0, 256], sizes = [1, 128], strides = [1, 1]} : vector<1x384xf32> to vector<1x128xf32>
    %353 = arith.mulf %342, %352 : vector<1x128xf32>
    %354 = arith.addf %351, %353 : vector<1x128xf32>
    %355 = math.tanh %354 : vector<1x128xf32>
    %cst_71 = arith.constant 1.000000e+00 : f32
    %356 = vector.broadcast %cst_71 : f32 to vector<1x128xf32>
    %357 = arith.subf %356, %350 : vector<1x128xf32>
    %358 = arith.mulf %357, %355 : vector<1x128xf32>
    %359 = arith.mulf %350, %324 : vector<1x128xf32>
    %360 = arith.addf %358, %359 : vector<1x128xf32>
    %c7_i32_72 = arith.constant 7 : i32
    %361 = vector.broadcast %c7_i32_72 : i32 to vector<8x128xi32>
    %362 = arith.cmpi eq, %75, %361 : vector<8x128xi32>
    %363 = vector.shape_cast %360 : vector<1x128xf32> to vector<1x128xf32>
    %364 = vector.broadcast %363 : vector<1x128xf32> to vector<8x128xf32>
    %365 = arith.select %362, %364, %329 : vector<8x128xi1>, vector<8x128xf32>
    %366 = arith.truncf %365 : vector<8x128xf32> to vector<8x128xbf16>
    %c0_73 = arith.constant 0 : index
    %c0_74 = arith.constant 0 : index
    %367 = vector.load %arg10[%c0_73, %c0_74] : memref<128x128xbf16, #tpu.memory_space<vmem>>, vector<128x128xbf16>
    %cst_75 = arith.constant dense<0.000000e+00> : vector<8x128xf32>
    %368 = tpu.matmul %366, %367, %cst_75 {dimension_numbers = #tpu.dot_dimension_numbers<[1], [0], [0], [1], [0, 0, 1, 1], [], []>} : vector<8x128xbf16>, vector<128x128xbf16>, vector<8x128xf32> -> vector<8x128xf32>
    %c0_76 = arith.constant 0 : index
    %c0_77 = arith.constant 0 : index
    %369 = vector.load %arg7[%c0_76, %c0_77] : memref<1x384xf32, #tpu.memory_space<vmem>>, vector<1x384xf32>
    %c0_78 = arith.constant 0 : index
    %c0_79 = arith.constant 0 : index
    %370 = vector.load %arg8[%c0_78, %c0_79] : memref<1x384xf32, #tpu.memory_space<vmem>>, vector<1x384xf32>
    %c0_80 = arith.constant 0 : index
    %c0_81 = arith.constant 0 : index
    %371 = vector.load %arg11[%c0_80, %c0_81] : memref<1x128xf32, #tpu.memory_space<vmem>>, vector<1x128xf32>
    %c0_82 = arith.constant 0 : index
    %c0_83 = arith.constant 0 : index
    %372 = vector.load %arg13[%c0_82, %c0_83] : memref<1x128xf32, #tpu.memory_space<vmem>>, vector<1x128xf32>
    %373 = tpu.iota {dimensions = array<i32: 1>} : vector<1x6xi32>
    %c0_i32_84 = arith.constant 0 : i32
    %374 = vector.broadcast %c0_i32_84 : i32 to vector<1x6xi32>
    %cst_85 = arith.constant 0.000000e+00 : f32
    %375 = vector.broadcast %cst_85 : f32 to vector<1x6xf32>
    %c1_i32_86 = arith.constant 1 : i32
    %376 = vector.broadcast %c1_i32_86 : i32 to vector<1x1xi32>
    %c0_i32_87 = arith.constant 0 : i32
    %377 = vector.broadcast %c0_i32_87 : i32 to vector<1x1xi32>
    %c0_i32_88 = arith.constant 0 : i32
    %378 = vector.broadcast %c0_i32_88 : i32 to vector<1x1xi32>
    %379 = arith.cmpi eq, %377, %378 : vector<1x1xi32>
    %380 = vector.broadcast %376 : vector<1x1xi32> to vector<1x128xi32>
    %381 = arith.cmpi eq, %0, %380 : vector<1x128xi32>
    %382 = arith.extui %381 : vector<1x128xi1> to vector<1x128xi32>
    %383 = arith.sitofp %382 : vector<1x128xi32> to vector<1x128xf32>
    %384 = arith.truncf %383 : vector<1x128xf32> to vector<1x128xbf16>
    %c0_89 = arith.constant 0 : index
    %c0_90 = arith.constant 0 : index
    %385 = vector.load %arg5[%c0_89, %c0_90] : memref<128x384xbf16, #tpu.memory_space<vmem>>, vector<128x384xbf16>
    %cst_91 = arith.constant dense<0.000000e+00> : vector<1x384xf32>
    %386 = tpu.matmul %384, %385, %cst_91 {dimension_numbers = #tpu.dot_dimension_numbers<[1], [0], [0], [1], [0, 0, 1, 1], [], []>} : vector<1x128xbf16>, vector<128x384xbf16>, vector<1x384xf32> -> vector<1x384xf32>
    %387 = arith.addf %386, %369 : vector<1x384xf32>
    %388 = arith.truncf %360 : vector<1x128xf32> to vector<1x128xbf16>
    %c0_92 = arith.constant 0 : index
    %c0_93 = arith.constant 0 : index
    %389 = vector.load %arg6[%c0_92, %c0_93] : memref<128x384xbf16, #tpu.memory_space<vmem>>, vector<128x384xbf16>
    %cst_94 = arith.constant dense<0.000000e+00> : vector<1x384xf32>
    %390 = tpu.matmul %388, %389, %cst_94 {dimension_numbers = #tpu.dot_dimension_numbers<[1], [0], [0], [1], [0, 0, 1, 1], [], []>} : vector<1x128xbf16>, vector<128x384xbf16>, vector<1x384xf32> -> vector<1x384xf32>
    %391 = arith.addf %390, %370 : vector<1x384xf32>
    %392 = vector.extract_strided_slice %387 {offsets = [0, 0], sizes = [1, 128], strides = [1, 1]} : vector<1x384xf32> to vector<1x128xf32>
    %393 = vector.extract_strided_slice %391 {offsets = [0, 0], sizes = [1, 128], strides = [1, 1]} : vector<1x384xf32> to vector<1x128xf32>
    %394 = arith.addf %392, %393 : vector<1x128xf32>
    %395 = arith.negf %394 : vector<1x128xf32>
    %396 = math.exp %395 : vector<1x128xf32>
    %cst_95 = arith.constant 1.000000e+00 : f32
    %397 = vector.broadcast %cst_95 : f32 to vector<1x128xf32>
    %398 = arith.addf %397, %396 : vector<1x128xf32>
    %399 = arith.divf %397, %398 : vector<1x128xf32>
    %400 = vector.extract_strided_slice %387 {offsets = [0, 128], sizes = [1, 128], strides = [1, 1]} : vector<1x384xf32> to vector<1x128xf32>
    %401 = vector.extract_strided_slice %391 {offsets = [0, 128], sizes = [1, 128], strides = [1, 1]} : vector<1x384xf32> to vector<1x128xf32>
    %402 = arith.addf %400, %401 : vector<1x128xf32>
    %403 = arith.negf %402 : vector<1x128xf32>
    %404 = math.exp %403 : vector<1x128xf32>
    %cst_96 = arith.constant 1.000000e+00 : f32
    %405 = vector.broadcast %cst_96 : f32 to vector<1x128xf32>
    %406 = arith.addf %405, %404 : vector<1x128xf32>
    %407 = arith.divf %405, %406 : vector<1x128xf32>
    %408 = vector.extract_strided_slice %387 {offsets = [0, 256], sizes = [1, 128], strides = [1, 1]} : vector<1x384xf32> to vector<1x128xf32>
    %409 = vector.extract_strided_slice %391 {offsets = [0, 256], sizes = [1, 128], strides = [1, 1]} : vector<1x384xf32> to vector<1x128xf32>
    %410 = arith.mulf %399, %409 : vector<1x128xf32>
    %411 = arith.addf %408, %410 : vector<1x128xf32>
    %412 = math.tanh %411 : vector<1x128xf32>
    %cst_97 = arith.constant 1.000000e+00 : f32
    %413 = vector.broadcast %cst_97 : f32 to vector<1x128xf32>
    %414 = arith.subf %413, %407 : vector<1x128xf32>
    %415 = arith.mulf %414, %412 : vector<1x128xf32>
    %416 = arith.mulf %407, %360 : vector<1x128xf32>
    %417 = arith.addf %415, %416 : vector<1x128xf32>
    %cst_98 = arith.constant dense<0.000000e+00> : vector<1x8xf32>
    %418 = tpu.matmul %417, %365, %cst_98 {dimension_numbers = #tpu.dot_dimension_numbers<[1], [1], [0], [0], [0, 0, 1, 0], [], []>} : vector<1x128xf32>, vector<8x128xf32>, vector<1x8xf32> -> vector<1x8xf32>
    %cst_99 = arith.constant dense<0xFF800000> : vector<1xf32>
    %419 = vector.multi_reduction <maximumf>, %418, %cst_99 [1] : vector<1x8xf32> to vector<1xf32>
    %420 = vector.shape_cast %419 : vector<1xf32> to vector<1x1xf32>
    %421 = vector.broadcast %420 : vector<1x1xf32> to vector<1x8xf32>
    %422 = arith.subf %418, %421 : vector<1x8xf32>
    %423 = math.exp %422 : vector<1x8xf32>
    %cst_100 = arith.constant dense<0.000000e+00> : vector<1xf32>
    %424 = vector.multi_reduction <add>, %423, %cst_100 [1] : vector<1x8xf32> to vector<1xf32>
    %425 = vector.shape_cast %424 : vector<1xf32> to vector<1x1xf32>
    %426 = tpu.reciprocal %425 {approx = true} : vector<1x1xf32> -> vector<1x1xf32>
    %427 = vector.broadcast %426 : vector<1x1xf32> to vector<1x8xf32>
    %428 = arith.mulf %423, %427 : vector<1x8xf32>
    %cst_101 = arith.constant dense<0.000000e+00> : vector<1x128xf32>
    %429 = tpu.matmul %428, %368, %cst_101 {dimension_numbers = #tpu.dot_dimension_numbers<[1], [0], [0], [1], [0, 0, 1, 1], [], []>} : vector<1x8xf32>, vector<8x128xf32>, vector<1x128xf32> -> vector<1x128xf32>
    %430 = arith.truncf %417 : vector<1x128xf32> to vector<1x128xbf16>
    %c0_102 = arith.constant 0 : index
    %c0_103 = arith.constant 0 : index
    %431 = vector.load %arg9[%c0_102, %c0_103] : memref<128x128xbf16, #tpu.memory_space<vmem>>, vector<128x128xbf16>
    %cst_104 = arith.constant dense<0.000000e+00> : vector<1x128xf32>
    %432 = tpu.matmul %430, %431, %cst_104 {dimension_numbers = #tpu.dot_dimension_numbers<[1], [0], [0], [1], [0, 0, 1, 1], [], []>} : vector<1x128xbf16>, vector<128x128xbf16>, vector<1x128xf32> -> vector<1x128xf32>
    %433 = arith.addf %432, %429 : vector<1x128xf32>
    %434 = arith.addf %433, %371 : vector<1x128xf32>
    %435 = math.tanh %434 : vector<1x128xf32>
    %436 = arith.truncf %435 : vector<1x128xf32> to vector<1x128xbf16>
    %c0_105 = arith.constant 0 : index
    %c0_106 = arith.constant 0 : index
    %437 = vector.load %arg12[%c0_105, %c0_106] : memref<128x128xbf16, #tpu.memory_space<vmem>>, vector<128x128xbf16>
    %cst_107 = arith.constant dense<0.000000e+00> : vector<1x128xf32>
    %438 = tpu.matmul %436, %437, %cst_107 {dimension_numbers = #tpu.dot_dimension_numbers<[1], [0], [0], [1], [0, 0, 1, 1], [], []>} : vector<1x128xbf16>, vector<128x128xbf16>, vector<1x128xf32> -> vector<1x128xf32>
    %439 = arith.addf %438, %372 : vector<1x128xf32>
    %cst_108 = arith.constant dense<0xFF800000> : vector<1xf32>
    %440 = vector.multi_reduction <maximumf>, %439, %cst_108 [1] : vector<1x128xf32> to vector<1xf32>
    %441 = vector.shape_cast %440 : vector<1xf32> to vector<1x1xf32>
    %442 = vector.broadcast %441 : vector<1x1xf32> to vector<1x128xf32>
    %443 = arith.cmpf oge, %439, %442 : vector<1x128xf32>
    %c128_i32 = arith.constant 128 : i32
    %444 = vector.broadcast %c128_i32 : i32 to vector<1x128xi32>
    %445 = arith.select %443, %0, %444 : vector<1x128xi1>, vector<1x128xi32>
    %cst_109 = arith.constant dense<2147483647> : vector<1xi32>
    %446 = vector.multi_reduction <minsi>, %445, %cst_109 [1] : vector<1x128xi32> to vector<1xi32>
    %447 = vector.shape_cast %446 : vector<1xi32> to vector<1x1xi32>
    %448 = vector.broadcast %441 : vector<1x1xf32> to vector<1x128xf32>
    %449 = arith.subf %439, %448 : vector<1x128xf32>
    %450 = math.exp %449 : vector<1x128xf32>
    %cst_110 = arith.constant dense<0.000000e+00> : vector<1xf32>
    %451 = vector.multi_reduction <add>, %450, %cst_110 [1] : vector<1x128xf32> to vector<1xf32>
    %452 = vector.shape_cast %451 : vector<1xf32> to vector<1x1xf32>
    %453 = tpu.reciprocal %452 : vector<1x1xf32> -> vector<1x1xf32>
    %c0_i32_111 = arith.constant 0 : i32
    %454 = vector.broadcast %c0_i32_111 : i32 to vector<1x6xi32>
    %455 = arith.cmpi eq, %373, %454 : vector<1x6xi32>
    %456 = vector.broadcast %379 : vector<1x1xi1> to vector<1x6xi1>
    %457 = arith.andi %455, %456 : vector<1x6xi1>
    %458 = vector.shape_cast %447 : vector<1x1xi32> to vector<1x1xi32>
    %459 = vector.broadcast %458 : vector<1x1xi32> to vector<1x6xi32>
    %460 = arith.select %457, %459, %374 : vector<1x6xi1>, vector<1x6xi32>
    %461 = vector.shape_cast %453 : vector<1x1xf32> to vector<1x1xf32>
    %462 = vector.broadcast %461 : vector<1x1xf32> to vector<1x6xf32>
    %463 = arith.select %457, %462, %375 : vector<1x6xi1>, vector<1x6xf32>
    %c2_i32_112 = arith.constant 2 : i32
    %464 = vector.broadcast %c2_i32_112 : i32 to vector<1x1xi32>
    %465 = arith.cmpi eq, %447, %464 : vector<1x1xi32>
    %466 = arith.andi %379, %465 : vector<1x1xi1>
    %c1_i32_113 = arith.constant 1 : i32
    %467 = vector.broadcast %c1_i32_113 : i32 to vector<1x1xi32>
    %468 = arith.select %466, %467, %377 : vector<1x1xi1>, vector<1x1xi32>
    %469 = vector.shape_cast %379 : vector<1x1xi1> to vector<1x1xi1>
    %470 = vector.broadcast %469 : vector<1x1xi1> to vector<1x128xi1>
    %471 = arith.select %470, %417, %360 : vector<1x128xi1>, vector<1x128xf32>
    %472 = arith.select %379, %447, %376 : vector<1x1xi1>, vector<1x1xi32>
    %c0_i32_114 = arith.constant 0 : i32
    %473 = vector.broadcast %c0_i32_114 : i32 to vector<1x1xi32>
    %474 = arith.cmpi eq, %468, %473 : vector<1x1xi32>
    %475 = vector.broadcast %472 : vector<1x1xi32> to vector<1x128xi32>
    %476 = arith.cmpi eq, %0, %475 : vector<1x128xi32>
    %477 = arith.extui %476 : vector<1x128xi1> to vector<1x128xi32>
    %478 = arith.sitofp %477 : vector<1x128xi32> to vector<1x128xf32>
    %479 = arith.truncf %478 : vector<1x128xf32> to vector<1x128xbf16>
    %c0_115 = arith.constant 0 : index
    %c0_116 = arith.constant 0 : index
    %480 = vector.load %arg5[%c0_115, %c0_116] : memref<128x384xbf16, #tpu.memory_space<vmem>>, vector<128x384xbf16>
    %cst_117 = arith.constant dense<0.000000e+00> : vector<1x384xf32>
    %481 = tpu.matmul %479, %480, %cst_117 {dimension_numbers = #tpu.dot_dimension_numbers<[1], [0], [0], [1], [0, 0, 1, 1], [], []>} : vector<1x128xbf16>, vector<128x384xbf16>, vector<1x384xf32> -> vector<1x384xf32>
    %482 = arith.addf %481, %369 : vector<1x384xf32>
    %483 = arith.truncf %471 : vector<1x128xf32> to vector<1x128xbf16>
    %c0_118 = arith.constant 0 : index
    %c0_119 = arith.constant 0 : index
    %484 = vector.load %arg6[%c0_118, %c0_119] : memref<128x384xbf16, #tpu.memory_space<vmem>>, vector<128x384xbf16>
    %cst_120 = arith.constant dense<0.000000e+00> : vector<1x384xf32>
    %485 = tpu.matmul %483, %484, %cst_120 {dimension_numbers = #tpu.dot_dimension_numbers<[1], [0], [0], [1], [0, 0, 1, 1], [], []>} : vector<1x128xbf16>, vector<128x384xbf16>, vector<1x384xf32> -> vector<1x384xf32>
    %486 = arith.addf %485, %370 : vector<1x384xf32>
    %487 = vector.extract_strided_slice %482 {offsets = [0, 0], sizes = [1, 128], strides = [1, 1]} : vector<1x384xf32> to vector<1x128xf32>
    %488 = vector.extract_strided_slice %486 {offsets = [0, 0], sizes = [1, 128], strides = [1, 1]} : vector<1x384xf32> to vector<1x128xf32>
    %489 = arith.addf %487, %488 : vector<1x128xf32>
    %490 = arith.negf %489 : vector<1x128xf32>
    %491 = math.exp %490 : vector<1x128xf32>
    %cst_121 = arith.constant 1.000000e+00 : f32
    %492 = vector.broadcast %cst_121 : f32 to vector<1x128xf32>
    %493 = arith.addf %492, %491 : vector<1x128xf32>
    %494 = arith.divf %492, %493 : vector<1x128xf32>
    %495 = vector.extract_strided_slice %482 {offsets = [0, 128], sizes = [1, 128], strides = [1, 1]} : vector<1x384xf32> to vector<1x128xf32>
    %496 = vector.extract_strided_slice %486 {offsets = [0, 128], sizes = [1, 128], strides = [1, 1]} : vector<1x384xf32> to vector<1x128xf32>
    %497 = arith.addf %495, %496 : vector<1x128xf32>
    %498 = arith.negf %497 : vector<1x128xf32>
    %499 = math.exp %498 : vector<1x128xf32>
    %cst_122 = arith.constant 1.000000e+00 : f32
    %500 = vector.broadcast %cst_122 : f32 to vector<1x128xf32>
    %501 = arith.addf %500, %499 : vector<1x128xf32>
    %502 = arith.divf %500, %501 : vector<1x128xf32>
    %503 = vector.extract_strided_slice %482 {offsets = [0, 256], sizes = [1, 128], strides = [1, 1]} : vector<1x384xf32> to vector<1x128xf32>
    %504 = vector.extract_strided_slice %486 {offsets = [0, 256], sizes = [1, 128], strides = [1, 1]} : vector<1x384xf32> to vector<1x128xf32>
    %505 = arith.mulf %494, %504 : vector<1x128xf32>
    %506 = arith.addf %503, %505 : vector<1x128xf32>
    %507 = math.tanh %506 : vector<1x128xf32>
    %cst_123 = arith.constant 1.000000e+00 : f32
    %508 = vector.broadcast %cst_123 : f32 to vector<1x128xf32>
    %509 = arith.subf %508, %502 : vector<1x128xf32>
    %510 = arith.mulf %509, %507 : vector<1x128xf32>
    %511 = arith.mulf %502, %471 : vector<1x128xf32>
    %512 = arith.addf %510, %511 : vector<1x128xf32>
    %cst_124 = arith.constant dense<0.000000e+00> : vector<1x8xf32>
    %513 = tpu.matmul %512, %365, %cst_124 {dimension_numbers = #tpu.dot_dimension_numbers<[1], [1], [0], [0], [0, 0, 1, 0], [], []>} : vector<1x128xf32>, vector<8x128xf32>, vector<1x8xf32> -> vector<1x8xf32>
    %cst_125 = arith.constant dense<0xFF800000> : vector<1xf32>
    %514 = vector.multi_reduction <maximumf>, %513, %cst_125 [1] : vector<1x8xf32> to vector<1xf32>
    %515 = vector.shape_cast %514 : vector<1xf32> to vector<1x1xf32>
    %516 = vector.broadcast %515 : vector<1x1xf32> to vector<1x8xf32>
    %517 = arith.subf %513, %516 : vector<1x8xf32>
    %518 = math.exp %517 : vector<1x8xf32>
    %cst_126 = arith.constant dense<0.000000e+00> : vector<1xf32>
    %519 = vector.multi_reduction <add>, %518, %cst_126 [1] : vector<1x8xf32> to vector<1xf32>
    %520 = vector.shape_cast %519 : vector<1xf32> to vector<1x1xf32>
    %521 = tpu.reciprocal %520 {approx = true} : vector<1x1xf32> -> vector<1x1xf32>
    %522 = vector.broadcast %521 : vector<1x1xf32> to vector<1x8xf32>
    %523 = arith.mulf %518, %522 : vector<1x8xf32>
    %cst_127 = arith.constant dense<0.000000e+00> : vector<1x128xf32>
    %524 = tpu.matmul %523, %368, %cst_127 {dimension_numbers = #tpu.dot_dimension_numbers<[1], [0], [0], [1], [0, 0, 1, 1], [], []>} : vector<1x8xf32>, vector<8x128xf32>, vector<1x128xf32> -> vector<1x128xf32>
    %525 = arith.truncf %512 : vector<1x128xf32> to vector<1x128xbf16>
    %c0_128 = arith.constant 0 : index
    %c0_129 = arith.constant 0 : index
    %526 = vector.load %arg9[%c0_128, %c0_129] : memref<128x128xbf16, #tpu.memory_space<vmem>>, vector<128x128xbf16>
    %cst_130 = arith.constant dense<0.000000e+00> : vector<1x128xf32>
    %527 = tpu.matmul %525, %526, %cst_130 {dimension_numbers = #tpu.dot_dimension_numbers<[1], [0], [0], [1], [0, 0, 1, 1], [], []>} : vector<1x128xbf16>, vector<128x128xbf16>, vector<1x128xf32> -> vector<1x128xf32>
    %528 = arith.addf %527, %524 : vector<1x128xf32>
    %529 = arith.addf %528, %371 : vector<1x128xf32>
    %530 = math.tanh %529 : vector<1x128xf32>
    %531 = arith.truncf %530 : vector<1x128xf32> to vector<1x128xbf16>
    %c0_131 = arith.constant 0 : index
    %c0_132 = arith.constant 0 : index
    %532 = vector.load %arg12[%c0_131, %c0_132] : memref<128x128xbf16, #tpu.memory_space<vmem>>, vector<128x128xbf16>
    %cst_133 = arith.constant dense<0.000000e+00> : vector<1x128xf32>
    %533 = tpu.matmul %531, %532, %cst_133 {dimension_numbers = #tpu.dot_dimension_numbers<[1], [0], [0], [1], [0, 0, 1, 1], [], []>} : vector<1x128xbf16>, vector<128x128xbf16>, vector<1x128xf32> -> vector<1x128xf32>
    %534 = arith.addf %533, %372 : vector<1x128xf32>
    %cst_134 = arith.constant dense<0xFF800000> : vector<1xf32>
    %535 = vector.multi_reduction <maximumf>, %534, %cst_134 [1] : vector<1x128xf32> to vector<1xf32>
    %536 = vector.shape_cast %535 : vector<1xf32> to vector<1x1xf32>
    %537 = vector.broadcast %536 : vector<1x1xf32> to vector<1x128xf32>
    %538 = arith.cmpf oge, %534, %537 : vector<1x128xf32>
    %c128_i32_135 = arith.constant 128 : i32
    %539 = vector.broadcast %c128_i32_135 : i32 to vector<1x128xi32>
    %540 = arith.select %538, %0, %539 : vector<1x128xi1>, vector<1x128xi32>
    %cst_136 = arith.constant dense<2147483647> : vector<1xi32>
    %541 = vector.multi_reduction <minsi>, %540, %cst_136 [1] : vector<1x128xi32> to vector<1xi32>
    %542 = vector.shape_cast %541 : vector<1xi32> to vector<1x1xi32>
    %543 = vector.broadcast %536 : vector<1x1xf32> to vector<1x128xf32>
    %544 = arith.subf %534, %543 : vector<1x128xf32>
    %545 = math.exp %544 : vector<1x128xf32>
    %cst_137 = arith.constant dense<0.000000e+00> : vector<1xf32>
    %546 = vector.multi_reduction <add>, %545, %cst_137 [1] : vector<1x128xf32> to vector<1xf32>
    %547 = vector.shape_cast %546 : vector<1xf32> to vector<1x1xf32>
    %548 = tpu.reciprocal %547 : vector<1x1xf32> -> vector<1x1xf32>
    %c1_i32_138 = arith.constant 1 : i32
    %549 = vector.broadcast %c1_i32_138 : i32 to vector<1x6xi32>
    %550 = arith.cmpi eq, %373, %549 : vector<1x6xi32>
    %551 = vector.broadcast %474 : vector<1x1xi1> to vector<1x6xi1>
    %552 = arith.andi %550, %551 : vector<1x6xi1>
    %553 = vector.shape_cast %542 : vector<1x1xi32> to vector<1x1xi32>
    %554 = vector.broadcast %553 : vector<1x1xi32> to vector<1x6xi32>
    %555 = arith.select %552, %554, %460 : vector<1x6xi1>, vector<1x6xi32>
    %556 = vector.shape_cast %548 : vector<1x1xf32> to vector<1x1xf32>
    %557 = vector.broadcast %556 : vector<1x1xf32> to vector<1x6xf32>
    %558 = arith.select %552, %557, %463 : vector<1x6xi1>, vector<1x6xf32>
    %c2_i32_139 = arith.constant 2 : i32
    %559 = vector.broadcast %c2_i32_139 : i32 to vector<1x1xi32>
    %560 = arith.cmpi eq, %542, %559 : vector<1x1xi32>
    %561 = arith.andi %474, %560 : vector<1x1xi1>
    %c1_i32_140 = arith.constant 1 : i32
    %562 = vector.broadcast %c1_i32_140 : i32 to vector<1x1xi32>
    %563 = arith.select %561, %562, %468 : vector<1x1xi1>, vector<1x1xi32>
    %564 = vector.shape_cast %474 : vector<1x1xi1> to vector<1x1xi1>
    %565 = vector.broadcast %564 : vector<1x1xi1> to vector<1x128xi1>
    %566 = arith.select %565, %512, %471 : vector<1x128xi1>, vector<1x128xf32>
    %567 = arith.select %474, %542, %472 : vector<1x1xi1>, vector<1x1xi32>
    %c0_i32_141 = arith.constant 0 : i32
    %568 = vector.broadcast %c0_i32_141 : i32 to vector<1x1xi32>
    %569 = arith.cmpi eq, %563, %568 : vector<1x1xi32>
    %570 = vector.broadcast %567 : vector<1x1xi32> to vector<1x128xi32>
    %571 = arith.cmpi eq, %0, %570 : vector<1x128xi32>
    %572 = arith.extui %571 : vector<1x128xi1> to vector<1x128xi32>
    %573 = arith.sitofp %572 : vector<1x128xi32> to vector<1x128xf32>
    %574 = arith.truncf %573 : vector<1x128xf32> to vector<1x128xbf16>
    %c0_142 = arith.constant 0 : index
    %c0_143 = arith.constant 0 : index
    %575 = vector.load %arg5[%c0_142, %c0_143] : memref<128x384xbf16, #tpu.memory_space<vmem>>, vector<128x384xbf16>
    %cst_144 = arith.constant dense<0.000000e+00> : vector<1x384xf32>
    %576 = tpu.matmul %574, %575, %cst_144 {dimension_numbers = #tpu.dot_dimension_numbers<[1], [0], [0], [1], [0, 0, 1, 1], [], []>} : vector<1x128xbf16>, vector<128x384xbf16>, vector<1x384xf32> -> vector<1x384xf32>
    %577 = arith.addf %576, %369 : vector<1x384xf32>
    %578 = arith.truncf %566 : vector<1x128xf32> to vector<1x128xbf16>
    %c0_145 = arith.constant 0 : index
    %c0_146 = arith.constant 0 : index
    %579 = vector.load %arg6[%c0_145, %c0_146] : memref<128x384xbf16, #tpu.memory_space<vmem>>, vector<128x384xbf16>
    %cst_147 = arith.constant dense<0.000000e+00> : vector<1x384xf32>
    %580 = tpu.matmul %578, %579, %cst_147 {dimension_numbers = #tpu.dot_dimension_numbers<[1], [0], [0], [1], [0, 0, 1, 1], [], []>} : vector<1x128xbf16>, vector<128x384xbf16>, vector<1x384xf32> -> vector<1x384xf32>
    %581 = arith.addf %580, %370 : vector<1x384xf32>
    %582 = vector.extract_strided_slice %577 {offsets = [0, 0], sizes = [1, 128], strides = [1, 1]} : vector<1x384xf32> to vector<1x128xf32>
    %583 = vector.extract_strided_slice %581 {offsets = [0, 0], sizes = [1, 128], strides = [1, 1]} : vector<1x384xf32> to vector<1x128xf32>
    %584 = arith.addf %582, %583 : vector<1x128xf32>
    %585 = arith.negf %584 : vector<1x128xf32>
    %586 = math.exp %585 : vector<1x128xf32>
    %cst_148 = arith.constant 1.000000e+00 : f32
    %587 = vector.broadcast %cst_148 : f32 to vector<1x128xf32>
    %588 = arith.addf %587, %586 : vector<1x128xf32>
    %589 = arith.divf %587, %588 : vector<1x128xf32>
    %590 = vector.extract_strided_slice %577 {offsets = [0, 128], sizes = [1, 128], strides = [1, 1]} : vector<1x384xf32> to vector<1x128xf32>
    %591 = vector.extract_strided_slice %581 {offsets = [0, 128], sizes = [1, 128], strides = [1, 1]} : vector<1x384xf32> to vector<1x128xf32>
    %592 = arith.addf %590, %591 : vector<1x128xf32>
    %593 = arith.negf %592 : vector<1x128xf32>
    %594 = math.exp %593 : vector<1x128xf32>
    %cst_149 = arith.constant 1.000000e+00 : f32
    %595 = vector.broadcast %cst_149 : f32 to vector<1x128xf32>
    %596 = arith.addf %595, %594 : vector<1x128xf32>
    %597 = arith.divf %595, %596 : vector<1x128xf32>
    %598 = vector.extract_strided_slice %577 {offsets = [0, 256], sizes = [1, 128], strides = [1, 1]} : vector<1x384xf32> to vector<1x128xf32>
    %599 = vector.extract_strided_slice %581 {offsets = [0, 256], sizes = [1, 128], strides = [1, 1]} : vector<1x384xf32> to vector<1x128xf32>
    %600 = arith.mulf %589, %599 : vector<1x128xf32>
    %601 = arith.addf %598, %600 : vector<1x128xf32>
    %602 = math.tanh %601 : vector<1x128xf32>
    %cst_150 = arith.constant 1.000000e+00 : f32
    %603 = vector.broadcast %cst_150 : f32 to vector<1x128xf32>
    %604 = arith.subf %603, %597 : vector<1x128xf32>
    %605 = arith.mulf %604, %602 : vector<1x128xf32>
    %606 = arith.mulf %597, %566 : vector<1x128xf32>
    %607 = arith.addf %605, %606 : vector<1x128xf32>
    %cst_151 = arith.constant dense<0.000000e+00> : vector<1x8xf32>
    %608 = tpu.matmul %607, %365, %cst_151 {dimension_numbers = #tpu.dot_dimension_numbers<[1], [1], [0], [0], [0, 0, 1, 0], [], []>} : vector<1x128xf32>, vector<8x128xf32>, vector<1x8xf32> -> vector<1x8xf32>
    %cst_152 = arith.constant dense<0xFF800000> : vector<1xf32>
    %609 = vector.multi_reduction <maximumf>, %608, %cst_152 [1] : vector<1x8xf32> to vector<1xf32>
    %610 = vector.shape_cast %609 : vector<1xf32> to vector<1x1xf32>
    %611 = vector.broadcast %610 : vector<1x1xf32> to vector<1x8xf32>
    %612 = arith.subf %608, %611 : vector<1x8xf32>
    %613 = math.exp %612 : vector<1x8xf32>
    %cst_153 = arith.constant dense<0.000000e+00> : vector<1xf32>
    %614 = vector.multi_reduction <add>, %613, %cst_153 [1] : vector<1x8xf32> to vector<1xf32>
    %615 = vector.shape_cast %614 : vector<1xf32> to vector<1x1xf32>
    %616 = tpu.reciprocal %615 {approx = true} : vector<1x1xf32> -> vector<1x1xf32>
    %617 = vector.broadcast %616 : vector<1x1xf32> to vector<1x8xf32>
    %618 = arith.mulf %613, %617 : vector<1x8xf32>
    %cst_154 = arith.constant dense<0.000000e+00> : vector<1x128xf32>
    %619 = tpu.matmul %618, %368, %cst_154 {dimension_numbers = #tpu.dot_dimension_numbers<[1], [0], [0], [1], [0, 0, 1, 1], [], []>} : vector<1x8xf32>, vector<8x128xf32>, vector<1x128xf32> -> vector<1x128xf32>
    %620 = arith.truncf %607 : vector<1x128xf32> to vector<1x128xbf16>
    %c0_155 = arith.constant 0 : index
    %c0_156 = arith.constant 0 : index
    %621 = vector.load %arg9[%c0_155, %c0_156] : memref<128x128xbf16, #tpu.memory_space<vmem>>, vector<128x128xbf16>
    %cst_157 = arith.constant dense<0.000000e+00> : vector<1x128xf32>
    %622 = tpu.matmul %620, %621, %cst_157 {dimension_numbers = #tpu.dot_dimension_numbers<[1], [0], [0], [1], [0, 0, 1, 1], [], []>} : vector<1x128xbf16>, vector<128x128xbf16>, vector<1x128xf32> -> vector<1x128xf32>
    %623 = arith.addf %622, %619 : vector<1x128xf32>
    %624 = arith.addf %623, %371 : vector<1x128xf32>
    %625 = math.tanh %624 : vector<1x128xf32>
    %626 = arith.truncf %625 : vector<1x128xf32> to vector<1x128xbf16>
    %c0_158 = arith.constant 0 : index
    %c0_159 = arith.constant 0 : index
    %627 = vector.load %arg12[%c0_158, %c0_159] : memref<128x128xbf16, #tpu.memory_space<vmem>>, vector<128x128xbf16>
    %cst_160 = arith.constant dense<0.000000e+00> : vector<1x128xf32>
    %628 = tpu.matmul %626, %627, %cst_160 {dimension_numbers = #tpu.dot_dimension_numbers<[1], [0], [0], [1], [0, 0, 1, 1], [], []>} : vector<1x128xbf16>, vector<128x128xbf16>, vector<1x128xf32> -> vector<1x128xf32>
    %629 = arith.addf %628, %372 : vector<1x128xf32>
    %cst_161 = arith.constant dense<0xFF800000> : vector<1xf32>
    %630 = vector.multi_reduction <maximumf>, %629, %cst_161 [1] : vector<1x128xf32> to vector<1xf32>
    %631 = vector.shape_cast %630 : vector<1xf32> to vector<1x1xf32>
    %632 = vector.broadcast %631 : vector<1x1xf32> to vector<1x128xf32>
    %633 = arith.cmpf oge, %629, %632 : vector<1x128xf32>
    %c128_i32_162 = arith.constant 128 : i32
    %634 = vector.broadcast %c128_i32_162 : i32 to vector<1x128xi32>
    %635 = arith.select %633, %0, %634 : vector<1x128xi1>, vector<1x128xi32>
    %cst_163 = arith.constant dense<2147483647> : vector<1xi32>
    %636 = vector.multi_reduction <minsi>, %635, %cst_163 [1] : vector<1x128xi32> to vector<1xi32>
    %637 = vector.shape_cast %636 : vector<1xi32> to vector<1x1xi32>
    %638 = vector.broadcast %631 : vector<1x1xf32> to vector<1x128xf32>
    %639 = arith.subf %629, %638 : vector<1x128xf32>
    %640 = math.exp %639 : vector<1x128xf32>
    %cst_164 = arith.constant dense<0.000000e+00> : vector<1xf32>
    %641 = vector.multi_reduction <add>, %640, %cst_164 [1] : vector<1x128xf32> to vector<1xf32>
    %642 = vector.shape_cast %641 : vector<1xf32> to vector<1x1xf32>
    %643 = tpu.reciprocal %642 : vector<1x1xf32> -> vector<1x1xf32>
    %c2_i32_165 = arith.constant 2 : i32
    %644 = vector.broadcast %c2_i32_165 : i32 to vector<1x6xi32>
    %645 = arith.cmpi eq, %373, %644 : vector<1x6xi32>
    %646 = vector.broadcast %569 : vector<1x1xi1> to vector<1x6xi1>
    %647 = arith.andi %645, %646 : vector<1x6xi1>
    %648 = vector.shape_cast %637 : vector<1x1xi32> to vector<1x1xi32>
    %649 = vector.broadcast %648 : vector<1x1xi32> to vector<1x6xi32>
    %650 = arith.select %647, %649, %555 : vector<1x6xi1>, vector<1x6xi32>
    %651 = vector.shape_cast %643 : vector<1x1xf32> to vector<1x1xf32>
    %652 = vector.broadcast %651 : vector<1x1xf32> to vector<1x6xf32>
    %653 = arith.select %647, %652, %558 : vector<1x6xi1>, vector<1x6xf32>
    %c2_i32_166 = arith.constant 2 : i32
    %654 = vector.broadcast %c2_i32_166 : i32 to vector<1x1xi32>
    %655 = arith.cmpi eq, %637, %654 : vector<1x1xi32>
    %656 = arith.andi %569, %655 : vector<1x1xi1>
    %c1_i32_167 = arith.constant 1 : i32
    %657 = vector.broadcast %c1_i32_167 : i32 to vector<1x1xi32>
    %658 = arith.select %656, %657, %563 : vector<1x1xi1>, vector<1x1xi32>
    %659 = vector.shape_cast %569 : vector<1x1xi1> to vector<1x1xi1>
    %660 = vector.broadcast %659 : vector<1x1xi1> to vector<1x128xi1>
    %661 = arith.select %660, %607, %566 : vector<1x128xi1>, vector<1x128xf32>
    %662 = arith.select %569, %637, %567 : vector<1x1xi1>, vector<1x1xi32>
    %c0_i32_168 = arith.constant 0 : i32
    %663 = vector.broadcast %c0_i32_168 : i32 to vector<1x1xi32>
    %664 = arith.cmpi eq, %658, %663 : vector<1x1xi32>
    %665 = vector.broadcast %662 : vector<1x1xi32> to vector<1x128xi32>
    %666 = arith.cmpi eq, %0, %665 : vector<1x128xi32>
    %667 = arith.extui %666 : vector<1x128xi1> to vector<1x128xi32>
    %668 = arith.sitofp %667 : vector<1x128xi32> to vector<1x128xf32>
    %669 = arith.truncf %668 : vector<1x128xf32> to vector<1x128xbf16>
    %c0_169 = arith.constant 0 : index
    %c0_170 = arith.constant 0 : index
    %670 = vector.load %arg5[%c0_169, %c0_170] : memref<128x384xbf16, #tpu.memory_space<vmem>>, vector<128x384xbf16>
    %cst_171 = arith.constant dense<0.000000e+00> : vector<1x384xf32>
    %671 = tpu.matmul %669, %670, %cst_171 {dimension_numbers = #tpu.dot_dimension_numbers<[1], [0], [0], [1], [0, 0, 1, 1], [], []>} : vector<1x128xbf16>, vector<128x384xbf16>, vector<1x384xf32> -> vector<1x384xf32>
    %672 = arith.addf %671, %369 : vector<1x384xf32>
    %673 = arith.truncf %661 : vector<1x128xf32> to vector<1x128xbf16>
    %c0_172 = arith.constant 0 : index
    %c0_173 = arith.constant 0 : index
    %674 = vector.load %arg6[%c0_172, %c0_173] : memref<128x384xbf16, #tpu.memory_space<vmem>>, vector<128x384xbf16>
    %cst_174 = arith.constant dense<0.000000e+00> : vector<1x384xf32>
    %675 = tpu.matmul %673, %674, %cst_174 {dimension_numbers = #tpu.dot_dimension_numbers<[1], [0], [0], [1], [0, 0, 1, 1], [], []>} : vector<1x128xbf16>, vector<128x384xbf16>, vector<1x384xf32> -> vector<1x384xf32>
    %676 = arith.addf %675, %370 : vector<1x384xf32>
    %677 = vector.extract_strided_slice %672 {offsets = [0, 0], sizes = [1, 128], strides = [1, 1]} : vector<1x384xf32> to vector<1x128xf32>
    %678 = vector.extract_strided_slice %676 {offsets = [0, 0], sizes = [1, 128], strides = [1, 1]} : vector<1x384xf32> to vector<1x128xf32>
    %679 = arith.addf %677, %678 : vector<1x128xf32>
    %680 = arith.negf %679 : vector<1x128xf32>
    %681 = math.exp %680 : vector<1x128xf32>
    %cst_175 = arith.constant 1.000000e+00 : f32
    %682 = vector.broadcast %cst_175 : f32 to vector<1x128xf32>
    %683 = arith.addf %682, %681 : vector<1x128xf32>
    %684 = arith.divf %682, %683 : vector<1x128xf32>
    %685 = vector.extract_strided_slice %672 {offsets = [0, 128], sizes = [1, 128], strides = [1, 1]} : vector<1x384xf32> to vector<1x128xf32>
    %686 = vector.extract_strided_slice %676 {offsets = [0, 128], sizes = [1, 128], strides = [1, 1]} : vector<1x384xf32> to vector<1x128xf32>
    %687 = arith.addf %685, %686 : vector<1x128xf32>
    %688 = arith.negf %687 : vector<1x128xf32>
    %689 = math.exp %688 : vector<1x128xf32>
    %cst_176 = arith.constant 1.000000e+00 : f32
    %690 = vector.broadcast %cst_176 : f32 to vector<1x128xf32>
    %691 = arith.addf %690, %689 : vector<1x128xf32>
    %692 = arith.divf %690, %691 : vector<1x128xf32>
    %693 = vector.extract_strided_slice %672 {offsets = [0, 256], sizes = [1, 128], strides = [1, 1]} : vector<1x384xf32> to vector<1x128xf32>
    %694 = vector.extract_strided_slice %676 {offsets = [0, 256], sizes = [1, 128], strides = [1, 1]} : vector<1x384xf32> to vector<1x128xf32>
    %695 = arith.mulf %684, %694 : vector<1x128xf32>
    %696 = arith.addf %693, %695 : vector<1x128xf32>
    %697 = math.tanh %696 : vector<1x128xf32>
    %cst_177 = arith.constant 1.000000e+00 : f32
    %698 = vector.broadcast %cst_177 : f32 to vector<1x128xf32>
    %699 = arith.subf %698, %692 : vector<1x128xf32>
    %700 = arith.mulf %699, %697 : vector<1x128xf32>
    %701 = arith.mulf %692, %661 : vector<1x128xf32>
    %702 = arith.addf %700, %701 : vector<1x128xf32>
    %cst_178 = arith.constant dense<0.000000e+00> : vector<1x8xf32>
    %703 = tpu.matmul %702, %365, %cst_178 {dimension_numbers = #tpu.dot_dimension_numbers<[1], [1], [0], [0], [0, 0, 1, 0], [], []>} : vector<1x128xf32>, vector<8x128xf32>, vector<1x8xf32> -> vector<1x8xf32>
    %cst_179 = arith.constant dense<0xFF800000> : vector<1xf32>
    %704 = vector.multi_reduction <maximumf>, %703, %cst_179 [1] : vector<1x8xf32> to vector<1xf32>
    %705 = vector.shape_cast %704 : vector<1xf32> to vector<1x1xf32>
    %706 = vector.broadcast %705 : vector<1x1xf32> to vector<1x8xf32>
    %707 = arith.subf %703, %706 : vector<1x8xf32>
    %708 = math.exp %707 : vector<1x8xf32>
    %cst_180 = arith.constant dense<0.000000e+00> : vector<1xf32>
    %709 = vector.multi_reduction <add>, %708, %cst_180 [1] : vector<1x8xf32> to vector<1xf32>
    %710 = vector.shape_cast %709 : vector<1xf32> to vector<1x1xf32>
    %711 = tpu.reciprocal %710 {approx = true} : vector<1x1xf32> -> vector<1x1xf32>
    %712 = vector.broadcast %711 : vector<1x1xf32> to vector<1x8xf32>
    %713 = arith.mulf %708, %712 : vector<1x8xf32>
    %cst_181 = arith.constant dense<0.000000e+00> : vector<1x128xf32>
    %714 = tpu.matmul %713, %368, %cst_181 {dimension_numbers = #tpu.dot_dimension_numbers<[1], [0], [0], [1], [0, 0, 1, 1], [], []>} : vector<1x8xf32>, vector<8x128xf32>, vector<1x128xf32> -> vector<1x128xf32>
    %715 = arith.truncf %702 : vector<1x128xf32> to vector<1x128xbf16>
    %c0_182 = arith.constant 0 : index
    %c0_183 = arith.constant 0 : index
    %716 = vector.load %arg9[%c0_182, %c0_183] : memref<128x128xbf16, #tpu.memory_space<vmem>>, vector<128x128xbf16>
    %cst_184 = arith.constant dense<0.000000e+00> : vector<1x128xf32>
    %717 = tpu.matmul %715, %716, %cst_184 {dimension_numbers = #tpu.dot_dimension_numbers<[1], [0], [0], [1], [0, 0, 1, 1], [], []>} : vector<1x128xbf16>, vector<128x128xbf16>, vector<1x128xf32> -> vector<1x128xf32>
    %718 = arith.addf %717, %714 : vector<1x128xf32>
    %719 = arith.addf %718, %371 : vector<1x128xf32>
    %720 = math.tanh %719 : vector<1x128xf32>
    %721 = arith.truncf %720 : vector<1x128xf32> to vector<1x128xbf16>
    %c0_185 = arith.constant 0 : index
    %c0_186 = arith.constant 0 : index
    %722 = vector.load %arg12[%c0_185, %c0_186] : memref<128x128xbf16, #tpu.memory_space<vmem>>, vector<128x128xbf16>
    %cst_187 = arith.constant dense<0.000000e+00> : vector<1x128xf32>
    %723 = tpu.matmul %721, %722, %cst_187 {dimension_numbers = #tpu.dot_dimension_numbers<[1], [0], [0], [1], [0, 0, 1, 1], [], []>} : vector<1x128xbf16>, vector<128x128xbf16>, vector<1x128xf32> -> vector<1x128xf32>
    %724 = arith.addf %723, %372 : vector<1x128xf32>
    %cst_188 = arith.constant dense<0xFF800000> : vector<1xf32>
    %725 = vector.multi_reduction <maximumf>, %724, %cst_188 [1] : vector<1x128xf32> to vector<1xf32>
    %726 = vector.shape_cast %725 : vector<1xf32> to vector<1x1xf32>
    %727 = vector.broadcast %726 : vector<1x1xf32> to vector<1x128xf32>
    %728 = arith.cmpf oge, %724, %727 : vector<1x128xf32>
    %c128_i32_189 = arith.constant 128 : i32
    %729 = vector.broadcast %c128_i32_189 : i32 to vector<1x128xi32>
    %730 = arith.select %728, %0, %729 : vector<1x128xi1>, vector<1x128xi32>
    %cst_190 = arith.constant dense<2147483647> : vector<1xi32>
    %731 = vector.multi_reduction <minsi>, %730, %cst_190 [1] : vector<1x128xi32> to vector<1xi32>
    %732 = vector.shape_cast %731 : vector<1xi32> to vector<1x1xi32>
    %733 = vector.broadcast %726 : vector<1x1xf32> to vector<1x128xf32>
    %734 = arith.subf %724, %733 : vector<1x128xf32>
    %735 = math.exp %734 : vector<1x128xf32>
    %cst_191 = arith.constant dense<0.000000e+00> : vector<1xf32>
    %736 = vector.multi_reduction <add>, %735, %cst_191 [1] : vector<1x128xf32> to vector<1xf32>
    %737 = vector.shape_cast %736 : vector<1xf32> to vector<1x1xf32>
    %738 = tpu.reciprocal %737 : vector<1x1xf32> -> vector<1x1xf32>
    %c3_i32_192 = arith.constant 3 : i32
    %739 = vector.broadcast %c3_i32_192 : i32 to vector<1x6xi32>
    %740 = arith.cmpi eq, %373, %739 : vector<1x6xi32>
    %741 = vector.broadcast %664 : vector<1x1xi1> to vector<1x6xi1>
    %742 = arith.andi %740, %741 : vector<1x6xi1>
    %743 = vector.shape_cast %732 : vector<1x1xi32> to vector<1x1xi32>
    %744 = vector.broadcast %743 : vector<1x1xi32> to vector<1x6xi32>
    %745 = arith.select %742, %744, %650 : vector<1x6xi1>, vector<1x6xi32>
    %746 = vector.shape_cast %738 : vector<1x1xf32> to vector<1x1xf32>
    %747 = vector.broadcast %746 : vector<1x1xf32> to vector<1x6xf32>
    %748 = arith.select %742, %747, %653 : vector<1x6xi1>, vector<1x6xf32>
    %c2_i32_193 = arith.constant 2 : i32
    %749 = vector.broadcast %c2_i32_193 : i32 to vector<1x1xi32>
    %750 = arith.cmpi eq, %732, %749 : vector<1x1xi32>
    %751 = arith.andi %664, %750 : vector<1x1xi1>
    %c1_i32_194 = arith.constant 1 : i32
    %752 = vector.broadcast %c1_i32_194 : i32 to vector<1x1xi32>
    %753 = arith.select %751, %752, %658 : vector<1x1xi1>, vector<1x1xi32>
    %754 = vector.shape_cast %664 : vector<1x1xi1> to vector<1x1xi1>
    %755 = vector.broadcast %754 : vector<1x1xi1> to vector<1x128xi1>
    %756 = arith.select %755, %702, %661 : vector<1x128xi1>, vector<1x128xf32>
    %757 = arith.select %664, %732, %662 : vector<1x1xi1>, vector<1x1xi32>
    %c0_i32_195 = arith.constant 0 : i32
    %758 = vector.broadcast %c0_i32_195 : i32 to vector<1x1xi32>
    %759 = arith.cmpi eq, %753, %758 : vector<1x1xi32>
    %760 = vector.broadcast %757 : vector<1x1xi32> to vector<1x128xi32>
    %761 = arith.cmpi eq, %0, %760 : vector<1x128xi32>
    %762 = arith.extui %761 : vector<1x128xi1> to vector<1x128xi32>
    %763 = arith.sitofp %762 : vector<1x128xi32> to vector<1x128xf32>
    %764 = arith.truncf %763 : vector<1x128xf32> to vector<1x128xbf16>
    %c0_196 = arith.constant 0 : index
    %c0_197 = arith.constant 0 : index
    %765 = vector.load %arg5[%c0_196, %c0_197] : memref<128x384xbf16, #tpu.memory_space<vmem>>, vector<128x384xbf16>
    %cst_198 = arith.constant dense<0.000000e+00> : vector<1x384xf32>
    %766 = tpu.matmul %764, %765, %cst_198 {dimension_numbers = #tpu.dot_dimension_numbers<[1], [0], [0], [1], [0, 0, 1, 1], [], []>} : vector<1x128xbf16>, vector<128x384xbf16>, vector<1x384xf32> -> vector<1x384xf32>
    %767 = arith.addf %766, %369 : vector<1x384xf32>
    %768 = arith.truncf %756 : vector<1x128xf32> to vector<1x128xbf16>
    %c0_199 = arith.constant 0 : index
    %c0_200 = arith.constant 0 : index
    %769 = vector.load %arg6[%c0_199, %c0_200] : memref<128x384xbf16, #tpu.memory_space<vmem>>, vector<128x384xbf16>
    %cst_201 = arith.constant dense<0.000000e+00> : vector<1x384xf32>
    %770 = tpu.matmul %768, %769, %cst_201 {dimension_numbers = #tpu.dot_dimension_numbers<[1], [0], [0], [1], [0, 0, 1, 1], [], []>} : vector<1x128xbf16>, vector<128x384xbf16>, vector<1x384xf32> -> vector<1x384xf32>
    %771 = arith.addf %770, %370 : vector<1x384xf32>
    %772 = vector.extract_strided_slice %767 {offsets = [0, 0], sizes = [1, 128], strides = [1, 1]} : vector<1x384xf32> to vector<1x128xf32>
    %773 = vector.extract_strided_slice %771 {offsets = [0, 0], sizes = [1, 128], strides = [1, 1]} : vector<1x384xf32> to vector<1x128xf32>
    %774 = arith.addf %772, %773 : vector<1x128xf32>
    %775 = arith.negf %774 : vector<1x128xf32>
    %776 = math.exp %775 : vector<1x128xf32>
    %cst_202 = arith.constant 1.000000e+00 : f32
    %777 = vector.broadcast %cst_202 : f32 to vector<1x128xf32>
    %778 = arith.addf %777, %776 : vector<1x128xf32>
    %779 = arith.divf %777, %778 : vector<1x128xf32>
    %780 = vector.extract_strided_slice %767 {offsets = [0, 128], sizes = [1, 128], strides = [1, 1]} : vector<1x384xf32> to vector<1x128xf32>
    %781 = vector.extract_strided_slice %771 {offsets = [0, 128], sizes = [1, 128], strides = [1, 1]} : vector<1x384xf32> to vector<1x128xf32>
    %782 = arith.addf %780, %781 : vector<1x128xf32>
    %783 = arith.negf %782 : vector<1x128xf32>
    %784 = math.exp %783 : vector<1x128xf32>
    %cst_203 = arith.constant 1.000000e+00 : f32
    %785 = vector.broadcast %cst_203 : f32 to vector<1x128xf32>
    %786 = arith.addf %785, %784 : vector<1x128xf32>
    %787 = arith.divf %785, %786 : vector<1x128xf32>
    %788 = vector.extract_strided_slice %767 {offsets = [0, 256], sizes = [1, 128], strides = [1, 1]} : vector<1x384xf32> to vector<1x128xf32>
    %789 = vector.extract_strided_slice %771 {offsets = [0, 256], sizes = [1, 128], strides = [1, 1]} : vector<1x384xf32> to vector<1x128xf32>
    %790 = arith.mulf %779, %789 : vector<1x128xf32>
    %791 = arith.addf %788, %790 : vector<1x128xf32>
    %792 = math.tanh %791 : vector<1x128xf32>
    %cst_204 = arith.constant 1.000000e+00 : f32
    %793 = vector.broadcast %cst_204 : f32 to vector<1x128xf32>
    %794 = arith.subf %793, %787 : vector<1x128xf32>
    %795 = arith.mulf %794, %792 : vector<1x128xf32>
    %796 = arith.mulf %787, %756 : vector<1x128xf32>
    %797 = arith.addf %795, %796 : vector<1x128xf32>
    %cst_205 = arith.constant dense<0.000000e+00> : vector<1x8xf32>
    %798 = tpu.matmul %797, %365, %cst_205 {dimension_numbers = #tpu.dot_dimension_numbers<[1], [1], [0], [0], [0, 0, 1, 0], [], []>} : vector<1x128xf32>, vector<8x128xf32>, vector<1x8xf32> -> vector<1x8xf32>
    %cst_206 = arith.constant dense<0xFF800000> : vector<1xf32>
    %799 = vector.multi_reduction <maximumf>, %798, %cst_206 [1] : vector<1x8xf32> to vector<1xf32>
    %800 = vector.shape_cast %799 : vector<1xf32> to vector<1x1xf32>
    %801 = vector.broadcast %800 : vector<1x1xf32> to vector<1x8xf32>
    %802 = arith.subf %798, %801 : vector<1x8xf32>
    %803 = math.exp %802 : vector<1x8xf32>
    %cst_207 = arith.constant dense<0.000000e+00> : vector<1xf32>
    %804 = vector.multi_reduction <add>, %803, %cst_207 [1] : vector<1x8xf32> to vector<1xf32>
    %805 = vector.shape_cast %804 : vector<1xf32> to vector<1x1xf32>
    %806 = tpu.reciprocal %805 {approx = true} : vector<1x1xf32> -> vector<1x1xf32>
    %807 = vector.broadcast %806 : vector<1x1xf32> to vector<1x8xf32>
    %808 = arith.mulf %803, %807 : vector<1x8xf32>
    %cst_208 = arith.constant dense<0.000000e+00> : vector<1x128xf32>
    %809 = tpu.matmul %808, %368, %cst_208 {dimension_numbers = #tpu.dot_dimension_numbers<[1], [0], [0], [1], [0, 0, 1, 1], [], []>} : vector<1x8xf32>, vector<8x128xf32>, vector<1x128xf32> -> vector<1x128xf32>
    %810 = arith.truncf %797 : vector<1x128xf32> to vector<1x128xbf16>
    %c0_209 = arith.constant 0 : index
    %c0_210 = arith.constant 0 : index
    %811 = vector.load %arg9[%c0_209, %c0_210] : memref<128x128xbf16, #tpu.memory_space<vmem>>, vector<128x128xbf16>
    %cst_211 = arith.constant dense<0.000000e+00> : vector<1x128xf32>
    %812 = tpu.matmul %810, %811, %cst_211 {dimension_numbers = #tpu.dot_dimension_numbers<[1], [0], [0], [1], [0, 0, 1, 1], [], []>} : vector<1x128xbf16>, vector<128x128xbf16>, vector<1x128xf32> -> vector<1x128xf32>
    %813 = arith.addf %812, %809 : vector<1x128xf32>
    %814 = arith.addf %813, %371 : vector<1x128xf32>
    %815 = math.tanh %814 : vector<1x128xf32>
    %816 = arith.truncf %815 : vector<1x128xf32> to vector<1x128xbf16>
    %c0_212 = arith.constant 0 : index
    %c0_213 = arith.constant 0 : index
    %817 = vector.load %arg12[%c0_212, %c0_213] : memref<128x128xbf16, #tpu.memory_space<vmem>>, vector<128x128xbf16>
    %cst_214 = arith.constant dense<0.000000e+00> : vector<1x128xf32>
    %818 = tpu.matmul %816, %817, %cst_214 {dimension_numbers = #tpu.dot_dimension_numbers<[1], [0], [0], [1], [0, 0, 1, 1], [], []>} : vector<1x128xbf16>, vector<128x128xbf16>, vector<1x128xf32> -> vector<1x128xf32>
    %819 = arith.addf %818, %372 : vector<1x128xf32>
    %cst_215 = arith.constant dense<0xFF800000> : vector<1xf32>
    %820 = vector.multi_reduction <maximumf>, %819, %cst_215 [1] : vector<1x128xf32> to vector<1xf32>
    %821 = vector.shape_cast %820 : vector<1xf32> to vector<1x1xf32>
    %822 = vector.broadcast %821 : vector<1x1xf32> to vector<1x128xf32>
    %823 = arith.cmpf oge, %819, %822 : vector<1x128xf32>
    %c128_i32_216 = arith.constant 128 : i32
    %824 = vector.broadcast %c128_i32_216 : i32 to vector<1x128xi32>
    %825 = arith.select %823, %0, %824 : vector<1x128xi1>, vector<1x128xi32>
    %cst_217 = arith.constant dense<2147483647> : vector<1xi32>
    %826 = vector.multi_reduction <minsi>, %825, %cst_217 [1] : vector<1x128xi32> to vector<1xi32>
    %827 = vector.shape_cast %826 : vector<1xi32> to vector<1x1xi32>
    %828 = vector.broadcast %821 : vector<1x1xf32> to vector<1x128xf32>
    %829 = arith.subf %819, %828 : vector<1x128xf32>
    %830 = math.exp %829 : vector<1x128xf32>
    %cst_218 = arith.constant dense<0.000000e+00> : vector<1xf32>
    %831 = vector.multi_reduction <add>, %830, %cst_218 [1] : vector<1x128xf32> to vector<1xf32>
    %832 = vector.shape_cast %831 : vector<1xf32> to vector<1x1xf32>
    %833 = tpu.reciprocal %832 : vector<1x1xf32> -> vector<1x1xf32>
    %c4_i32_219 = arith.constant 4 : i32
    %834 = vector.broadcast %c4_i32_219 : i32 to vector<1x6xi32>
    %835 = arith.cmpi eq, %373, %834 : vector<1x6xi32>
    %836 = vector.broadcast %759 : vector<1x1xi1> to vector<1x6xi1>
    %837 = arith.andi %835, %836 : vector<1x6xi1>
    %838 = vector.shape_cast %827 : vector<1x1xi32> to vector<1x1xi32>
    %839 = vector.broadcast %838 : vector<1x1xi32> to vector<1x6xi32>
    %840 = arith.select %837, %839, %745 : vector<1x6xi1>, vector<1x6xi32>
    %841 = vector.shape_cast %833 : vector<1x1xf32> to vector<1x1xf32>
    %842 = vector.broadcast %841 : vector<1x1xf32> to vector<1x6xf32>
    %843 = arith.select %837, %842, %748 : vector<1x6xi1>, vector<1x6xf32>
    %c2_i32_220 = arith.constant 2 : i32
    %844 = vector.broadcast %c2_i32_220 : i32 to vector<1x1xi32>
    %845 = arith.cmpi eq, %827, %844 : vector<1x1xi32>
    %846 = arith.andi %759, %845 : vector<1x1xi1>
    %c1_i32_221 = arith.constant 1 : i32
    %847 = vector.broadcast %c1_i32_221 : i32 to vector<1x1xi32>
    %848 = arith.select %846, %847, %753 : vector<1x1xi1>, vector<1x1xi32>
    %849 = vector.shape_cast %759 : vector<1x1xi1> to vector<1x1xi1>
    %850 = vector.broadcast %849 : vector<1x1xi1> to vector<1x128xi1>
    %851 = arith.select %850, %797, %756 : vector<1x128xi1>, vector<1x128xf32>
    %852 = arith.select %759, %827, %757 : vector<1x1xi1>, vector<1x1xi32>
    %c0_i32_222 = arith.constant 0 : i32
    %853 = vector.broadcast %c0_i32_222 : i32 to vector<1x1xi32>
    %854 = arith.cmpi eq, %848, %853 : vector<1x1xi32>
    %855 = vector.broadcast %852 : vector<1x1xi32> to vector<1x128xi32>
    %856 = arith.cmpi eq, %0, %855 : vector<1x128xi32>
    %857 = arith.extui %856 : vector<1x128xi1> to vector<1x128xi32>
    %858 = arith.sitofp %857 : vector<1x128xi32> to vector<1x128xf32>
    %859 = arith.truncf %858 : vector<1x128xf32> to vector<1x128xbf16>
    %c0_223 = arith.constant 0 : index
    %c0_224 = arith.constant 0 : index
    %860 = vector.load %arg5[%c0_223, %c0_224] : memref<128x384xbf16, #tpu.memory_space<vmem>>, vector<128x384xbf16>
    %cst_225 = arith.constant dense<0.000000e+00> : vector<1x384xf32>
    %861 = tpu.matmul %859, %860, %cst_225 {dimension_numbers = #tpu.dot_dimension_numbers<[1], [0], [0], [1], [0, 0, 1, 1], [], []>} : vector<1x128xbf16>, vector<128x384xbf16>, vector<1x384xf32> -> vector<1x384xf32>
    %862 = arith.addf %861, %369 : vector<1x384xf32>
    %863 = arith.truncf %851 : vector<1x128xf32> to vector<1x128xbf16>
    %c0_226 = arith.constant 0 : index
    %c0_227 = arith.constant 0 : index
    %864 = vector.load %arg6[%c0_226, %c0_227] : memref<128x384xbf16, #tpu.memory_space<vmem>>, vector<128x384xbf16>
    %cst_228 = arith.constant dense<0.000000e+00> : vector<1x384xf32>
    %865 = tpu.matmul %863, %864, %cst_228 {dimension_numbers = #tpu.dot_dimension_numbers<[1], [0], [0], [1], [0, 0, 1, 1], [], []>} : vector<1x128xbf16>, vector<128x384xbf16>, vector<1x384xf32> -> vector<1x384xf32>
    %866 = arith.addf %865, %370 : vector<1x384xf32>
    %867 = vector.extract_strided_slice %862 {offsets = [0, 0], sizes = [1, 128], strides = [1, 1]} : vector<1x384xf32> to vector<1x128xf32>
    %868 = vector.extract_strided_slice %866 {offsets = [0, 0], sizes = [1, 128], strides = [1, 1]} : vector<1x384xf32> to vector<1x128xf32>
    %869 = arith.addf %867, %868 : vector<1x128xf32>
    %870 = arith.negf %869 : vector<1x128xf32>
    %871 = math.exp %870 : vector<1x128xf32>
    %cst_229 = arith.constant 1.000000e+00 : f32
    %872 = vector.broadcast %cst_229 : f32 to vector<1x128xf32>
    %873 = arith.addf %872, %871 : vector<1x128xf32>
    %874 = arith.divf %872, %873 : vector<1x128xf32>
    %875 = vector.extract_strided_slice %862 {offsets = [0, 128], sizes = [1, 128], strides = [1, 1]} : vector<1x384xf32> to vector<1x128xf32>
    %876 = vector.extract_strided_slice %866 {offsets = [0, 128], sizes = [1, 128], strides = [1, 1]} : vector<1x384xf32> to vector<1x128xf32>
    %877 = arith.addf %875, %876 : vector<1x128xf32>
    %878 = arith.negf %877 : vector<1x128xf32>
    %879 = math.exp %878 : vector<1x128xf32>
    %cst_230 = arith.constant 1.000000e+00 : f32
    %880 = vector.broadcast %cst_230 : f32 to vector<1x128xf32>
    %881 = arith.addf %880, %879 : vector<1x128xf32>
    %882 = arith.divf %880, %881 : vector<1x128xf32>
    %883 = vector.extract_strided_slice %862 {offsets = [0, 256], sizes = [1, 128], strides = [1, 1]} : vector<1x384xf32> to vector<1x128xf32>
    %884 = vector.extract_strided_slice %866 {offsets = [0, 256], sizes = [1, 128], strides = [1, 1]} : vector<1x384xf32> to vector<1x128xf32>
    %885 = arith.mulf %874, %884 : vector<1x128xf32>
    %886 = arith.addf %883, %885 : vector<1x128xf32>
    %887 = math.tanh %886 : vector<1x128xf32>
    %cst_231 = arith.constant 1.000000e+00 : f32
    %888 = vector.broadcast %cst_231 : f32 to vector<1x128xf32>
    %889 = arith.subf %888, %882 : vector<1x128xf32>
    %890 = arith.mulf %889, %887 : vector<1x128xf32>
    %891 = arith.mulf %882, %851 : vector<1x128xf32>
    %892 = arith.addf %890, %891 : vector<1x128xf32>
    %cst_232 = arith.constant dense<0.000000e+00> : vector<1x8xf32>
    %893 = tpu.matmul %892, %365, %cst_232 {dimension_numbers = #tpu.dot_dimension_numbers<[1], [1], [0], [0], [0, 0, 1, 0], [], []>} : vector<1x128xf32>, vector<8x128xf32>, vector<1x8xf32> -> vector<1x8xf32>
    %cst_233 = arith.constant dense<0xFF800000> : vector<1xf32>
    %894 = vector.multi_reduction <maximumf>, %893, %cst_233 [1] : vector<1x8xf32> to vector<1xf32>
    %895 = vector.shape_cast %894 : vector<1xf32> to vector<1x1xf32>
    %896 = vector.broadcast %895 : vector<1x1xf32> to vector<1x8xf32>
    %897 = arith.subf %893, %896 : vector<1x8xf32>
    %898 = math.exp %897 : vector<1x8xf32>
    %cst_234 = arith.constant dense<0.000000e+00> : vector<1xf32>
    %899 = vector.multi_reduction <add>, %898, %cst_234 [1] : vector<1x8xf32> to vector<1xf32>
    %900 = vector.shape_cast %899 : vector<1xf32> to vector<1x1xf32>
    %901 = tpu.reciprocal %900 {approx = true} : vector<1x1xf32> -> vector<1x1xf32>
    %902 = vector.broadcast %901 : vector<1x1xf32> to vector<1x8xf32>
    %903 = arith.mulf %898, %902 : vector<1x8xf32>
    %cst_235 = arith.constant dense<0.000000e+00> : vector<1x128xf32>
    %904 = tpu.matmul %903, %368, %cst_235 {dimension_numbers = #tpu.dot_dimension_numbers<[1], [0], [0], [1], [0, 0, 1, 1], [], []>} : vector<1x8xf32>, vector<8x128xf32>, vector<1x128xf32> -> vector<1x128xf32>
    %905 = arith.truncf %892 : vector<1x128xf32> to vector<1x128xbf16>
    %c0_236 = arith.constant 0 : index
    %c0_237 = arith.constant 0 : index
    %906 = vector.load %arg9[%c0_236, %c0_237] : memref<128x128xbf16, #tpu.memory_space<vmem>>, vector<128x128xbf16>
    %cst_238 = arith.constant dense<0.000000e+00> : vector<1x128xf32>
    %907 = tpu.matmul %905, %906, %cst_238 {dimension_numbers = #tpu.dot_dimension_numbers<[1], [0], [0], [1], [0, 0, 1, 1], [], []>} : vector<1x128xbf16>, vector<128x128xbf16>, vector<1x128xf32> -> vector<1x128xf32>
    %908 = arith.addf %907, %904 : vector<1x128xf32>
    %909 = arith.addf %908, %371 : vector<1x128xf32>
    %910 = math.tanh %909 : vector<1x128xf32>
    %911 = arith.truncf %910 : vector<1x128xf32> to vector<1x128xbf16>
    %c0_239 = arith.constant 0 : index
    %c0_240 = arith.constant 0 : index
    %912 = vector.load %arg12[%c0_239, %c0_240] : memref<128x128xbf16, #tpu.memory_space<vmem>>, vector<128x128xbf16>
    %cst_241 = arith.constant dense<0.000000e+00> : vector<1x128xf32>
    %913 = tpu.matmul %911, %912, %cst_241 {dimension_numbers = #tpu.dot_dimension_numbers<[1], [0], [0], [1], [0, 0, 1, 1], [], []>} : vector<1x128xbf16>, vector<128x128xbf16>, vector<1x128xf32> -> vector<1x128xf32>
    %914 = arith.addf %913, %372 : vector<1x128xf32>
    %cst_242 = arith.constant dense<0xFF800000> : vector<1xf32>
    %915 = vector.multi_reduction <maximumf>, %914, %cst_242 [1] : vector<1x128xf32> to vector<1xf32>
    %916 = vector.shape_cast %915 : vector<1xf32> to vector<1x1xf32>
    %917 = vector.broadcast %916 : vector<1x1xf32> to vector<1x128xf32>
    %918 = arith.cmpf oge, %914, %917 : vector<1x128xf32>
    %c128_i32_243 = arith.constant 128 : i32
    %919 = vector.broadcast %c128_i32_243 : i32 to vector<1x128xi32>
    %920 = arith.select %918, %0, %919 : vector<1x128xi1>, vector<1x128xi32>
    %cst_244 = arith.constant dense<2147483647> : vector<1xi32>
    %921 = vector.multi_reduction <minsi>, %920, %cst_244 [1] : vector<1x128xi32> to vector<1xi32>
    %922 = vector.shape_cast %921 : vector<1xi32> to vector<1x1xi32>
    %923 = vector.broadcast %916 : vector<1x1xf32> to vector<1x128xf32>
    %924 = arith.subf %914, %923 : vector<1x128xf32>
    %925 = math.exp %924 : vector<1x128xf32>
    %cst_245 = arith.constant dense<0.000000e+00> : vector<1xf32>
    %926 = vector.multi_reduction <add>, %925, %cst_245 [1] : vector<1x128xf32> to vector<1xf32>
    %927 = vector.shape_cast %926 : vector<1xf32> to vector<1x1xf32>
    %928 = tpu.reciprocal %927 : vector<1x1xf32> -> vector<1x1xf32>
    %c5_i32_246 = arith.constant 5 : i32
    %929 = vector.broadcast %c5_i32_246 : i32 to vector<1x6xi32>
    %930 = arith.cmpi eq, %373, %929 : vector<1x6xi32>
    %931 = vector.broadcast %854 : vector<1x1xi1> to vector<1x6xi1>
    %932 = arith.andi %930, %931 : vector<1x6xi1>
    %933 = vector.shape_cast %922 : vector<1x1xi32> to vector<1x1xi32>
    %934 = vector.broadcast %933 : vector<1x1xi32> to vector<1x6xi32>
    %935 = arith.select %932, %934, %840 : vector<1x6xi1>, vector<1x6xi32>
    %936 = vector.shape_cast %928 : vector<1x1xf32> to vector<1x1xf32>
    %937 = vector.broadcast %936 : vector<1x1xf32> to vector<1x6xf32>
    %938 = arith.select %932, %937, %843 : vector<1x6xi1>, vector<1x6xf32>
    %c0_247 = arith.constant 0 : index
    %c0_248 = arith.constant 0 : index
    %939 = vector.load %arg14[%c0_247, %c0_248] : memref<1x6xi32, #tpu.memory_space<vmem>>, vector<1x6xi32>
    tpu.vector_store %arg14[%c0_247, %c0_248], %935 {strides = array<i32>} : memref<1x6xi32, #tpu.memory_space<vmem>>, vector<1x6xi32>,
    %c0_249 = arith.constant 0 : index
    %c0_250 = arith.constant 0 : index
    %940 = vector.load %arg15[%c0_249, %c0_250] : memref<1x6xf32, #tpu.memory_space<vmem>>, vector<1x6xf32>
    tpu.vector_store %arg15[%c0_249, %c0_250], %938 {strides = array<i32>} : memref<1x6xf32, #tpu.memory_space<vmem>>, vector<1x6xf32>,
    return
  }
}

</mosaic_0001>

<llo_original>
// kernel: _greedy_decode_device.1
$region0: #{_greedy_decode_device.1}
  #allocation0 [shape = 'u32[]', space=smem, size = 0x4, offset = 0x4, fixed_abs, tag = 'smem constant byte address 0x4 - core index']
  #allocation1 [shape = 'u32[72,128]{1,0:T(1,128)}', space=vmem, size = 0x9000, scoped, tag = 'internal scratch']
  %s0 = inlined_call_operand.vmem [shape: s32[8], index: 0, kind: input, shape index: {}]
  %s1 = inlined_call_operand.hbm [shape: bf16[128,384], index: 1, kind: input, shape index: {}]
  %s2 = inlined_call_operand.hbm [shape: bf16[128,384], index: 2, kind: input, shape index: {}]
  %s3 = inlined_call_operand.vmem [shape: f32[1,384], index: 3, kind: input, shape index: {}]
  %s4 = inlined_call_operand.vmem [shape: f32[1,384], index: 4, kind: input, shape index: {}]
  %s5 = inlined_call_operand.hbm [shape: bf16[128,384], index: 5, kind: input, shape index: {}]
  %s6 = inlined_call_operand.hbm [shape: bf16[128,384], index: 6, kind: input, shape index: {}]
  %s7 = inlined_call_operand.hbm [shape: f32[1,384], index: 7, kind: input, shape index: {}]
  %s8 = inlined_call_operand.hbm [shape: f32[1,384], index: 8, kind: input, shape index: {}]
  %s9 = inlined_call_operand.hbm [shape: bf16[128,128], index: 9, kind: input, shape index: {}]
  %s10 = inlined_call_operand.hbm [shape: bf16[128,128], index: 10, kind: input, shape index: {}]
  %s11 = inlined_call_operand.hbm [shape: f32[1,128], index: 11, kind: input, shape index: {}]
  %s12 = inlined_call_operand.hbm [shape: bf16[128,128], index: 12, kind: input, shape index: {}]
  %s13 = inlined_call_operand.hbm [shape: f32[1,128], index: 13, kind: input, shape index: {}]
  %s14 = inlined_call_operand.hbm [shape: s32[1,6], index: 14, kind: output, shape index: {0}]
  %s15 = inlined_call_operand.hbm [shape: f32[1,6], index: 15, kind: output, shape index: {1}]
  %16 = xla_tuple %s14, %s15
  %s17 = sld [smem:[#allocation0]]
  $region122: #{_greedy_decode_device.1} parent=0
    _
  %s19 = ssub.s32 1, %s17
  %s20 = scalar_select 0, %s19, %s17
  $region1: #{_greedy_decode_device.1} parent=0
    #allocation2 [shape = 'u8[512]{0}', space=smem, size = 0x200, scoped, tag = 'input window, operand 0, single buffered']
    #allocation3 [shape = 's32[1]{0}', space=sflag, size = 0x4, scoped, tag = 'scoped memory for _greedy_decode_device.1']
    #allocation4 [shape = 's32[1]{0}', space=sflag, size = 0x4, scoped, tag = 'scoped memory for _greedy_decode_device.1']
    #allocation5 [shape = 's32[1]{0}', space=sflag, size = 0x4, scoped, tag = 'scoped memory for _greedy_decode_device.1']
    #allocation6 [shape = 'u8[98304]{0}', space=vmem, size = 0x18000, scoped, tag = 'input window, operand 1, single buffered']
    #allocation7 [shape = 'u8[98304]{0}', space=vmem, size = 0x18000, scoped, tag = 'input window, operand 2, single buffered']
    #allocation8 [shape = 's32[1]{0}', space=sflag, size = 0x4, scoped, tag = 'scoped memory for _greedy_decode_device.1']
    #allocation9 [shape = 'u8[98304]{0}', space=vmem, size = 0x18000, scoped, tag = 'input window, operand 5, single buffered']
    #allocation10 [shape = 'u8[98304]{0}', space=vmem, size = 0x18000, scoped, tag = 'input window, operand 6, single buffered']
    #allocation11 [shape = 's32[1]{0}', space=sflag, size = 0x4, scoped, tag = 'scoped memory for _greedy_decode_device.1']
    #allocation12 [shape = 'u8[1536]{0}', space=vmem, size = 0x800, scoped, tag = 'input window, operand 7, single buffered']
    #allocation13 [shape = 'u8[1536]{0}', space=vmem, size = 0x800, scoped, tag = 'input window, operand 8, single buffered']
    #allocation14 [shape = 's32[1]{0}', space=sflag, size = 0x4, scoped, tag = 'scoped memory for _greedy_decode_device.1']
    #allocation15 [shape = 'u8[32768]{0}', space=vmem, size = 0x8000, scoped, tag = 'input window, operand 9, single buffered']
    #allocation16 [shape = 'u8[32768]{0}', space=vmem, size = 0x8000, scoped, tag = 'input window, operand 10, single buffered']
    #allocation17 [shape = 's32[1]{0}', space=sflag, size = 0x4, scoped, tag = 'scoped memory for _greedy_decode_device.1']
    #allocation18 [shape = 'u8[512]{0}', space=vmem, size = 0x400, scoped, tag = 'input window, operand 11, single buffered']
    #allocation19 [shape = 'u8[32768]{0}', space=vmem, size = 0x8000, scoped, tag = 'input window, operand 12, single buffered']
    #allocation20 [shape = 's32[1]{0}', space=sflag, size = 0x4, scoped, tag = 'scoped memory for _greedy_decode_device.1']
    #allocation21 [shape = 'u8[512]{0}', space=vmem, size = 0x400, scoped, tag = 'input window, operand 13, single buffered']
    #allocation22 [shape = 'u8[512]{0}', space=vmem, size = 0x400, scoped, tag = 'output window, operand 0, single buffered']
    #allocation23 [shape = 'u8[512]{0}', space=vmem, size = 0x400, scoped, tag = 'output window, operand 1, single buffered']
    #allocation24 [shape = 's32[1]{0}', space=sflag, size = 0x4, scoped, tag = 'scoped memory for _greedy_decode_device.1']
    %21 = vsyncpa [#allocation5], 0
    %22 = vsyncpa [#allocation3], 0
    %23 = vsyncpa [#allocation8], 0
    %24 = vsyncpa [#allocation11], 0
    %25 = vsyncpa [#allocation14], 0
    %26 = vsyncpa [#allocation17], 0
    %27 = vsyncpa [#allocation20], 0
    %28 = vsyncpa [#allocation4], 0
    %29 = vsyncpa [#allocation24], 0
    // Predicated region
    $region2: #{_greedy_decode_device.1} parent=1 // pred_check
      _
    $region3: #{_greedy_decode_device.1} parent=1 // pred_check_branch
      %31 = sbr.rel (0) target = $region5
    $region4: #{_greedy_decode_device.1} parent=1 // pred_region
      %33 = vsyncadd [#allocation5], 0
      %s35 = sshll.u32 %s0, 4
      %s36 = int_to_ptr.vmem [resolvable:$true] %s35
      %38 = dma.vmem_to_smem %s36, 16, [#allocation2], [#allocation5]
    $region5: #{_greedy_decode_device.1} parent=1 // pred_fallthru
      _
    // Predicated region
    $region6: #{_greedy_decode_device.1} parent=1 // pred_check
      _
    $region7: #{_greedy_decode_device.1} parent=1 // pred_check_branch
      %40 = sbr.rel (0) target = $region9
    $region8: #{_greedy_decode_device.1} parent=1 // pred_region
      %42 = vsyncadd [#allocation3], 0
      %s43 = sshll.u32 %s1, 4
      %s44 = int_to_ptr.hbm [resolvable:$true] %s43
      %s45 = sshll.u32 [#allocation6], 4
      %s46 = int_to_ptr.vmem [resolvable:$true] %s45
      %51 = dma.hbm_to_vmem [thread:$0]  %s44, 3072, %s46, [#allocation3], 192, 192, 12
    $region9: #{_greedy_decode_device.1} parent=1 // pred_fallthru
      _
    // Predicated region
    $region10: #{_greedy_decode_device.1} parent=1 // pred_check
      _
    $region11: #{_greedy_decode_device.1} parent=1 // pred_check_branch
      %53 = sbr.rel (0) target = $region13
    $region12: #{_greedy_decode_device.1} parent=1 // pred_region
      %55 = vsyncadd [#allocation8], 0
      %s56 = sshll.u32 %s2, 4
      %s57 = int_to_ptr.hbm [resolvable:$true] %s56
      %s58 = sshll.u32 [#allocation7], 4
      %s59 = int_to_ptr.vmem [resolvable:$true] %s58
      %64 = dma.hbm_to_vmem [thread:$0]  %s57, 3072, %s59, [#allocation8], 192, 192, 12
    $region13: #{_greedy_decode_device.1} parent=1 // pred_fallthru
      _
    // Predicated region
    $region14: #{_greedy_decode_device.1} parent=1 // pred_check
      _
    $region15: #{_greedy_decode_device.1} parent=1 // pred_check_branch
      %66 = sbr.rel (0) target = $region17
    $region16: #{_greedy_decode_device.1} parent=1 // pred_region
      _
    $region17: #{_greedy_decode_device.1} parent=1 // pred_fallthru
      _
    // Predicated region
    $region18: #{_greedy_decode_device.1} parent=1 // pred_check
      _
    $region19: #{_greedy_decode_device.1} parent=1 // pred_check_branch
      %68 = sbr.rel (0) target = $region21
    $region20: #{_greedy_decode_device.1} parent=1 // pred_region
      _
    $region21: #{_greedy_decode_device.1} parent=1 // pred_fallthru
      _
    // Predicated region
    $region22: #{_greedy_decode_device.1} parent=1 // pred_check
      _
    $region23: #{_greedy_decode_device.1} parent=1 // pred_check_branch
      %70 = sbr.rel (0) target = $region25
    $region24: #{_greedy_decode_device.1} parent=1 // pred_region
      %72 = vsyncadd [#allocation8], 0
      %s73 = sshll.u32 %s5, 4
      %s74 = int_to_ptr.hbm [resolvable:$true] %s73
      %s75 = sshll.u32 [#allocation9], 4
      %s76 = int_to_ptr.vmem [resolvable:$true] %s75
      %81 = dma.hbm_to_vmem [thread:$0]  %s74, 3072, %s76, [#allocation8], 192, 192, 12
    $region25: #{_greedy_decode_device.1} parent=1 // pred_fallthru
      _
    // Predicated region
    $region26: #{_greedy_decode_device.1} parent=1 // pred_check
      _
    $region27: #{_greedy_decode_device.1} parent=1 // pred_check_branch
      %83 = sbr.rel (0) target = $region29
    $region28: #{_greedy_decode_device.1} parent=1 // pred_region
      %85 = vsyncadd [#allocation11], 0
      %s86 = sshll.u32 %s6, 4
      %s87 = int_to_ptr.hbm [resolvable:$true] %s86
      %s88 = sshll.u32 [#allocation10], 4
      %s89 = int_to_ptr.vmem [resolvable:$true] %s88
      %94 = dma.hbm_to_vmem [thread:$0]  %s87, 3072, %s89, [#allocation11], 192, 192, 12
    $region29: #{_greedy_decode_device.1} parent=1 // pred_fallthru
      _
    // Predicated region
    $region30: #{_greedy_decode_device.1} parent=1 // pred_check
      _
    $region31: #{_greedy_decode_device.1} parent=1 // pred_check_branch
      %96 = sbr.rel (0) target = $region33
    $region32: #{_greedy_decode_device.1} parent=1 // pred_region
      %98 = vsyncadd [#allocation11], 0
      %s100 = sshll.u32 %s7, 4
      %s101 = int_to_ptr.hbm [resolvable:$true] %s100
      %s102 = sshll.u32 [#allocation12], 4
      %s103 = int_to_ptr.vmem [resolvable:$true] %s102
      %105 = dma.hbm_to_vmem [thread:$0]  %s101, 48, %s103, [#allocation11]
    $region33: #{_greedy_decode_device.1} parent=1 // pred_fallthru
      _
    // Predicated region
    $region34: #{_greedy_decode_device.1} parent=1 // pred_check
      _
    $region35: #{_greedy_decode_device.1} parent=1 // pred_check_branch
      %107 = sbr.rel (0) target = $region37
    $region36: #{_greedy_decode_device.1} parent=1 // pred_region
      %109 = vsyncadd [#allocation14], 0
      %s111 = sshll.u32 %s8, 4
      %s112 = int_to_ptr.hbm [resolvable:$true] %s111
      %s113 = sshll.u32 [#allocation13], 4
      %s114 = int_to_ptr.vmem [resolvable:$true] %s113
      %116 = dma.hbm_to_vmem [thread:$0]  %s112, 48, %s114, [#allocation14]
    $region37: #{_greedy_decode_device.1} parent=1 // pred_fallthru
      _
    // Predicated region
    $region38: #{_greedy_decode_device.1} parent=1 // pred_check
      _
    $region39: #{_greedy_decode_device.1} parent=1 // pred_check_branch
      %118 = sbr.rel (0) target = $region41
    $region40: #{_greedy_decode_device.1} parent=1 // pred_region
      %120 = vsyncadd [#allocation14], 0
      %s121 = sshll.u32 %s9, 4
      %s122 = int_to_ptr.hbm [resolvable:$true] %s121
      %s123 = sshll.u32 [#allocation15], 4
      %s124 = int_to_ptr.vmem [resolvable:$true] %s123
      %129 = dma.hbm_to_vmem [thread:$0]  %s122, 1024, %s124, [#allocation14], 64, 64, 4
    $region41: #{_greedy_decode_device.1} parent=1 // pred_fallthru
      _
    // Predicated region
    $region42: #{_greedy_decode_device.1} parent=1 // pred_check
      _
    $region43: #{_greedy_decode_device.1} parent=1 // pred_check_branch
      %131 = sbr.rel (0) target = $region45
    $region44: #{_greedy_decode_device.1} parent=1 // pred_region
      %133 = vsyncadd [#allocation17], 0
      %s134 = sshll.u32 %s10, 4
      %s135 = int_to_ptr.hbm [resolvable:$true] %s134
      %s136 = sshll.u32 [#allocation16], 4
      %s137 = int_to_ptr.vmem [resolvable:$true] %s136
      %142 = dma.hbm_to_vmem [thread:$0]  %s135, 1024, %s137, [#allocation17], 64, 64, 4
    $region45: #{_greedy_decode_device.1} parent=1 // pred_fallthru
      _
    // Predicated region
    $region46: #{_greedy_decode_device.1} parent=1 // pred_check
      _
    $region47: #{_greedy_decode_device.1} parent=1 // pred_check_branch
      %144 = sbr.rel (0) target = $region49
    $region48: #{_greedy_decode_device.1} parent=1 // pred_region
      %146 = vsyncadd [#allocation17], 0
      %s148 = sshll.u32 %s11, 4
      %s149 = int_to_ptr.hbm [resolvable:$true] %s148
      %s150 = sshll.u32 [#allocation18], 4
      %s151 = int_to_ptr.vmem [resolvable:$true] %s150
      %153 = dma.hbm_to_vmem [thread:$0]  %s149, 16, %s151, [#allocation17]
    $region49: #{_greedy_decode_device.1} parent=1 // pred_fallthru
      _
    // Predicated region
    $region50: #{_greedy_decode_device.1} parent=1 // pred_check
      _
    $region51: #{_greedy_decode_device.1} parent=1 // pred_check_branch
      %155 = sbr.rel (0) target = $region53
    $region52: #{_greedy_decode_device.1} parent=1 // pred_region
      %157 = vsyncadd [#allocation20], 0
      %s158 = sshll.u32 %s12, 4
      %s159 = int_to_ptr.hbm [resolvable:$true] %s158
      %s160 = sshll.u32 [#allocation19], 4
      %s161 = int_to_ptr.vmem [resolvable:$true] %s160
      %166 = dma.hbm_to_vmem [thread:$0]  %s159, 1024, %s161, [#allocation20], 64, 64, 4
    $region53: #{_greedy_decode_device.1} parent=1 // pred_fallthru
      _
    // Predicated region
    $region54: #{_greedy_decode_device.1} parent=1 // pred_check
      _
    $region55: #{_greedy_decode_device.1} parent=1 // pred_check_branch
      %168 = sbr.rel (0) target = $region57
    $region56: #{_greedy_decode_device.1} parent=1 // pred_region
      %170 = vsyncadd [#allocation20], 0
      %s172 = sshll.u32 %s13, 4
      %s173 = int_to_ptr.hbm [resolvable:$true] %s172
      %s174 = sshll.u32 [#allocation21], 4
      %s175 = int_to_ptr.vmem [resolvable:$true] %s174
      %177 = dma.hbm_to_vmem [thread:$0]  %s173, 16, %s175, [#allocation20]
    $region57: #{_greedy_decode_device.1} parent=1 // pred_fallthru
      _
    // Predicated region
    $region58: #{_greedy_decode_device.1} parent=1 // pred_check
      _
    $region59: #{_greedy_decode_device.1} parent=1 // pred_check_branch
      %179 = sbr.rel (0) target = $region61
    $region60: #{_greedy_decode_device.1} parent=1 // pred_region
      %181 = dma.done [#allocation5], 16
    $region61: #{_greedy_decode_device.1} parent=1 // pred_fallthru
      _
    // Predicated region
    $region62: #{_greedy_decode_device.1} parent=1 // pred_check
      _
    $region63: #{_greedy_decode_device.1} parent=1 // pred_check_branch
      %183 = sbr.rel (0) target = $region65
    $region64: #{_greedy_decode_device.1} parent=1 // pred_region
      %185 = dma.done [#allocation3], 3072
    $region65: #{_greedy_decode_device.1} parent=1 // pred_fallthru
      _
    // Predicated region
    $region66: #{_greedy_decode_device.1} parent=1 // pred_check
      _
    $region67: #{_greedy_decode_device.1} parent=1 // pred_check_branch
      %187 = sbr.rel (0) target = $region69
    $region68: #{_greedy_decode_device.1} parent=1 // pred_region
      %189 = dma.done [#allocation8], 3072
    $region69: #{_greedy_decode_device.1} parent=1 // pred_fallthru
      _
    // Predicated region
    $region70: #{_greedy_decode_device.1} parent=1 // pred_check
      _
    $region71: #{_greedy_decode_device.1} parent=1 // pred_check_branch
      %191 = sbr.rel (0) target = $region73
    $region72: #{_greedy_decode_device.1} parent=1 // pred_region
      %193 = dma.done [#allocation8], 3072
    $region73: #{_greedy_decode_device.1} parent=1 // pred_fallthru
      _
    // Predicated region
    $region74: #{_greedy_decode_device.1} parent=1 // pred_check
      _
    $region75: #{_greedy_decode_device.1} parent=1 // pred_check_branch
      %195 = sbr.rel (0) target = $region77
    $region76: #{_greedy_decode_device.1} parent=1 // pred_region
      %197 = dma.done [#allocation11], 3072
    $region77: #{_greedy_decode_device.1} parent=1 // pred_fallthru
      _
    // Predicated region
    $region78: #{_greedy_decode_device.1} parent=1 // pred_check
      _
    $region79: #{_greedy_decode_device.1} parent=1 // pred_check_branch
      %199 = sbr.rel (0) target = $region81
    $region80: #{_greedy_decode_device.1} parent=1 // pred_region
      %201 = dma.done [#allocation11], 48
    $region81: #{_greedy_decode_device.1} parent=1 // pred_fallthru
      _
    // Predicated region
    $region82: #{_greedy_decode_device.1} parent=1 // pred_check
      _
    $region83: #{_greedy_decode_device.1} parent=1 // pred_check_branch
      %203 = sbr.rel (0) target = $region85
    $region84: #{_greedy_decode_device.1} parent=1 // pred_region
      %205 = dma.done [#allocation14], 48
    $region85: #{_greedy_decode_device.1} parent=1 // pred_fallthru
      _
    // Predicated region
    $region86: #{_greedy_decode_device.1} parent=1 // pred_check
      _
    $region87: #{_greedy_decode_device.1} parent=1 // pred_check_branch
      %207 = sbr.rel (0) target = $region89
    $region88: #{_greedy_decode_device.1} parent=1 // pred_region
      %209 = dma.done [#allocation14], 1024
    $region89: #{_greedy_decode_device.1} parent=1 // pred_fallthru
      _
    // Predicated region
    $region90: #{_greedy_decode_device.1} parent=1 // pred_check
      _
    $region91: #{_greedy_decode_device.1} parent=1 // pred_check_branch
      %211 = sbr.rel (0) target = $region93
    $region92: #{_greedy_decode_device.1} parent=1 // pred_region
      %213 = dma.done [#allocation17], 1024
    $region93: #{_greedy_decode_device.1} parent=1 // pred_fallthru
      _
    // Predicated region
    $region94: #{_greedy_decode_device.1} parent=1 // pred_check
      _
    $region95: #{_greedy_decode_device.1} parent=1 // pred_check_branch
      %215 = sbr.rel (0) target = $region97
    $region96: #{_greedy_decode_device.1} parent=1 // pred_region
      %217 = dma.done [#allocation17], 16
    $region97: #{_greedy_decode_device.1} parent=1 // pred_fallthru
      _
    // Predicated region
    $region98: #{_greedy_decode_device.1} parent=1 // pred_check
      _
    $region99: #{_greedy_decode_device.1} parent=1 // pred_check_branch
      %219 = sbr.rel (0) target = $region101
    $region100: #{_greedy_decode_device.1} parent=1 // pred_region
      %221 = dma.done [#allocation20], 1024
    $region101: #{_greedy_decode_device.1} parent=1 // pred_fallthru
      _
    // Predicated region
    $region102: #{_greedy_decode_device.1} parent=1 // pred_check
      _
    $region103: #{_greedy_decode_device.1} parent=1 // pred_check_branch
      %223 = sbr.rel (0) target = $region105
    $region104: #{_greedy_decode_device.1} parent=1 // pred_region
      %225 = dma.done [#allocation20], 16
    $region105: #{_greedy_decode_device.1} parent=1 // pred_fallthru
      _
    %226 = sfence
    %v228 = vlaneseq
    %v229 = vand.u32 %v228, 127
    %v230 = vlaneseq
    %v231 = vshrl.u32 %v230, 7
    %vm232 = vcmp.eq.s32.totalorder %v231, 0
    %s233 = sld [smem:[#allocation2]]
    %v234 = vstv %s233
    %vm235 = vcmp.eq.s32.totalorder %v229, %v234
    %vm236 = vmand %vm232, %vm235
    %v237 = vsel %vm236, 1.0, 0.0
    %vm238 = vcmp.eq.s32.totalorder %v231, 1
    %s239 = sld [smem:[#allocation2 + $0x1]]
    %v240 = vstv %s239
    %vm241 = vcmp.eq.s32.totalorder %v229, %v240
    %vm242 = vmand %vm238, %vm241
    %v243 = vsel %vm242, 1.0, %v237
    %vm244 = vcmp.eq.s32.totalorder %v231, 2
    %s245 = sld [smem:[#allocation2 + $0x2]]
    %v246 = vstv %s245
    %vm247 = vcmp.eq.s32.totalorder %v229, %v246
    %vm248 = vmand %vm244, %vm247
    %v249 = vsel %vm248, 1.0, %v243
    %vm250 = vcmp.eq.s32.totalorder %v231, 3
    %s251 = sld [smem:[#allocation2 + $0x3]]
    %v252 = vstv %s251
    %vm253 = vcmp.eq.s32.totalorder %v229, %v252
    %vm254 = vmand %vm250, %vm253
    %v255 = vsel %vm254, 1.0, %v249
    %vm256 = vcmp.eq.s32.totalorder %v231, 4
    %s257 = sld [smem:[#allocation2 + $0x4]]
    %v258 = vstv %s257
    %vm259 = vcmp.eq.s32.totalorder %v229, %v258
    %vm260 = vmand %vm256, %vm259
    %v261 = vsel %vm260, 1.0, %v255
    %vm262 = vcmp.eq.s32.totalorder %v231, 5
    %s263 = sld [smem:[#allocation2 + $0x5]]
    %v264 = vstv %s263
    %vm265 = vcmp.eq.s32.totalorder %v229, %v264
    %vm266 = vmand %vm262, %vm265
    %v267 = vsel %vm266, 1.0, %v261
    %vm268 = vcmp.eq.s32.totalorder %v231, 6
    %s269 = sld [smem:[#allocation2 + $0x6]]
    %v270 = vstv %s269
    %vm271 = vcmp.eq.s32.totalorder %v229, %v270
    %vm272 = vmand %vm268, %vm271
    %v273 = vsel %vm272, 1.0, %v267
    %vm274 = vcmp.eq.s32.totalorder %v231, 7
    %s275 = sld [smem:[#allocation2 + $0x7]]
    %v276 = vstv %s275
    %vm277 = vcmp.eq.s32.totalorder %v229, %v276
    %vm278 = vmand %vm274, %vm277
    %v279 = vsel %vm278, 1.0, %v273
    %v280 = vpack.c.bf16 %v279, %v279
    %v281 = vld [vmem:[#allocation6] sm:$0xff]
    %v282 = vld [vmem:[#allocation6 + $0x8] sm:$0xf]
    %v283 = vld [vmem:[#allocation6 + $0xc] sm:$0xff]
    %v284 = vld [vmem:[#allocation6 + $0x14] sm:$0xf]
    %v285 = vld [vmem:[#allocation6 + $0x18] sm:$0xff]
    %v286 = vld [vmem:[#allocation6 + $0x20] sm:$0xf]
    %v287 = vld [vmem:[#allocation6 + $0x24] sm:$0xff]
    %v288 = vld [vmem:[#allocation6 + $0x2c] sm:$0xf]
    %v289 = vld [vmem:[#allocation6 + $0x30] sm:$0xff]
    %v290 = vld [vmem:[#allocation6 + $0x38] sm:$0xf]
    %v291 = vld [vmem:[#allocation6 + $0x3c] sm:$0xff]
    %v292 = vld [vmem:[#allocation6 + $0x44] sm:$0xf]
    %v293 = vld [vmem:[#allocation6 + $0x48] sm:$0xff]
    %v294 = vld [vmem:[#allocation6 + $0x50] sm:$0xf]
    %v295 = vld [vmem:[#allocation6 + $0x54] sm:$0xff]
    %v296 = vld [vmem:[#allocation6 + $0x5c] sm:$0xf]
    %v297 = vld [vmem:[#allocation6 + $0x60] sm:$0xff]
    %v298 = vld [vmem:[#allocation6 + $0x68] sm:$0xf]
    %v299 = vld [vmem:[#allocation6 + $0x6c] sm:$0xff]
    %v300 = vld [vmem:[#allocation6 + $0x74] sm:$0xf]
    %v301 = vld [vmem:[#allocation6 + $0x78] sm:$0xff]
    %v302 = vld [vmem:[#allocation6 + $0x80] sm:$0xf]
    %v303 = vld [vmem:[#allocation6 + $0x84] sm:$0xff]
    %v304 = vld [vmem:[#allocation6 + $0x8c] sm:$0xf]
    %v305 = vld [vmem:[#allocation6 + $0x90] sm:$0xff]
    %v306 = vld [vmem:[#allocation6 + $0x98] sm:$0xf]
    %v307 = vld [vmem:[#allocation6 + $0x9c] sm:$0xff]
    %v308 = vld [vmem:[#allocation6 + $0xa4] sm:$0xf]
    %v309 = vld [vmem:[#allocation6 + $0xa8] sm:$0xff]
    %v310 = vld [vmem:[#allocation6 + $0xb0] sm:$0xf]
    %v311 = vld [vmem:[#allocation6 + $0xb4] sm:$0xff]
    %v312 = vld [vmem:[#allocation6 + $0xbc] sm:$0xf]
    %v313 = vld [vmem:[%s3] sm:$0x7]
    %v315 = vperm.slane %v313, 0
    %v316 = vperm.slane %v313, 1
    %v317 = vperm.slane %v313, 2
    %v353 = vunpack.c.l.b16 %v281
    %v354 = vunpack.c.h.b16 %v281
    %v355 = vunpack.c.l.b16 %v282
    %v356 = vunpack.c.l.b16 %v283
    %v357 = vunpack.c.h.b16 %v283
    %v358 = vunpack.c.l.b16 %v284
    %v359 = vunpack.c.l.b16 %v285
    %v360 = vunpack.c.h.b16 %v285
    %v361 = vunpack.c.l.b16 %v286
    %v362 = vunpack.c.l.b16 %v287
    %v363 = vunpack.c.h.b16 %v287
    %v364 = vunpack.c.l.b16 %v288
    %v365 = vunpack.c.l.b16 %v289
    %v366 = vunpack.c.h.b16 %v289
    %v367 = vunpack.c.l.b16 %v290
    %v368 = vunpack.c.l.b16 %v291
    %v369 = vunpack.c.h.b16 %v291
    %v370 = vunpack.c.l.b16 %v292
    %v371 = vunpack.c.l.b16 %v293
    %v372 = vunpack.c.h.b16 %v293
    %v373 = vunpack.c.l.b16 %v294
    %v374 = vunpack.c.l.b16 %v295
    %v375 = vunpack.c.h.b16 %v295
    %v376 = vunpack.c.l.b16 %v296
    %v377 = vunpack.c.l.b16 %v297
    %v378 = vunpack.c.h.b16 %v297
    %v379 = vunpack.c.l.b16 %v298
    %v380 = vunpack.c.l.b16 %v299
    %v381 = vunpack.c.h.b16 %v299
    %v382 = vunpack.c.l.b16 %v300
    %v383 = vunpack.c.l.b16 %v301
    %v384 = vunpack.c.h.b16 %v301
    %v385 = vunpack.c.l.b16 %v302
    %v386 = vunpack.c.l.b16 %v303
    %v387 = vunpack.c.h.b16 %v303
    %v388 = vunpack.c.l.b16 %v304
    %v389 = vunpack.c.l.b16 %v305
    %v390 = vunpack.c.h.b16 %v305
    %v391 = vunpack.c.l.b16 %v306
    %v392 = vunpack.c.l.b16 %v307
    %v393 = vunpack.c.h.b16 %v307
    %v394 = vunpack.c.l.b16 %v308
    %v395 = vunpack.c.l.b16 %v309
    %v396 = vunpack.c.h.b16 %v309
    %v397 = vunpack.c.l.b16 %v310
    %v398 = vunpack.c.l.b16 %v311
    %v399 = vunpack.c.h.b16 %v311
    %v400 = vunpack.c.l.b16 %v312
    %v401 = vpack.c.b16 %v356, %v353
    %v402 = vpack.c.b16 %v357, %v354
    %v403 = vpack.c.b16 %v358, %v355
    %v404 = vpack.c.b16 %v362, %v359
    %v405 = vpack.c.b16 %v363, %v360
    %v406 = vpack.c.b16 %v364, %v361
    %v407 = vpack.c.b16 %v368, %v365
    %v408 = vpack.c.b16 %v369, %v366
    %v409 = vpack.c.b16 %v370, %v367
    %v410 = vpack.c.b16 %v374, %v371
    %v411 = vpack.c.b16 %v375, %v372
    %v412 = vpack.c.b16 %v376, %v373
    %v413 = vpack.c.b16 %v380, %v377
    %v414 = vpack.c.b16 %v381, %v378
    %v415 = vpack.c.b16 %v382, %v379
    %v416 = vpack.c.b16 %v386, %v383
    %v417 = vpack.c.b16 %v387, %v384
    %v418 = vpack.c.b16 %v388, %v385
    %v419 = vpack.c.b16 %v392, %v389
    %v420 = vpack.c.b16 %v393, %v390
    %v421 = vpack.c.b16 %v394, %v391
    %v422 = vpack.c.b16 %v398, %v395
    %v423 = vpack.c.b16 %v399, %v396
    %v424 = vpack.c.b16 %v400, %v397
    %449 = vmatpush.bf16.msra.mxu0 %v422
    %450 = vmatpush.bf16.msra.mxu0 %v419
    %451 = vmatpush.bf16.msra.mxu0 %v416
    %452 = vmatpush.bf16.msra.mxu0 %v413
    %453 = vmatpush.bf16.msra.mxu0 %v410
    %454 = vmatpush.bf16.msra.mxu0 %v407
    %455 = vmatpush.bf16.msra.mxu0 %v404
    %456 = vmatpush.bf16.msra.mxu0 %v401
    %457 = vmatmul.bf16.gmra.mxu0 %v280
    %v458 = vpop.f32.mrf.mxu0
    %v459 = vadd.f32 %v315, %v458
    %v460 = vpop.f32.mrf.mxu0
    %461 = vdwg.mxu0
    %462 = vmatpush.bf16.msra.mxu0 %v423
    %463 = vmatpush.bf16.msra.mxu0 %v420
    %464 = vmatpush.bf16.msra.mxu0 %v417
    %465 = vmatpush.bf16.msra.mxu0 %v414
    %466 = vmatpush.bf16.msra.mxu0 %v411
    %467 = vmatpush.bf16.msra.mxu0 %v408
    %468 = vmatpush.bf16.msra.mxu0 %v405
    %469 = vmatpush.bf16.msra.mxu0 %v402
    %470 = vmatmul.bf16.gmra.mxu0 %v280
    %v471 = vpop.f32.mrf.mxu0
    %v472 = vadd.f32 %v316, %v471
    %v473 = vpop.f32.mrf.mxu0
    %474 = vdwg.mxu0
    %475 = vmatpush.bf16.msra.mxu0 %v424
    %476 = vmatpush.bf16.msra.mxu0 %v421
    %477 = vmatpush.bf16.msra.mxu0 %v418
    %478 = vmatpush.bf16.msra.mxu0 %v415
    %479 = vmatpush.bf16.msra.mxu0 %v412
    %480 = vmatpush.bf16.msra.mxu0 %v409
    %481 = vmatpush.bf16.msra.mxu0 %v406
    %482 = vmatpush.bf16.msra.mxu0 %v403
    %483 = vmatmul.bf16.gmra.mxu0 %v280
    %v484 = vpop.f32.mrf.mxu0
    %v485 = vadd.f32 %v317, %v484
    %v486 = vpop.f32.mrf.mxu0
    %487 = vdwg.mxu0
    %v488 = vld [vmem:[%s4] sm:$0x7]
    %v489 = vld [vmem:[#allocation7] sm:$0xff]
    %v490 = vld [vmem:[#allocation7 + $0x8] sm:$0xf]
    %v491 = vld [vmem:[#allocation7 + $0xc] sm:$0xff]
    %v492 = vld [vmem:[#allocation7 + $0x14] sm:$0xf]
    %v493 = vld [vmem:[#allocation7 + $0x18] sm:$0xff]
    %v494 = vld [vmem:[#allocation7 + $0x20] sm:$0xf]
    %v495 = vld [vmem:[#allocation7 + $0x24] sm:$0xff]
    %v496 = vld [vmem:[#allocation7 + $0x2c] sm:$0xf]
    %v497 = vld [vmem:[#allocation7 + $0x30] sm:$0xff]
    %v498 = vld [vmem:[#allocation7 + $0x38] sm:$0xf]
    %v499 = vld [vmem:[#allocation7 + $0x3c] sm:$0xff]
    %v500 = vld [vmem:[#allocation7 + $0x44] sm:$0xf]
    %v501 = vld [vmem:[#allocation7 + $0x48] sm:$0xff]
    %v502 = vld [vmem:[#allocation7 + $0x50] sm:$0xf]
    %v503 = vld [vmem:[#allocation7 + $0x54] sm:$0xff]
    %v504 = vld [vmem:[#allocation7 + $0x5c] sm:$0xf]
    %v505 = vld [vmem:[#allocation7 + $0x60] sm:$0xff]
    %v506 = vld [vmem:[#allocation7 + $0x68] sm:$0xf]
    %v507 = vld [vmem:[#allocation7 + $0x6c] sm:$0xff]
    %v508 = vld [vmem:[#allocation7 + $0x74] sm:$0xf]
    %v509 = vld [vmem:[#allocation7 + $0x78] sm:$0xff]
    %v510 = vld [vmem:[#allocation7 + $0x80] sm:$0xf]
    %v511 = vld [vmem:[#allocation7 + $0x84] sm:$0xff]
    %v512 = vld [vmem:[#allocation7 + $0x8c] sm:$0xf]
    %v513 = vld [vmem:[#allocation7 + $0x90] sm:$0xff]
    %v514 = vld [vmem:[#allocation7 + $0x98] sm:$0xf]
    %v515 = vld [vmem:[#allocation7 + $0x9c] sm:$0xff]
    %v516 = vld [vmem:[#allocation7 + $0xa4] sm:$0xf]
    %v517 = vld [vmem:[#allocation7 + $0xa8] sm:$0xff]
    %v518 = vld [vmem:[#allocation7 + $0xb0] sm:$0xf]
    %v519 = vld [vmem:[#allocation7 + $0xb4] sm:$0xff]
    %v520 = vld [vmem:[#allocation7 + $0xbc] sm:$0xf]
    %v553 = vunpack.c.l.b16 %v489
    %v554 = vunpack.c.h.b16 %v489
    %v555 = vunpack.c.l.b16 %v490
    %v556 = vunpack.c.l.b16 %v491
    %v557 = vunpack.c.h.b16 %v491
    %v558 = vunpack.c.l.b16 %v492
    %v559 = vunpack.c.l.b16 %v493
    %v560 = vunpack.c.h.b16 %v493
    %v561 = vunpack.c.l.b16 %v494
    %v562 = vunpack.c.l.b16 %v495
    %v563 = vunpack.c.h.b16 %v495
    %v564 = vunpack.c.l.b16 %v496
    %v565 = vunpack.c.l.b16 %v497
    %v566 = vunpack.c.h.b16 %v497
    %v567 = vunpack.c.l.b16 %v498
    %v568 = vunpack.c.l.b16 %v499
    %v569 = vunpack.c.h.b16 %v499
    %v570 = vunpack.c.l.b16 %v500
    %v571 = vunpack.c.l.b16 %v501
    %v572 = vunpack.c.h.b16 %v501
    %v573 = vunpack.c.l.b16 %v502
    %v574 = vunpack.c.l.b16 %v503
    %v575 = vunpack.c.h.b16 %v503
    %v576 = vunpack.c.l.b16 %v504
    %v577 = vunpack.c.l.b16 %v505
    %v578 = vunpack.c.h.b16 %v505
    %v579 = vunpack.c.l.b16 %v506
    %v580 = vunpack.c.l.b16 %v507
    %v581 = vunpack.c.h.b16 %v507
    %v582 = vunpack.c.l.b16 %v508
    %v583 = vunpack.c.l.b16 %v509
    %v584 = vunpack.c.h.b16 %v509
    %v585 = vunpack.c.l.b16 %v510
    %v586 = vunpack.c.l.b16 %v511
    %v587 = vunpack.c.h.b16 %v511
    %v588 = vunpack.c.l.b16 %v512
    %v589 = vunpack.c.l.b16 %v513
    %v590 = vunpack.c.h.b16 %v513
    %v591 = vunpack.c.l.b16 %v514
    %v592 = vunpack.c.l.b16 %v515
    %v593 = vunpack.c.h.b16 %v515
    %v594 = vunpack.c.l.b16 %v516
    %v595 = vunpack.c.l.b16 %v517
    %v596 = vunpack.c.h.b16 %v517
    %v597 = vunpack.c.l.b16 %v518
    %v598 = vunpack.c.l.b16 %v519
    %v599 = vunpack.c.h.b16 %v519
    %v600 = vunpack.c.l.b16 %v520
    %v601 = vpack.c.b16 %v556, %v553
    %v602 = vpack.c.b16 %v557, %v554
    %v603 = vpack.c.b16 %v558, %v555
    %v604 = vpack.c.b16 %v562, %v559
    %v605 = vpack.c.b16 %v563, %v560
    %v606 = vpack.c.b16 %v564, %v561
    %v607 = vpack.c.b16 %v568, %v565
    %v608 = vpack.c.b16 %v569, %v566
    %v609 = vpack.c.b16 %v570, %v567
    %v610 = vpack.c.b16 %v574, %v571
    %v611 = vpack.c.b16 %v575, %v572
    %v612 = vpack.c.b16 %v576, %v573
    %v613 = vpack.c.b16 %v580, %v577
    %v614 = vpack.c.b16 %v581, %v578
    %v615 = vpack.c.b16 %v582, %v579
    %v616 = vpack.c.b16 %v586, %v583
    %v617 = vpack.c.b16 %v587, %v584
    %v618 = vpack.c.b16 %v588, %v585
    %v619 = vpack.c.b16 %v592, %v589
    %v620 = vpack.c.b16 %v593, %v590
    %v621 = vpack.c.b16 %v594, %v591
    %v622 = vpack.c.b16 %v598, %v595
    %v623 = vpack.c.b16 %v599, %v596
    %v624 = vpack.c.b16 %v600, %v597
    %v650 = vperm.slane %v488, 0
    %v651 = vperm.slane %v488, 1
    %v652 = vperm.slane %v488, 2
    %656 = vmatpush.bf16.msra.mxu0 %v622
    %657 = vmatpush.bf16.msra.mxu0 %v619
    %658 = vmatpush.bf16.msra.mxu0 %v616
    %659 = vmatpush.bf16.msra.mxu0 %v613
    %660 = vmatpush.bf16.msra.mxu0 %v610
    %661 = vmatpush.bf16.msra.mxu0 %v607
    %662 = vmatpush.bf16.msra.mxu0 %v604
    %663 = vmatpush.bf16.msra.mxu0 %v601
    %664 = vmatmul.bf16.gmra.mxu0 0
    %v665 = vpop.f32.mrf.mxu0
    %v666 = vadd.f32 %v650, %v665
    %v667 = vpop.f32.mrf.mxu0
    %668 = vdwg.mxu0
    %669 = vmatpush.bf16.msra.mxu0 %v623
    %670 = vmatpush.bf16.msra.mxu0 %v620
    %671 = vmatpush.bf16.msra.mxu0 %v617
    %672 = vmatpush.bf16.msra.mxu0 %v614
    %673 = vmatpush.bf16.msra.mxu0 %v611
    %674 = vmatpush.bf16.msra.mxu0 %v608
    %675 = vmatpush.bf16.msra.mxu0 %v605
    %676 = vmatpush.bf16.msra.mxu0 %v602
    %677 = vmatmul.bf16.gmra.mxu0 0
    %v678 = vpop.f32.mrf.mxu0
    %v679 = vadd.f32 %v651, %v678
    %v680 = vpop.f32.mrf.mxu0
    %681 = vdwg.mxu0
    %682 = vmatpush.bf16.msra.mxu0 %v624
    %683 = vmatpush.bf16.msra.mxu0 %v621
    %684 = vmatpush.bf16.msra.mxu0 %v618
    %685 = vmatpush.bf16.msra.mxu0 %v615
    %686 = vmatpush.bf16.msra.mxu0 %v612
    %687 = vmatpush.bf16.msra.mxu0 %v609
    %688 = vmatpush.bf16.msra.mxu0 %v606
    %689 = vmatpush.bf16.msra.mxu0 %v603
    %690 = vmatmul.bf16.gmra.mxu0 0
    %v691 = vpop.f32.mrf.mxu0
    %v692 = vadd.f32 %v652, %v691
    %v693 = vpop.f32.mrf.mxu0
    %694 = vdwg.mxu0
    %v695 = vadd.f32 %v459, %v666
    %v696 = vxor.u32 %v695, 2147483648
    %v697 = vmul.f32 %v696, 1.442695
    %v698 = vpow.pop %v697
    %v699 = vadd.f32 %v698, 1.0
    %v700 = vrcp.pop %v699
    %v701 = vmul.f32 %v699, %v700
    %v702 = vsub.f32 1.0, %v701
    %v703 = vmul.f32 %v700, %v702
    %v704 = vadd.f32 %v700, %v703
    %vm705 = vweird.f32 %v699
    %vm706 = vweird.f32 %v700
    %vm707 = vmor %vm705, %vm706
    %v708 = vsel %vm707, %v700, %v704
    %v709 = vand.u32 2147483647, %v699
    %vm710 = vcmp.eq.f32.partialorder %v709, 8.507059e+37
    %v711 = vand.u32 %v699, 2147483648
    %v712 = vor.u32 1.1754944e-38, %v711
    %v713 = vsel %vm710, %v712, %v708
    %v714 = vmul.f32 1.0, %v713
    %v715 = vadd.f32 %v472, %v679
    %v716 = vxor.u32 %v715, 2147483648
    %v717 = vmul.f32 %v716, 1.442695
    %v718 = vpow.pop %v717
    %v719 = vadd.f32 %v718, 1.0
    %v720 = vrcp.pop %v719
    %v721 = vmul.f32 %v719, %v720
    %v722 = vsub.f32 1.0, %v721
    %v723 = vmul.f32 %v720, %v722
    %v724 = vadd.f32 %v720, %v723
    %vm725 = vweird.f32 %v719
    %vm726 = vweird.f32 %v720
    %vm727 = vmor %vm725, %vm726
    %v728 = vsel %vm727, %v720, %v724
    %v729 = vand.u32 2147483647, %v719
    %vm730 = vcmp.eq.f32.partialorder %v729, 8.507059e+37
    %v731 = vand.u32 %v719, 2147483648
    %v732 = vor.u32 1.1754944e-38, %v731
    %v733 = vsel %vm730, %v732, %v728
    %v734 = vmul.f32 1.0, %v733
    %v735 = vmul.f32 %v714, %v692
    %v736 = vadd.f32 %v485, %v735
    %v737 = vtanh.pop %v736
    %v738 = vsub.f32 1.0, %v734
    %v739 = vmul.f32 %v738, %v737
    %v740 = vmul.f32 %v734, 0.0
    %v741 = vadd.f32 %v739, %v740
    %v742 = vperm.slane %v741, 0
    %v743 = vsel %vm232, %v742, 0.0
    %v744 = vpack.c.bf16 %v741, %v741
    %745 = vmatpush.bf16.msra.mxu0 %v622
    %746 = vmatpush.bf16.msra.mxu0 %v619
    %747 = vmatpush.bf16.msra.mxu0 %v616
    %748 = vmatpush.bf16.msra.mxu0 %v613
    %749 = vmatpush.bf16.msra.mxu0 %v610
    %750 = vmatpush.bf16.msra.mxu0 %v607
    %751 = vmatpush.bf16.msra.mxu0 %v604
    %752 = vmatpush.bf16.msra.mxu0 %v601
    %753 = vmatmul.bf16.gmra.mxu0 %v744
    %v754 = vpop.f32.mrf.mxu0
    %v755 = vadd.f32 %v650, %v754
    %v756 = vpop.f32.mrf.mxu0
    %757 = vdwg.mxu0
    %758 = vmatpush.bf16.msra.mxu0 %v623
    %759 = vmatpush.bf16.msra.mxu0 %v620
    %760 = vmatpush.bf16.msra.mxu0 %v617
    %761 = vmatpush.bf16.msra.mxu0 %v614
    %762 = vmatpush.bf16.msra.mxu0 %v611
    %763 = vmatpush.bf16.msra.mxu0 %v608
    %764 = vmatpush.bf16.msra.mxu0 %v605
    %765 = vmatpush.bf16.msra.mxu0 %v602
    %766 = vmatmul.bf16.gmra.mxu0 %v744
    %v767 = vpop.f32.mrf.mxu0
    %v768 = vadd.f32 %v651, %v767
    %v769 = vpop.f32.mrf.mxu0
    %770 = vdwg.mxu0
    %771 = vmatpush.bf16.msra.mxu0 %v624
    %772 = vmatpush.bf16.msra.mxu0 %v621
    %773 = vmatpush.bf16.msra.mxu0 %v618
    %774 = vmatpush.bf16.msra.mxu0 %v615
    %775 = vmatpush.bf16.msra.mxu0 %v612
    %776 = vmatpush.bf16.msra.mxu0 %v609
    %777 = vmatpush.bf16.msra.mxu0 %v606
    %778 = vmatpush.bf16.msra.mxu0 %v603
    %779 = vmatmul.bf16.gmra.mxu0 %v744
    %v780 = vpop.f32.mrf.mxu0
    %v781 = vadd.f32 %v652, %v780
    %v782 = vpop.f32.mrf.mxu0
    %783 = vdwg.mxu0
    %v785 = vrot.slane %v755, 7
    %v787 = vadd.f32 %v459, %v785
    %v788 = vxor.u32 %v787, 2147483648
    %v789 = vmul.f32 %v788, 1.442695
    %v790 = vpow.pop %v789
    %v791 = vadd.f32 %v790, 1.0
    %v792 = vrcp.pop %v791
    %v793 = vmul.f32 %v791, %v792
    %v794 = vsub.f32 1.0, %v793
    %v795 = vmul.f32 %v792, %v794
    %v796 = vadd.f32 %v792, %v795
    %vm797 = vweird.f32 %v791
    %vm798 = vweird.f32 %v792
    %vm799 = vmor %vm797, %vm798
    %v800 = vsel %vm799, %v792, %v796
    %v801 = vand.u32 2147483647, %v791
    %vm802 = vcmp.eq.f32.partialorder %v801, 8.507059e+37
    %v803 = vand.u32 %v791, 2147483648
    %v804 = vor.u32 1.1754944e-38, %v803
    %v805 = vsel %vm802, %v804, %v800
    %v806 = vmul.f32 1.0, %v805
    %v808 = vrot.slane %v768, 7
    %v810 = vadd.f32 %v472, %v808
    %v811 = vxor.u32 %v810, 2147483648
    %v812 = vmul.f32 %v811, 1.442695
    %v813 = vpow.pop %v812
    %v814 = vadd.f32 %v813, 1.0
    %v815 = vrcp.pop %v814
    %v816 = vmul.f32 %v814, %v815
    %v817 = vsub.f32 1.0, %v816
    %v818 = vmul.f32 %v815, %v817
    %v819 = vadd.f32 %v815, %v818
    %vm820 = vweird.f32 %v814
    %vm821 = vweird.f32 %v815
    %vm822 = vmor %vm820, %vm821
    %v823 = vsel %vm822, %v815, %v819
    %v824 = vand.u32 2147483647, %v814
    %vm825 = vcmp.eq.f32.partialorder %v824, 8.507059e+37
    %v826 = vand.u32 %v814, 2147483648
    %v827 = vor.u32 1.1754944e-38, %v826
    %v828 = vsel %vm825, %v827, %v823
    %v829 = vmul.f32 1.0, %v828
    %v831 = vrot.slane %v781, 7
    %v833 = vmul.f32 %v806, %v831
    %v834 = vadd.f32 %v485, %v833
    %v835 = vtanh.pop %v834
    %v836 = vsub.f32 1.0, %v829
    %v837 = vmul.f32 %v836, %v835
    %v839 = vrot.slane %v741, 7
    %v841 = vmul.f32 %v829, %v839
    %v842 = vadd.f32 %v837, %v841
    %v843 = vperm.slane %v842, 1
    %v844 = vsel %vm238, %v843, %v743
    %v845 = vpack.c.bf16 %v842, %v842
    %v847 = vshrl.u32 %v845, 16
    %850 = vmatpush.bf16.msra.mxu0 %v622
    %851 = vmatpush.bf16.msra.mxu0 %v619
    %852 = vmatpush.bf16.msra.mxu0 %v616
    %853 = vmatpush.bf16.msra.mxu0 %v613
    %854 = vmatpush.bf16.msra.mxu0 %v610
    %855 = vmatpush.bf16.msra.mxu0 %v607
    %856 = vmatpush.bf16.msra.mxu0 %v604
    %857 = vmatpush.bf16.msra.mxu0 %v601
    %858 = vmatmul.bf16.gmra.mxu0 %v847
    %v859 = vpop.f32.mrf.mxu0
    %v860 = vadd.f32 %v650, %v859
    %v861 = vpop.f32.mrf.mxu0
    %862 = vdwg.mxu0
    %863 = vmatpush.bf16.msra.mxu0 %v623
    %864 = vmatpush.bf16.msra.mxu0 %v620
    %865 = vmatpush.bf16.msra.mxu0 %v617
    %866 = vmatpush.bf16.msra.mxu0 %v614
    %867 = vmatpush.bf16.msra.mxu0 %v611
    %868 = vmatpush.bf16.msra.mxu0 %v608
    %869 = vmatpush.bf16.msra.mxu0 %v605
    %870 = vmatpush.bf16.msra.mxu0 %v602
    %871 = vmatmul.bf16.gmra.mxu0 %v847
    %v872 = vpop.f32.mrf.mxu0
    %v873 = vadd.f32 %v651, %v872
    %v874 = vpop.f32.mrf.mxu0
    %875 = vdwg.mxu0
    %876 = vmatpush.bf16.msra.mxu0 %v624
    %877 = vmatpush.bf16.msra.mxu0 %v621
    %878 = vmatpush.bf16.msra.mxu0 %v618
    %879 = vmatpush.bf16.msra.mxu0 %v615
    %880 = vmatpush.bf16.msra.mxu0 %v612
    %881 = vmatpush.bf16.msra.mxu0 %v609
    %882 = vmatpush.bf16.msra.mxu0 %v606
    %883 = vmatpush.bf16.msra.mxu0 %v603
    %884 = vmatmul.bf16.gmra.mxu0 %v847
    %v885 = vpop.f32.mrf.mxu0
    %v886 = vadd.f32 %v652, %v885
    %v887 = vpop.f32.mrf.mxu0
    %888 = vdwg.mxu0
    %v890 = vrot.slane %v860, 6
    %v892 = vadd.f32 %v459, %v890
    %v893 = vxor.u32 %v892, 2147483648
    %v894 = vmul.f32 %v893, 1.442695
    %v895 = vpow.pop %v894
    %v896 = vadd.f32 %v895, 1.0
    %v897 = vrcp.pop %v896
    %v898 = vmul.f32 %v896, %v897
    %v899 = vsub.f32 1.0, %v898
    %v900 = vmul.f32 %v897, %v899
    %v901 = vadd.f32 %v897, %v900
    %vm902 = vweird.f32 %v896
    %vm903 = vweird.f32 %v897
    %vm904 = vmor %vm902, %vm903
    %v905 = vsel %vm904, %v897, %v901
    %v906 = vand.u32 2147483647, %v896
    %vm907 = vcmp.eq.f32.partialorder %v906, 8.507059e+37
    %v908 = vand.u32 %v896, 2147483648
    %v909 = vor.u32 1.1754944e-38, %v908
    %v910 = vsel %vm907, %v909, %v905
    %v911 = vmul.f32 1.0, %v910
    %v913 = vrot.slane %v873, 6
    %v915 = vadd.f32 %v472, %v913
    %v916 = vxor.u32 %v915, 2147483648
    %v917 = vmul.f32 %v916, 1.442695
    %v918 = vpow.pop %v917
    %v919 = vadd.f32 %v918, 1.0
    %v920 = vrcp.pop %v919
    %v921 = vmul.f32 %v919, %v920
    %v922 = vsub.f32 1.0, %v921
    %v923 = vmul.f32 %v920, %v922
    %v924 = vadd.f32 %v920, %v923
    %vm925 = vweird.f32 %v919
    %vm926 = vweird.f32 %v920
    %vm927 = vmor %vm925, %vm926
    %v928 = vsel %vm927, %v920, %v924
    %v929 = vand.u32 2147483647, %v919
    %vm930 = vcmp.eq.f32.partialorder %v929, 8.507059e+37
    %v931 = vand.u32 %v919, 2147483648
    %v932 = vor.u32 1.1754944e-38, %v931
    %v933 = vsel %vm930, %v932, %v928
    %v934 = vmul.f32 1.0, %v933
    %v936 = vrot.slane %v886, 6
    %v938 = vmul.f32 %v911, %v936
    %v939 = vadd.f32 %v485, %v938
    %v940 = vtanh.pop %v939
    %v941 = vsub.f32 1.0, %v934
    %v942 = vmul.f32 %v941, %v940
    %v944 = vrot.slane %v842, 7
    %v946 = vmul.f32 %v934, %v944
    %v947 = vadd.f32 %v942, %v946
    %v948 = vperm.slane %v947, 2
    %v949 = vsel %vm244, %v948, %v844
    %v950 = vpack.c.bf16 %v947, %v947
    %v952 = vrot.slane %v950, 1
    %954 = vmatpush.bf16.msra.mxu0 %v622
    %955 = vmatpush.bf16.msra.mxu0 %v619
    %956 = vmatpush.bf16.msra.mxu0 %v616
    %957 = vmatpush.bf16.msra.mxu0 %v613
    %958 = vmatpush.bf16.msra.mxu0 %v610
    %959 = vmatpush.bf16.msra.mxu0 %v607
    %960 = vmatpush.bf16.msra.mxu0 %v604
    %961 = vmatpush.bf16.msra.mxu0 %v601
    %962 = vmatmul.bf16.gmra.mxu0 %v952
    %v963 = vpop.f32.mrf.mxu0
    %v964 = vadd.f32 %v650, %v963
    %v965 = vpop.f32.mrf.mxu0
    %966 = vdwg.mxu0
    %967 = vmatpush.bf16.msra.mxu0 %v623
    %968 = vmatpush.bf16.msra.mxu0 %v620
    %969 = vmatpush.bf16.msra.mxu0 %v617
    %970 = vmatpush.bf16.msra.mxu0 %v614
    %971 = vmatpush.bf16.msra.mxu0 %v611
    %972 = vmatpush.bf16.msra.mxu0 %v608
    %973 = vmatpush.bf16.msra.mxu0 %v605
    %974 = vmatpush.bf16.msra.mxu0 %v602
    %975 = vmatmul.bf16.gmra.mxu0 %v952
    %v976 = vpop.f32.mrf.mxu0
    %v977 = vadd.f32 %v651, %v976
    %v978 = vpop.f32.mrf.mxu0
    %979 = vdwg.mxu0
    %980 = vmatpush.bf16.msra.mxu0 %v624
    %981 = vmatpush.bf16.msra.mxu0 %v621
    %982 = vmatpush.bf16.msra.mxu0 %v618
    %983 = vmatpush.bf16.msra.mxu0 %v615
    %984 = vmatpush.bf16.msra.mxu0 %v612
    %985 = vmatpush.bf16.msra.mxu0 %v609
    %986 = vmatpush.bf16.msra.mxu0 %v606
    %987 = vmatpush.bf16.msra.mxu0 %v603
    %988 = vmatmul.bf16.gmra.mxu0 %v952
    %v989 = vpop.f32.mrf.mxu0
    %v990 = vadd.f32 %v652, %v989
    %v991 = vpop.f32.mrf.mxu0
    %992 = vdwg.mxu0
    %v994 = vrot.slane %v964, 5
    %v996 = vadd.f32 %v459, %v994
    %v997 = vxor.u32 %v996, 2147483648
    %v998 = vmul.f32 %v997, 1.442695
    %v999 = vpow.pop %v998
    %v1000 = vadd.f32 %v999, 1.0
    %v1001 = vrcp.pop %v1000
    %v1002 = vmul.f32 %v1000, %v1001
    %v1003 = vsub.f32 1.0, %v1002
    %v1004 = vmul.f32 %v1001, %v1003
    %v1005 = vadd.f32 %v1001, %v1004
    %vm1006 = vweird.f32 %v1000
    %vm1007 = vweird.f32 %v1001
    %vm1008 = vmor %vm1006, %vm1007
    %v1009 = vsel %vm1008, %v1001, %v1005
    %v1010 = vand.u32 2147483647, %v1000
    %vm1011 = vcmp.eq.f32.partialorder %v1010, 8.507059e+37
    %v1012 = vand.u32 %v1000, 2147483648
    %v1013 = vor.u32 1.1754944e-38, %v1012
    %v1014 = vsel %vm1011, %v1013, %v1009
    %v1015 = vmul.f32 1.0, %v1014
    %v1017 = vrot.slane %v977, 5
    %v1019 = vadd.f32 %v472, %v1017
    %v1020 = vxor.u32 %v1019, 2147483648
    %v1021 = vmul.f32 %v1020, 1.442695
    %v1022 = vpow.pop %v1021
    %v1023 = vadd.f32 %v1022, 1.0
    %v1024 = vrcp.pop %v1023
    %v1025 = vmul.f32 %v1023, %v1024
    %v1026 = vsub.f32 1.0, %v1025
    %v1027 = vmul.f32 %v1024, %v1026
    %v1028 = vadd.f32 %v1024, %v1027
    %vm1029 = vweird.f32 %v1023
    %vm1030 = vweird.f32 %v1024
    %vm1031 = vmor %vm1029, %vm1030
    %v1032 = vsel %vm1031, %v1024, %v1028
    %v1033 = vand.u32 2147483647, %v1023
    %vm1034 = vcmp.eq.f32.partialorder %v1033, 8.507059e+37
    %v1035 = vand.u32 %v1023, 2147483648
    %v1036 = vor.u32 1.1754944e-38, %v1035
    %v1037 = vsel %vm1034, %v1036, %v1032
    %v1038 = vmul.f32 1.0, %v1037
    %v1040 = vrot.slane %v990, 5
    %v1042 = vmul.f32 %v1015, %v1040
    %v1043 = vadd.f32 %v485, %v1042
    %v1044 = vtanh.pop %v1043
    %v1045 = vsub.f32 1.0, %v1038
    %v1046 = vmul.f32 %v1045, %v1044
    %v1048 = vrot.slane %v947, 7
    %v1050 = vmul.f32 %v1038, %v1048
    %v1051 = vadd.f32 %v1046, %v1050
    %v1052 = vperm.slane %v1051, 3
    %v1053 = vsel %vm250, %v1052, %v949
    %v1054 = vpack.c.bf16 %v1051, %v1051
    %v1056 = vshrl.u32 %v1054, 16
    %v1058 = vrot.slane %v1056, 1
    %1060 = vmatpush.bf16.msra.mxu0 %v622
    %1061 = vmatpush.bf16.msra.mxu0 %v619
    %1062 = vmatpush.bf16.msra.mxu0 %v616
    %1063 = vmatpush.bf16.msra.mxu0 %v613
    %1064 = vmatpush.bf16.msra.mxu0 %v610
    %1065 = vmatpush.bf16.msra.mxu0 %v607
    %1066 = vmatpush.bf16.msra.mxu0 %v604
    %1067 = vmatpush.bf16.msra.mxu0 %v601
    %1068 = vmatmul.bf16.gmra.mxu0 %v1058
    %v1069 = vpop.f32.mrf.mxu0
    %v1070 = vadd.f32 %v650, %v1069
    %v1071 = vpop.f32.mrf.mxu0
    %1072 = vdwg.mxu0
    %1073 = vmatpush.bf16.msra.mxu0 %v623
    %1074 = vmatpush.bf16.msra.mxu0 %v620
    %1075 = vmatpush.bf16.msra.mxu0 %v617
    %1076 = vmatpush.bf16.msra.mxu0 %v614
    %1077 = vmatpush.bf16.msra.mxu0 %v611
    %1078 = vmatpush.bf16.msra.mxu0 %v608
    %1079 = vmatpush.bf16.msra.mxu0 %v605
    %1080 = vmatpush.bf16.msra.mxu0 %v602
    %1081 = vmatmul.bf16.gmra.mxu0 %v1058
    %v1082 = vpop.f32.mrf.mxu0
    %v1083 = vadd.f32 %v651, %v1082
    %v1084 = vpop.f32.mrf.mxu0
    %1085 = vdwg.mxu0
    %1086 = vmatpush.bf16.msra.mxu0 %v624
    %1087 = vmatpush.bf16.msra.mxu0 %v621
    %1088 = vmatpush.bf16.msra.mxu0 %v618
    %1089 = vmatpush.bf16.msra.mxu0 %v615
    %1090 = vmatpush.bf16.msra.mxu0 %v612
    %1091 = vmatpush.bf16.msra.mxu0 %v609
    %1092 = vmatpush.bf16.msra.mxu0 %v606
    %1093 = vmatpush.bf16.msra.mxu0 %v603
    %1094 = vmatmul.bf16.gmra.mxu0 %v1058
    %v1095 = vpop.f32.mrf.mxu0
    %v1096 = vadd.f32 %v652, %v1095
    %v1097 = vpop.f32.mrf.mxu0
    %1098 = vdwg.mxu0
    %v1100 = vrot.slane %v1070, 4
    %v1102 = vadd.f32 %v459, %v1100
    %v1103 = vxor.u32 %v1102, 2147483648
    %v1104 = vmul.f32 %v1103, 1.442695
    %v1105 = vpow.pop %v1104
    %v1106 = vadd.f32 %v1105, 1.0
    %v1107 = vrcp.pop %v1106
    %v1108 = vmul.f32 %v1106, %v1107
    %v1109 = vsub.f32 1.0, %v1108
    %v1110 = vmul.f32 %v1107, %v1109
    %v1111 = vadd.f32 %v1107, %v1110
    %vm1112 = vweird.f32 %v1106
    %vm1113 = vweird.f32 %v1107
    %vm1114 = vmor %vm1112, %vm1113
    %v1115 = vsel %vm1114, %v1107, %v1111
    %v1116 = vand.u32 2147483647, %v1106
    %vm1117 = vcmp.eq.f32.partialorder %v1116, 8.507059e+37
    %v1118 = vand.u32 %v1106, 2147483648
    %v1119 = vor.u32 1.1754944e-38, %v1118
    %v1120 = vsel %vm1117, %v1119, %v1115
    %v1121 = vmul.f32 1.0, %v1120
    %v1123 = vrot.slane %v1083, 4
    %v1125 = vadd.f32 %v472, %v1123
    %v1126 = vxor.u32 %v1125, 2147483648
    %v1127 = vmul.f32 %v1126, 1.442695
    %v1128 = vpow.pop %v1127
    %v1129 = vadd.f32 %v1128, 1.0
    %v1130 = vrcp.pop %v1129
    %v1131 = vmul.f32 %v1129, %v1130
    %v1132 = vsub.f32 1.0, %v1131
    %v1133 = vmul.f32 %v1130, %v1132
    %v1134 = vadd.f32 %v1130, %v1133
    %vm1135 = vweird.f32 %v1129
    %vm1136 = vweird.f32 %v1130
    %vm1137 = vmor %vm1135, %vm1136
    %v1138 = vsel %vm1137, %v1130, %v1134
    %v1139 = vand.u32 2147483647, %v1129
    %vm1140 = vcmp.eq.f32.partialorder %v1139, 8.507059e+37
    %v1141 = vand.u32 %v1129, 2147483648
    %v1142 = vor.u32 1.1754944e-38, %v1141
    %v1143 = vsel %vm1140, %v1142, %v1138
    %v1144 = vmul.f32 1.0, %v1143
    %v1146 = vrot.slane %v1096, 4
    %v1148 = vmul.f32 %v1121, %v1146
    %v1149 = vadd.f32 %v485, %v1148
    %v1150 = vtanh.pop %v1149
    %v1151 = vsub.f32 1.0, %v1144
    %v1152 = vmul.f32 %v1151, %v1150
    %v1154 = vrot.slane %v1051, 7
    %v1156 = vmul.f32 %v1144, %v1154
    %v1157 = vadd.f32 %v1152, %v1156
    %v1158 = vperm.slane %v1157, 4
    %v1159 = vsel %vm256, %v1158, %v1053
    %v1160 = vpack.c.bf16 %v1157, %v1157
    %v1162 = vrot.slane %v1160, 2
    %1164 = vmatpush.bf16.msra.mxu0 %v622
    %1165 = vmatpush.bf16.msra.mxu0 %v619
    %1166 = vmatpush.bf16.msra.mxu0 %v616
    %1167 = vmatpush.bf16.msra.mxu0 %v613
    %1168 = vmatpush.bf16.msra.mxu0 %v610
    %1169 = vmatpush.bf16.msra.mxu0 %v607
    %1170 = vmatpush.bf16.msra.mxu0 %v604
    %1171 = vmatpush.bf16.msra.mxu0 %v601
    %1172 = vmatmul.bf16.gmra.mxu0 %v1162
    %v1173 = vpop.f32.mrf.mxu0
    %v1174 = vadd.f32 %v650, %v1173
    %v1175 = vpop.f32.mrf.mxu0
    %1176 = vdwg.mxu0
    %1177 = vmatpush.bf16.msra.mxu0 %v623
    %1178 = vmatpush.bf16.msra.mxu0 %v620
    %1179 = vmatpush.bf16.msra.mxu0 %v617
    %1180 = vmatpush.bf16.msra.mxu0 %v614
    %1181 = vmatpush.bf16.msra.mxu0 %v611
    %1182 = vmatpush.bf16.msra.mxu0 %v608
    %1183 = vmatpush.bf16.msra.mxu0 %v605
    %1184 = vmatpush.bf16.msra.mxu0 %v602
    %1185 = vmatmul.bf16.gmra.mxu0 %v1162
    %v1186 = vpop.f32.mrf.mxu0
    %v1187 = vadd.f32 %v651, %v1186
    %v1188 = vpop.f32.mrf.mxu0
    %1189 = vdwg.mxu0
    %1190 = vmatpush.bf16.msra.mxu0 %v624
    %1191 = vmatpush.bf16.msra.mxu0 %v621
    %1192 = vmatpush.bf16.msra.mxu0 %v618
    %1193 = vmatpush.bf16.msra.mxu0 %v615
    %1194 = vmatpush.bf16.msra.mxu0 %v612
    %1195 = vmatpush.bf16.msra.mxu0 %v609
    %1196 = vmatpush.bf16.msra.mxu0 %v606
    %1197 = vmatpush.bf16.msra.mxu0 %v603
    %1198 = vmatmul.bf16.gmra.mxu0 %v1162
    %v1199 = vpop.f32.mrf.mxu0
    %v1200 = vadd.f32 %v652, %v1199
    %v1201 = vpop.f32.mrf.mxu0
    %1202 = vdwg.mxu0
    %v1204 = vrot.slane %v1174, 3
    %v1206 = vadd.f32 %v459, %v1204
    %v1207 = vxor.u32 %v1206, 2147483648
    %v1208 = vmul.f32 %v1207, 1.442695
    %v1209 = vpow.pop %v1208
    %v1210 = vadd.f32 %v1209, 1.0
    %v1211 = vrcp.pop %v1210
    %v1212 = vmul.f32 %v1210, %v1211
    %v1213 = vsub.f32 1.0, %v1212
    %v1214 = vmul.f32 %v1211, %v1213
    %v1215 = vadd.f32 %v1211, %v1214
    %vm1216 = vweird.f32 %v1210
    %vm1217 = vweird.f32 %v1211
    %vm1218 = vmor %vm1216, %vm1217
    %v1219 = vsel %vm1218, %v1211, %v1215
    %v1220 = vand.u32 2147483647, %v1210
    %vm1221 = vcmp.eq.f32.partialorder %v1220, 8.507059e+37
    %v1222 = vand.u32 %v1210, 2147483648
    %v1223 = vor.u32 1.1754944e-38, %v1222
    %v1224 = vsel %vm1221, %v1223, %v1219
    %v1225 = vmul.f32 1.0, %v1224
    %v1227 = vrot.slane %v1187, 3
    %v1229 = vadd.f32 %v472, %v1227
    %v1230 = vxor.u32 %v1229, 2147483648
    %v1231 = vmul.f32 %v1230, 1.442695
    %v1232 = vpow.pop %v1231
    %v1233 = vadd.f32 %v1232, 1.0
    %v1234 = vrcp.pop %v1233
    %v1235 = vmul.f32 %v1233, %v1234
    %v1236 = vsub.f32 1.0, %v1235
    %v1237 = vmul.f32 %v1234, %v1236
    %v1238 = vadd.f32 %v1234, %v1237
    %vm1239 = vweird.f32 %v1233
    %vm1240 = vweird.f32 %v1234
    %vm1241 = vmor %vm1239, %vm1240
    %v1242 = vsel %vm1241, %v1234, %v1238
    %v1243 = vand.u32 2147483647, %v1233
    %vm1244 = vcmp.eq.f32.partialorder %v1243, 8.507059e+37
    %v1245 = vand.u32 %v1233, 2147483648
    %v1246 = vor.u32 1.1754944e-38, %v1245
    %v1247 = vsel %vm1244, %v1246, %v1242
    %v1248 = vmul.f32 1.0, %v1247
    %v1250 = vrot.slane %v1200, 3
    %v1252 = vmul.f32 %v1225, %v1250
    %v1253 = vadd.f32 %v485, %v1252
    %v1254 = vtanh.pop %v1253
    %v1255 = vsub.f32 1.0, %v1248
    %v1256 = vmul.f32 %v1255, %v1254
    %v1258 = vrot.slane %v1157, 7
    %v1260 = vmul.f32 %v1248, %v1258
    %v1261 = vadd.f32 %v1256, %v1260
    %v1262 = vperm.slane %v1261, 5
    %v1263 = vsel %vm262, %v1262, %v1159
    %v1264 = vpack.c.bf16 %v1261, %v1261
    %v1266 = vshrl.u32 %v1264, 16
    %v1268 = vrot.slane %v1266, 2
    %1270 = vmatpush.bf16.msra.mxu0 %v622
    %1271 = vmatpush.bf16.msra.mxu0 %v619
    %1272 = vmatpush.bf16.msra.mxu0 %v616
    %1273 = vmatpush.bf16.msra.mxu0 %v613
    %1274 = vmatpush.bf16.msra.mxu0 %v610
    %1275 = vmatpush.bf16.msra.mxu0 %v607
    %1276 = vmatpush.bf16.msra.mxu0 %v604
    %1277 = vmatpush.bf16.msra.mxu0 %v601
    %1278 = vmatmul.bf16.gmra.mxu0 %v1268
    %v1279 = vpop.f32.mrf.mxu0
    %v1280 = vadd.f32 %v650, %v1279
    %v1281 = vpop.f32.mrf.mxu0
    %1282 = vdwg.mxu0
    %1283 = vmatpush.bf16.msra.mxu0 %v623
    %1284 = vmatpush.bf16.msra.mxu0 %v620
    %1285 = vmatpush.bf16.msra.mxu0 %v617
    %1286 = vmatpush.bf16.msra.mxu0 %v614
    %1287 = vmatpush.bf16.msra.mxu0 %v611
    %1288 = vmatpush.bf16.msra.mxu0 %v608
    %1289 = vmatpush.bf16.msra.mxu0 %v605
    %1290 = vmatpush.bf16.msra.mxu0 %v602
    %1291 = vmatmul.bf16.gmra.mxu0 %v1268
    %v1292 = vpop.f32.mrf.mxu0
    %v1293 = vadd.f32 %v651, %v1292
    %v1294 = vpop.f32.mrf.mxu0
    %1295 = vdwg.mxu0
    %1296 = vmatpush.bf16.msra.mxu0 %v624
    %1297 = vmatpush.bf16.msra.mxu0 %v621
    %1298 = vmatpush.bf16.msra.mxu0 %v618
    %1299 = vmatpush.bf16.msra.mxu0 %v615
    %1300 = vmatpush.bf16.msra.mxu0 %v612
    %1301 = vmatpush.bf16.msra.mxu0 %v609
    %1302 = vmatpush.bf16.msra.mxu0 %v606
    %1303 = vmatpush.bf16.msra.mxu0 %v603
    %1304 = vmatmul.bf16.gmra.mxu0 %v1268
    %v1305 = vpop.f32.mrf.mxu0
    %v1306 = vadd.f32 %v652, %v1305
    %v1307 = vpop.f32.mrf.mxu0
    %1308 = vdwg.mxu0
    %v1310 = vrot.slane %v1280, 2
    %v1312 = vadd.f32 %v459, %v1310
    %v1313 = vxor.u32 %v1312, 2147483648
    %v1314 = vmul.f32 %v1313, 1.442695
    %v1315 = vpow.pop %v1314
    %v1316 = vadd.f32 %v1315, 1.0
    %v1317 = vrcp.pop %v1316
    %v1318 = vmul.f32 %v1316, %v1317
    %v1319 = vsub.f32 1.0, %v1318
    %v1320 = vmul.f32 %v1317, %v1319
    %v1321 = vadd.f32 %v1317, %v1320
    %vm1322 = vweird.f32 %v1316
    %vm1323 = vweird.f32 %v1317
    %vm1324 = vmor %vm1322, %vm1323
    %v1325 = vsel %vm1324, %v1317, %v1321
    %v1326 = vand.u32 2147483647, %v1316
    %vm1327 = vcmp.eq.f32.partialorder %v1326, 8.507059e+37
    %v1328 = vand.u32 %v1316, 2147483648
    %v1329 = vor.u32 1.1754944e-38, %v1328
    %v1330 = vsel %vm1327, %v1329, %v1325
    %v1331 = vmul.f32 1.0, %v1330
    %v1333 = vrot.slane %v1293, 2
    %v1335 = vadd.f32 %v472, %v1333
    %v1336 = vxor.u32 %v1335, 2147483648
    %v1337 = vmul.f32 %v1336, 1.442695
    %v1338 = vpow.pop %v1337
    %v1339 = vadd.f32 %v1338, 1.0
    %v1340 = vrcp.pop %v1339
    %v1341 = vmul.f32 %v1339, %v1340
    %v1342 = vsub.f32 1.0, %v1341
    %v1343 = vmul.f32 %v1340, %v1342
    %v1344 = vadd.f32 %v1340, %v1343
    %vm1345 = vweird.f32 %v1339
    %vm1346 = vweird.f32 %v1340
    %vm1347 = vmor %vm1345, %vm1346
    %v1348 = vsel %vm1347, %v1340, %v1344
    %v1349 = vand.u32 2147483647, %v1339
    %vm1350 = vcmp.eq.f32.partialorder %v1349, 8.507059e+37
    %v1351 = vand.u32 %v1339, 2147483648
    %v1352 = vor.u32 1.1754944e-38, %v1351
    %v1353 = vsel %vm1350, %v1352, %v1348
    %v1354 = vmul.f32 1.0, %v1353
    %v1356 = vrot.slane %v1306, 2
    %v1358 = vmul.f32 %v1331, %v1356
    %v1359 = vadd.f32 %v485, %v1358
    %v1360 = vtanh.pop %v1359
    %v1361 = vsub.f32 1.0, %v1354
    %v1362 = vmul.f32 %v1361, %v1360
    %v1364 = vrot.slane %v1261, 7
    %v1366 = vmul.f32 %v1354, %v1364
    %v1367 = vadd.f32 %v1362, %v1366
    %v1368 = vperm.slane %v1367, 6
    %v1369 = vsel %vm268, %v1368, %v1263
    %v1370 = vpack.c.bf16 %v1367, %v1367
    %v1372 = vrot.slane %v1370, 3
    %1374 = vmatpush.bf16.msra.mxu0 %v622
    %1375 = vmatpush.bf16.msra.mxu0 %v619
    %1376 = vmatpush.bf16.msra.mxu0 %v616
    %1377 = vmatpush.bf16.msra.mxu0 %v613
    %1378 = vmatpush.bf16.msra.mxu0 %v610
    %1379 = vmatpush.bf16.msra.mxu0 %v607
    %1380 = vmatpush.bf16.msra.mxu0 %v604
    %1381 = vmatpush.bf16.msra.mxu0 %v601
    %1382 = vmatmul.bf16.gmra.mxu0 %v1372
    %v1383 = vpop.f32.mrf.mxu0
    %v1384 = vadd.f32 %v650, %v1383
    %v1385 = vpop.f32.mrf.mxu0
    %1386 = vdwg.mxu0
    %1387 = vmatpush.bf16.msra.mxu0 %v623
    %1388 = vmatpush.bf16.msra.mxu0 %v620
    %1389 = vmatpush.bf16.msra.mxu0 %v617
    %1390 = vmatpush.bf16.msra.mxu0 %v614
    %1391 = vmatpush.bf16.msra.mxu0 %v611
    %1392 = vmatpush.bf16.msra.mxu0 %v608
    %1393 = vmatpush.bf16.msra.mxu0 %v605
    %1394 = vmatpush.bf16.msra.mxu0 %v602
    %1395 = vmatmul.bf16.gmra.mxu0 %v1372
    %v1396 = vpop.f32.mrf.mxu0
    %v1397 = vadd.f32 %v651, %v1396
    %v1398 = vpop.f32.mrf.mxu0
    %1399 = vdwg.mxu0
    %1400 = vmatpush.bf16.msra.mxu0 %v624
    %1401 = vmatpush.bf16.msra.mxu0 %v621
    %1402 = vmatpush.bf16.msra.mxu0 %v618
    %1403 = vmatpush.bf16.msra.mxu0 %v615
    %1404 = vmatpush.bf16.msra.mxu0 %v612
    %1405 = vmatpush.bf16.msra.mxu0 %v609
    %1406 = vmatpush.bf16.msra.mxu0 %v606
    %1407 = vmatpush.bf16.msra.mxu0 %v603
    %1408 = vmatmul.bf16.gmra.mxu0 %v1372
    %v1409 = vpop.f32.mrf.mxu0
    %v1410 = vadd.f32 %v652, %v1409
    %v1411 = vpop.f32.mrf.mxu0
    %1412 = vdwg.mxu0
    %v1414 = vrot.slane %v1384, 1
    %v1416 = vadd.f32 %v459, %v1414
    %v1417 = vxor.u32 %v1416, 2147483648
    %v1418 = vmul.f32 %v1417, 1.442695
    %v1419 = vpow.pop %v1418
    %v1420 = vadd.f32 %v1419, 1.0
    %v1421 = vrcp.pop %v1420
    %v1422 = vmul.f32 %v1420, %v1421
    %v1423 = vsub.f32 1.0, %v1422
    %v1424 = vmul.f32 %v1421, %v1423
    %v1425 = vadd.f32 %v1421, %v1424
    %vm1426 = vweird.f32 %v1420
    %vm1427 = vweird.f32 %v1421
    %vm1428 = vmor %vm1426, %vm1427
    %v1429 = vsel %vm1428, %v1421, %v1425
    %v1430 = vand.u32 2147483647, %v1420
    %vm1431 = vcmp.eq.f32.partialorder %v1430, 8.507059e+37
    %v1432 = vand.u32 %v1420, 2147483648
    %v1433 = vor.u32 1.1754944e-38, %v1432
    %v1434 = vsel %vm1431, %v1433, %v1429
    %v1435 = vmul.f32 1.0, %v1434
    %v1437 = vrot.slane %v1397, 1
    %v1439 = vadd.f32 %v472, %v1437
    %v1440 = vxor.u32 %v1439, 2147483648
    %v1441 = vmul.f32 %v1440, 1.442695
    %v1442 = vpow.pop %v1441
    %v1443 = vadd.f32 %v1442, 1.0
    %v1444 = vrcp.pop %v1443
    %v1445 = vmul.f32 %v1443, %v1444
    %v1446 = vsub.f32 1.0, %v1445
    %v1447 = vmul.f32 %v1444, %v1446
    %v1448 = vadd.f32 %v1444, %v1447
    %vm1449 = vweird.f32 %v1443
    %vm1450 = vweird.f32 %v1444
    %vm1451 = vmor %vm1449, %vm1450
    %v1452 = vsel %vm1451, %v1444, %v1448
    %v1453 = vand.u32 2147483647, %v1443
    %vm1454 = vcmp.eq.f32.partialorder %v1453, 8.507059e+37
    %v1455 = vand.u32 %v1443, 2147483648
    %v1456 = vor.u32 1.1754944e-38, %v1455
    %v1457 = vsel %vm1454, %v1456, %v1452
    %v1458 = vmul.f32 1.0, %v1457
    %v1460 = vrot.slane %v1410, 1
    %v1462 = vmul.f32 %v1435, %v1460
    %v1463 = vadd.f32 %v485, %v1462
    %v1464 = vtanh.pop %v1463
    %v1465 = vsub.f32 1.0, %v1458
    %v1466 = vmul.f32 %v1465, %v1464
    %v1468 = vrot.slane %v1367, 7
    %v1470 = vmul.f32 %v1458, %v1468
    %v1471 = vadd.f32 %v1466, %v1470
    %v1472 = vperm.slane %v1471, 7
    %v1473 = vsel %vm274, %v1472, %v1369
    %v1474 = vpack.c.bf16 %v1473, %v1473
    %v1475 = vld [vmem:[#allocation16] sm:$0xf]
    %v1476 = vld [vmem:[#allocation16 + $0x4] sm:$0xf]
    %v1477 = vld [vmem:[#allocation16 + $0x8] sm:$0xf]
    %v1478 = vld [vmem:[#allocation16 + $0xc] sm:$0xf]
    %v1479 = vld [vmem:[#allocation16 + $0x10] sm:$0xf]
    %v1480 = vld [vmem:[#allocation16 + $0x14] sm:$0xf]
    %v1481 = vld [vmem:[#allocation16 + $0x18] sm:$0xf]
    %v1482 = vld [vmem:[#allocation16 + $0x1c] sm:$0xf]
    %v1483 = vld [vmem:[#allocation16 + $0x20] sm:$0xf]
    %v1484 = vld [vmem:[#allocation16 + $0x24] sm:$0xf]
    %v1485 = vld [vmem:[#allocation16 + $0x28] sm:$0xf]
    %v1486 = vld [vmem:[#allocation16 + $0x2c] sm:$0xf]
    %v1487 = vld [vmem:[#allocation16 + $0x30] sm:$0xf]
    %v1488 = vld [vmem:[#allocation16 + $0x34] sm:$0xf]
    %v1489 = vld [vmem:[#allocation16 + $0x38] sm:$0xf]
    %v1490 = vld [vmem:[#allocation16 + $0x3c] sm:$0xf]
    %v1507 = vunpack.c.l.b16 %v1475
    %v1508 = vunpack.c.l.b16 %v1476
    %v1509 = vunpack.c.l.b16 %v1477
    %v1510 = vunpack.c.l.b16 %v1478
    %v1511 = vunpack.c.l.b16 %v1479
    %v1512 = vunpack.c.l.b16 %v1480
    %v1513 = vunpack.c.l.b16 %v1481
    %v1514 = vunpack.c.l.b16 %v1482
    %v1515 = vunpack.c.l.b16 %v1483
    %v1516 = vunpack.c.l.b16 %v1484
    %v1517 = vunpack.c.l.b16 %v1485
    %v1518 = vunpack.c.l.b16 %v1486
    %v1519 = vunpack.c.l.b16 %v1487
    %v1520 = vunpack.c.l.b16 %v1488
    %v1521 = vunpack.c.l.b16 %v1489
    %v1522 = vunpack.c.l.b16 %v1490
    %v1523 = vpack.c.b16 %v1508, %v1507
    %v1524 = vpack.c.b16 %v1510, %v1509
    %v1525 = vpack.c.b16 %v1512, %v1511
    %v1526 = vpack.c.b16 %v1514, %v1513
    %v1527 = vpack.c.b16 %v1516, %v1515
    %v1528 = vpack.c.b16 %v1518, %v1517
    %v1529 = vpack.c.b16 %v1520, %v1519
    %v1530 = vpack.c.b16 %v1522, %v1521
    %1539 = vmatpush.bf16.msra.mxu0 %v1530
    %1540 = vmatpush.bf16.msra.mxu0 %v1529
    %1541 = vmatpush.bf16.msra.mxu0 %v1528
    %1542 = vmatpush.bf16.msra.mxu0 %v1527
    %1543 = vmatpush.bf16.msra.mxu0 %v1526
    %1544 = vmatpush.bf16.msra.mxu0 %v1525
    %1545 = vmatpush.bf16.msra.mxu0 %v1524
    %1546 = vmatpush.bf16.msra.mxu0 %v1523
    %1547 = vmatmul.bf16.gmra.mxu0 %v1474
    %v1548 = vpop.f32.mrf.mxu0
    %v1549 = vadd.f32 0.0, %v1548
    %v1550 = vpop.f32.mrf.mxu0
    %1551 = vdwg.mxu0
    %v1552 = vld [vmem:[#allocation12] sm:$0x7]
    %v1553 = vld [vmem:[#allocation13] sm:$0x7]
    %v1554 = vld [vmem:[#allocation18] sm:$0x1]
    %v1555 = vld [vmem:[#allocation21] sm:$0x1]
    %vm1556 = vcmp.eq.s32.totalorder %v229, 1
    %v1557 = vsel %vm1556, 1, 0
    %v1558 = vcvt.s32.f32 %v1557
    %v1559 = vpack.c.bf16 %v1558, %v1558
    %v1560 = vld [vmem:[#allocation9] sm:$0xff]
    %v1561 = vld [vmem:[#allocation9 + $0x8] sm:$0xf]
    %v1562 = vld [vmem:[#allocation9 + $0xc] sm:$0xff]
    %v1563 = vld [vmem:[#allocation9 + $0x14] sm:$0xf]
    %v1564 = vld [vmem:[#allocation9 + $0x18] sm:$0xff]
    %v1565 = vld [vmem:[#allocation9 + $0x20] sm:$0xf]
    %v1566 = vld [vmem:[#allocation9 + $0x24] sm:$0xff]
    %v1567 = vld [vmem:[#allocation9 + $0x2c] sm:$0xf]
    %v1568 = vld [vmem:[#allocation9 + $0x30] sm:$0xff]
    %v1569 = vld [vmem:[#allocation9 + $0x38] sm:$0xf]
    %v1570 = vld [vmem:[#allocation9 + $0x3c] sm:$0xff]
    %v1571 = vld [vmem:[#allocation9 + $0x44] sm:$0xf]
    %v1572 = vld [vmem:[#allocation9 + $0x48] sm:$0xff]
    %v1573 = vld [vmem:[#allocation9 + $0x50] sm:$0xf]
    %v1574 = vld [vmem:[#allocation9 + $0x54] sm:$0xff]
    %v1575 = vld [vmem:[#allocation9 + $0x5c] sm:$0xf]
    %v1576 = vld [vmem:[#allocation9 + $0x60] sm:$0xff]
    %v1577 = vld [vmem:[#allocation9 + $0x68] sm:$0xf]
    %v1578 = vld [vmem:[#allocation9 + $0x6c] sm:$0xff]
    %v1579 = vld [vmem:[#allocation9 + $0x74] sm:$0xf]
    %v1580 = vld [vmem:[#allocation9 + $0x78] sm:$0xff]
    %v1581 = vld [vmem:[#allocation9 + $0x80] sm:$0xf]
    %v1582 = vld [vmem:[#allocation9 + $0x84] sm:$0xff]
    %v1583 = vld [vmem:[#allocation9 + $0x8c] sm:$0xf]
    %v1584 = vld [vmem:[#allocation9 + $0x90] sm:$0xff]
    %v1585 = vld [vmem:[#allocation9 + $0x98] sm:$0xf]
    %v1586 = vld [vmem:[#allocation9 + $0x9c] sm:$0xff]
    %v1587 = vld [vmem:[#allocation9 + $0xa4] sm:$0xf]
    %v1588 = vld [vmem:[#allocation9 + $0xa8] sm:$0xff]
    %v1589 = vld [vmem:[#allocation9 + $0xb0] sm:$0xf]
    %v1590 = vld [vmem:[#allocation9 + $0xb4] sm:$0xff]
    %v1591 = vld [vmem:[#allocation9 + $0xbc] sm:$0xf]
    %v1624 = vunpack.c.l.b16 %v1560
    %v1625 = vunpack.c.h.b16 %v1560
    %v1626 = vunpack.c.l.b16 %v1561
    %v1627 = vunpack.c.l.b16 %v1562
    %v1628 = vunpack.c.h.b16 %v1562
    %v1629 = vunpack.c.l.b16 %v1563
    %v1630 = vunpack.c.l.b16 %v1564
    %v1631 = vunpack.c.h.b16 %v1564
    %v1632 = vunpack.c.l.b16 %v1565
    %v1633 = vunpack.c.l.b16 %v1566
    %v1634 = vunpack.c.h.b16 %v1566
    %v1635 = vunpack.c.l.b16 %v1567
    %v1636 = vunpack.c.l.b16 %v1568
    %v1637 = vunpack.c.h.b16 %v1568
    %v1638 = vunpack.c.l.b16 %v1569
    %v1639 = vunpack.c.l.b16 %v1570
    %v1640 = vunpack.c.h.b16 %v1570
    %v1641 = vunpack.c.l.b16 %v1571
    %v1642 = vunpack.c.l.b16 %v1572
    %v1643 = vunpack.c.h.b16 %v1572
    %v1644 = vunpack.c.l.b16 %v1573
    %v1645 = vunpack.c.l.b16 %v1574
    %v1646 = vunpack.c.h.b16 %v1574
    %v1647 = vunpack.c.l.b16 %v1575
    %v1648 = vunpack.c.l.b16 %v1576
    %v1649 = vunpack.c.h.b16 %v1576
    %v1650 = vunpack.c.l.b16 %v1577
    %v1651 = vunpack.c.l.b16 %v1578
    %v1652 = vunpack.c.h.b16 %v1578
    %v1653 = vunpack.c.l.b16 %v1579
    %v1654 = vunpack.c.l.b16 %v1580
    %v1655 = vunpack.c.h.b16 %v1580
    %v1656 = vunpack.c.l.b16 %v1581
    %v1657 = vunpack.c.l.b16 %v1582
    %v1658 = vunpack.c.h.b16 %v1582
    %v1659 = vunpack.c.l.b16 %v1583
    %v1660 = vunpack.c.l.b16 %v1584
    %v1661 = vunpack.c.h.b16 %v1584
    %v1662 = vunpack.c.l.b16 %v1585
    %v1663 = vunpack.c.l.b16 %v1586
    %v1664 = vunpack.c.h.b16 %v1586
    %v1665 = vunpack.c.l.b16 %v1587
    %v1666 = vunpack.c.l.b16 %v1588
    %v1667 = vunpack.c.h.b16 %v1588
    %v1668 = vunpack.c.l.b16 %v1589
    %v1669 = vunpack.c.l.b16 %v1590
    %v1670 = vunpack.c.h.b16 %v1590
    %v1671 = vunpack.c.l.b16 %v1591
    %v1672 = vpack.c.b16 %v1627, %v1624
    %v1673 = vpack.c.b16 %v1628, %v1625
    %v1674 = vpack.c.b16 %v1629, %v1626
    %v1675 = vpack.c.b16 %v1633, %v1630
    %v1676 = vpack.c.b16 %v1634, %v1631
    %v1677 = vpack.c.b16 %v1635, %v1632
    %v1678 = vpack.c.b16 %v1639, %v1636
    %v1679 = vpack.c.b16 %v1640, %v1637
    %v1680 = vpack.c.b16 %v1641, %v1638
    %v1681 = vpack.c.b16 %v1645, %v1642
    %v1682 = vpack.c.b16 %v1646, %v1643
    %v1683 = vpack.c.b16 %v1647, %v1644
    %v1684 = vpack.c.b16 %v1651, %v1648
    %v1685 = vpack.c.b16 %v1652, %v1649
    %v1686 = vpack.c.b16 %v1653, %v1650
    %v1687 = vpack.c.b16 %v1657, %v1654
    %v1688 = vpack.c.b16 %v1658, %v1655
    %v1689 = vpack.c.b16 %v1659, %v1656
    %v1690 = vpack.c.b16 %v1663, %v1660
    %v1691 = vpack.c.b16 %v1664, %v1661
    %v1692 = vpack.c.b16 %v1665, %v1662
    %v1693 = vpack.c.b16 %v1669, %v1666
    %v1694 = vpack.c.b16 %v1670, %v1667
    %v1695 = vpack.c.b16 %v1671, %v1668
    %v1721 = vperm.slane %v1552, 0
    %v1722 = vperm.slane %v1552, 1
    %v1723 = vperm.slane %v1552, 2
    %1727 = vmatpush.bf16.msra.mxu0 %v1693
    %1728 = vmatpush.bf16.msra.mxu0 %v1690
    %1729 = vmatpush.bf16.msra.mxu0 %v1687
    %1730 = vmatpush.bf16.msra.mxu0 %v1684
    %1731 = vmatpush.bf16.msra.mxu0 %v1681
    %1732 = vmatpush.bf16.msra.mxu0 %v1678
    %1733 = vmatpush.bf16.msra.mxu0 %v1675
    %1734 = vmatpush.bf16.msra.mxu0 %v1672
    %1735 = vmatmul.bf16.gmra.mxu0 %v1559
    %v1736 = vpop.f32.mrf.mxu0
    %v1737 = vadd.f32 %v1721, %v1736
    %v1738 = vpop.f32.mrf.mxu0
    %1739 = vdwg.mxu0
    %1740 = vmatpush.bf16.msra.mxu0 %v1694
    %1741 = vmatpush.bf16.msra.mxu0 %v1691
    %1742 = vmatpush.bf16.msra.mxu0 %v1688
    %1743 = vmatpush.bf16.msra.mxu0 %v1685
    %1744 = vmatpush.bf16.msra.mxu0 %v1682
    %1745 = vmatpush.bf16.msra.mxu0 %v1679
    %1746 = vmatpush.bf16.msra.mxu0 %v1676
    %1747 = vmatpush.bf16.msra.mxu0 %v1673
    %1748 = vmatmul.bf16.gmra.mxu0 %v1559
    %v1749 = vpop.f32.mrf.mxu0
    %v1750 = vadd.f32 %v1722, %v1749
    %v1751 = vpop.f32.mrf.mxu0
    %1752 = vdwg.mxu0
    %1753 = vmatpush.bf16.msra.mxu0 %v1695
    %1754 = vmatpush.bf16.msra.mxu0 %v1692
    %1755 = vmatpush.bf16.msra.mxu0 %v1689
    %1756 = vmatpush.bf16.msra.mxu0 %v1686
    %1757 = vmatpush.bf16.msra.mxu0 %v1683
    %1758 = vmatpush.bf16.msra.mxu0 %v1680
    %1759 = vmatpush.bf16.msra.mxu0 %v1677
    %1760 = vmatpush.bf16.msra.mxu0 %v1674
    %1761 = vmatmul.bf16.gmra.mxu0 %v1559
    %v1762 = vpop.f32.mrf.mxu0
    %v1763 = vadd.f32 %v1723, %v1762
    %v1764 = vpop.f32.mrf.mxu0
    %1765 = vdwg.mxu0
    %v1766 = vpack.c.bf16 %v1471, %v1471
    %v1767 = vld [vmem:[#allocation10] sm:$0xff]
    %v1768 = vld [vmem:[#allocation10 + $0x8] sm:$0xf]
    %v1769 = vld [vmem:[#allocation10 + $0xc] sm:$0xff]
    %v1770 = vld [vmem:[#allocation10 + $0x14] sm:$0xf]
    %v1771 = vld [vmem:[#allocation10 + $0x18] sm:$0xff]
    %v1772 = vld [vmem:[#allocation10 + $0x20] sm:$0xf]
    %v1773 = vld [vmem:[#allocation10 + $0x24] sm:$0xff]
    %v1774 = vld [vmem:[#allocation10 + $0x2c] sm:$0xf]
    %v1775 = vld [vmem:[#allocation10 + $0x30] sm:$0xff]
    %v1776 = vld [vmem:[#allocation10 + $0x38] sm:$0xf]
    %v1777 = vld [vmem:[#allocation10 + $0x3c] sm:$0xff]
    %v1778 = vld [vmem:[#allocation10 + $0x44] sm:$0xf]
    %v1779 = vld [vmem:[#allocation10 + $0x48] sm:$0xff]
    %v1780 = vld [vmem:[#allocation10 + $0x50] sm:$0xf]
    %v1781 = vld [vmem:[#allocation10 + $0x54] sm:$0xff]
    %v1782 = vld [vmem:[#allocation10 + $0x5c] sm:$0xf]
    %v1783 = vld [vmem:[#allocation10 + $0x60] sm:$0xff]
    %v1784 = vld [vmem:[#allocation10 + $0x68] sm:$0xf]
    %v1785 = vld [vmem:[#allocation10 + $0x6c] sm:$0xff]
    %v1786 = vld [vmem:[#allocation10 + $0x74] sm:$0xf]
    %v1787 = vld [vmem:[#allocation10 + $0x78] sm:$0xff]
    %v1788 = vld [vmem:[#allocation10 + $0x80] sm:$0xf]
    %v1789 = vld [vmem:[#allocation10 + $0x84] sm:$0xff]
    %v1790 = vld [vmem:[#allocation10 + $0x8c] sm:$0xf]
    %v1791 = vld [vmem:[#allocation10 + $0x90] sm:$0xff]
    %v1792 = vld [vmem:[#allocation10 + $0x98] sm:$0xf]
    %v1793 = vld [vmem:[#allocation10 + $0x9c] sm:$0xff]
    %v1794 = vld [vmem:[#allocation10 + $0xa4] sm:$0xf]
    %v1795 = vld [vmem:[#allocation10 + $0xa8] sm:$0xff]
    %v1796 = vld [vmem:[#allocation10 + $0xb0] sm:$0xf]
    %v1797 = vld [vmem:[#allocation10 + $0xb4] sm:$0xff]
    %v1798 = vld [vmem:[#allocation10 + $0xbc] sm:$0xf]
    %v1800 = vshrl.u32 %v1766, 16
    %v1802 = vrot.slane %v1800, 3
    %v1836 = vunpack.c.l.b16 %v1767
    %v1837 = vunpack.c.h.b16 %v1767
    %v1838 = vunpack.c.l.b16 %v1768
    %v1839 = vunpack.c.l.b16 %v1769
    %v1840 = vunpack.c.h.b16 %v1769
    %v1841 = vunpack.c.l.b16 %v1770
    %v1842 = vunpack.c.l.b16 %v1771
    %v1843 = vunpack.c.h.b16 %v1771
    %v1844 = vunpack.c.l.b16 %v1772
    %v1845 = vunpack.c.l.b16 %v1773
    %v1846 = vunpack.c.h.b16 %v1773
    %v1847 = vunpack.c.l.b16 %v1774
    %v1848 = vunpack.c.l.b16 %v1775
    %v1849 = vunpack.c.h.b16 %v1775
    %v1850 = vunpack.c.l.b16 %v1776
    %v1851 = vunpack.c.l.b16 %v1777
    %v1852 = vunpack.c.h.b16 %v1777
    %v1853 = vunpack.c.l.b16 %v1778
    %v1854 = vunpack.c.l.b16 %v1779
    %v1855 = vunpack.c.h.b16 %v1779
    %v1856 = vunpack.c.l.b16 %v1780
    %v1857 = vunpack.c.l.b16 %v1781
    %v1858 = vunpack.c.h.b16 %v1781
    %v1859 = vunpack.c.l.b16 %v1782
    %v1860 = vunpack.c.l.b16 %v1783
    %v1861 = vunpack.c.h.b16 %v1783
    %v1862 = vunpack.c.l.b16 %v1784
    %v1863 = vunpack.c.l.b16 %v1785
    %v1864 = vunpack.c.h.b16 %v1785
    %v1865 = vunpack.c.l.b16 %v1786
    %v1866 = vunpack.c.l.b16 %v1787
    %v1867 = vunpack.c.h.b16 %v1787
    %v1868 = vunpack.c.l.b16 %v1788
    %v1869 = vunpack.c.l.b16 %v1789
    %v1870 = vunpack.c.h.b16 %v1789
    %v1871 = vunpack.c.l.b16 %v1790
    %v1872 = vunpack.c.l.b16 %v1791
    %v1873 = vunpack.c.h.b16 %v1791
    %v1874 = vunpack.c.l.b16 %v1792
    %v1875 = vunpack.c.l.b16 %v1793
    %v1876 = vunpack.c.h.b16 %v1793
    %v1877 = vunpack.c.l.b16 %v1794
    %v1878 = vunpack.c.l.b16 %v1795
    %v1879 = vunpack.c.h.b16 %v1795
    %v1880 = vunpack.c.l.b16 %v1796
    %v1881 = vunpack.c.l.b16 %v1797
    %v1882 = vunpack.c.h.b16 %v1797
    %v1883 = vunpack.c.l.b16 %v1798
    %v1884 = vpack.c.b16 %v1839, %v1836
    %v1885 = vpack.c.b16 %v1840, %v1837
    %v1886 = vpack.c.b16 %v1841, %v1838
    %v1887 = vpack.c.b16 %v1845, %v1842
    %v1888 = vpack.c.b16 %v1846, %v1843
    %v1889 = vpack.c.b16 %v1847, %v1844
    %v1890 = vpack.c.b16 %v1851, %v1848
    %v1891 = vpack.c.b16 %v1852, %v1849
    %v1892 = vpack.c.b16 %v1853, %v1850
    %v1893 = vpack.c.b16 %v1857, %v1854
    %v1894 = vpack.c.b16 %v1858, %v1855
    %v1895 = vpack.c.b16 %v1859, %v1856
    %v1896 = vpack.c.b16 %v1863, %v1860
    %v1897 = vpack.c.b16 %v1864, %v1861
    %v1898 = vpack.c.b16 %v1865, %v1862
    %v1899 = vpack.c.b16 %v1869, %v1866
    %v1900 = vpack.c.b16 %v1870, %v1867
    %v1901 = vpack.c.b16 %v1871, %v1868
    %v1902 = vpack.c.b16 %v1875, %v1872
    %v1903 = vpack.c.b16 %v1876, %v1873
    %v1904 = vpack.c.b16 %v1877, %v1874
    %v1905 = vpack.c.b16 %v1881, %v1878
    %v1906 = vpack.c.b16 %v1882, %v1879
    %v1907 = vpack.c.b16 %v1883, %v1880
    %v1933 = vperm.slane %v1553, 0
    %v1934 = vperm.slane %v1553, 1
    %v1935 = vperm.slane %v1553, 2
    %1939 = vmatpush.bf16.msra.mxu0 %v1905
    %1940 = vmatpush.bf16.msra.mxu0 %v1902
    %1941 = vmatpush.bf16.msra.mxu0 %v1899
    %1942 = vmatpush.bf16.msra.mxu0 %v1896
    %1943 = vmatpush.bf16.msra.mxu0 %v1893
    %1944 = vmatpush.bf16.msra.mxu0 %v1890
    %1945 = vmatpush.bf16.msra.mxu0 %v1887
    %1946 = vmatpush.bf16.msra.mxu0 %v1884
    %1947 = vmatmul.bf16.gmra.mxu0 %v1802
    %v1948 = vpop.f32.mrf.mxu0
    %v1949 = vadd.f32 %v1933, %v1948
    %v1950 = vpop.f32.mrf.mxu0
    %1951 = vdwg.mxu0
    %1952 = vmatpush.bf16.msra.mxu0 %v1906
    %1953 = vmatpush.bf16.msra.mxu0 %v1903
    %1954 = vmatpush.bf16.msra.mxu0 %v1900
    %1955 = vmatpush.bf16.msra.mxu0 %v1897
    %1956 = vmatpush.bf16.msra.mxu0 %v1894
    %1957 = vmatpush.bf16.msra.mxu0 %v1891
    %1958 = vmatpush.bf16.msra.mxu0 %v1888
    %1959 = vmatpush.bf16.msra.mxu0 %v1885
    %1960 = vmatmul.bf16.gmra.mxu0 %v1802
    %v1961 = vpop.f32.mrf.mxu0
    %v1962 = vadd.f32 %v1934, %v1961
    %v1963 = vpop.f32.mrf.mxu0
    %1964 = vdwg.mxu0
    %1965 = vmatpush.bf16.msra.mxu0 %v1907
    %1966 = vmatpush.bf16.msra.mxu0 %v1904
    %1967 = vmatpush.bf16.msra.mxu0 %v1901
    %1968 = vmatpush.bf16.msra.mxu0 %v1898
    %1969 = vmatpush.bf16.msra.mxu0 %v1895
    %1970 = vmatpush.bf16.msra.mxu0 %v1892
    %1971 = vmatpush.bf16.msra.mxu0 %v1889
    %1972 = vmatpush.bf16.msra.mxu0 %v1886
    %1973 = vmatmul.bf16.gmra.mxu0 %v1802
    %v1974 = vpop.f32.mrf.mxu0
    %v1975 = vadd.f32 %v1935, %v1974
    %v1976 = vpop.f32.mrf.mxu0
    %1977 = vdwg.mxu0
    %v1978 = vadd.f32 %v1737, %v1949
    %v1979 = vxor.u32 %v1978, 2147483648
    %v1980 = vmul.f32 %v1979, 1.442695
    %v1981 = vpow.pop %v1980
    %v1982 = vadd.f32 %v1981, 1.0
    %v1983 = vrcp.pop %v1982
    %v1984 = vmul.f32 %v1982, %v1983
    %v1985 = vsub.f32 1.0, %v1984
    %v1986 = vmul.f32 %v1983, %v1985
    %v1987 = vadd.f32 %v1983, %v1986
    %vm1988 = vweird.f32 %v1982
    %vm1989 = vweird.f32 %v1983
    %vm1990 = vmor %vm1988, %vm1989
    %v1991 = vsel %vm1990, %v1983, %v1987
    %v1992 = vand.u32 2147483647, %v1982
    %vm1993 = vcmp.eq.f32.partialorder %v1992, 8.507059e+37
    %v1994 = vand.u32 %v1982, 2147483648
    %v1995 = vor.u32 1.1754944e-38, %v1994
    %v1996 = vsel %vm1993, %v1995, %v1991
    %v1997 = vmul.f32 1.0, %v1996
    %v1998 = vadd.f32 %v1750, %v1962
    %v1999 = vxor.u32 %v1998, 2147483648
    %v2000 = vmul.f32 %v1999, 1.442695
    %v2001 = vpow.pop %v2000
    %v2002 = vadd.f32 %v2001, 1.0
    %v2003 = vrcp.pop %v2002
    %v2004 = vmul.f32 %v2002, %v2003
    %v2005 = vsub.f32 1.0, %v2004
    %v2006 = vmul.f32 %v2003, %v2005
    %v2007 = vadd.f32 %v2003, %v2006
    %vm2008 = vweird.f32 %v2002
    %vm2009 = vweird.f32 %v2003
    %vm2010 = vmor %vm2008, %vm2009
    %v2011 = vsel %vm2010, %v2003, %v2007
    %v2012 = vand.u32 2147483647, %v2002
    %vm2013 = vcmp.eq.f32.partialorder %v2012, 8.507059e+37
    %v2014 = vand.u32 %v2002, 2147483648
    %v2015 = vor.u32 1.1754944e-38, %v2014
    %v2016 = vsel %vm2013, %v2015, %v2011
    %v2017 = vmul.f32 1.0, %v2016
    %v2018 = vmul.f32 %v1997, %v1975
    %v2019 = vadd.f32 %v1763, %v2018
    %v2020 = vtanh.pop %v2019
    %v2021 = vsub.f32 1.0, %v2017
    %v2022 = vmul.f32 %v2021, %v2020
    %v2024 = vrot.slane %v1471, 7
    %v2026 = vmul.f32 %v2017, %v2024
    %v2027 = vadd.f32 %v2022, %v2026
    %2028 = vmatpush.xpose.msra.mxu0 0.0
    %2029 = vmatpush.xpose.msra.mxu0 0.0
    %2030 = vmatpush.xpose.msra.mxu0 0.0
    %2031 = vmatpush.xpose.msra.mxu0 0.0
    %2032 = vmatpush.xpose.msra.mxu0 0.0
    %2033 = vmatpush.xpose.msra.mxu0 0.0
    %2034 = vmatpush.xpose.msra.mxu0 0.0
    %2035 = vmatpush.xpose.msra.mxu0 0.0
    %2036 = vmatpush.xpose.msra.mxu0 0.0
    %2037 = vmatpush.xpose.msra.mxu0 0.0
    %2038 = vmatpush.xpose.msra.mxu0 0.0
    %2039 = vmatpush.xpose.msra.mxu0 0.0
    %2040 = vmatpush.xpose.msra.mxu0 0.0
    %2041 = vmatpush.xpose.msra.mxu0 0.0
    %2042 = vmatpush.xpose.msra.mxu0 0.0
    %2043 = vmatpush.xpose.msra.mxu0 %v1473
    %2044 = vmatmul.f32.gmra.mxu0 %v2027
    %v2045 = vpop.f32.mrf.mxu0
    %v2046 = vadd.f32 0.0, %v2045
    %2047 = vdwg.mxu0
    %vm2048 = vcmask 57344
    %v2049 = vsel %vm2048, %v2046, -inf
    %2050 = vmax.xlane.f32.xlu0 %v2049
    %v2051 = vpop.xlane.xlu0 %2050
    %v2052 = vsub.f32 %v2046, %v2051
    %v2053 = vmul.f32 %v2052, 1.442695
    %v2054 = vpow.pop %v2053
    %v2055 = vsel %vm2048, %v2054, 0.0
    %2056 = vadd.xlane.f32.xlu0 %v2055
    %v2057 = vpop.xlane.xlu0 %2056
    %v2058 = vrcp.pop %v2057
    %v2059 = vmul.f32 %v2054, %v2058
    %vm2060 = vcmask 64512
    %v2062 = vsel %vm2060, %v2059, 0
    %2064 = vmatpush.msra.mxu0 0.0
    %2065 = vmatpush.msra.mxu0 0.0
    %2066 = vmatpush.msra.mxu0 0.0
    %2067 = vmatpush.msra.mxu0 0.0
    %2068 = vmatpush.msra.mxu0 0.0
    %2069 = vmatpush.msra.mxu0 0.0
    %2070 = vmatpush.msra.mxu0 0.0
    %2071 = vmatpush.msra.mxu0 0.0
    %2072 = vmatpush.msra.mxu0 0.0
    %2073 = vmatpush.msra.mxu0 0.0
    %2074 = vmatpush.msra.mxu0 0.0
    %2075 = vmatpush.msra.mxu0 0.0
    %2076 = vmatpush.msra.mxu0 0.0
    %2077 = vmatpush.msra.mxu0 0.0
    %2078 = vmatpush.msra.mxu0 0.0
    %2079 = vmatpush.msra.mxu0 %v1549
    %2080 = vmatmul.f32.gmra.mxu0 %v2062
    %v2081 = vpop.f32.mrf.mxu0
    %v2082 = vadd.f32 0.0, %v2081
    %2083 = vdwg.mxu0
    %v2084 = vpack.c.bf16 %v2027, %v2027
    %v2085 = vld [vmem:[#allocation15] sm:$0xf]
    %v2086 = vld [vmem:[#allocation15 + $0x4] sm:$0xf]
    %v2087 = vld [vmem:[#allocation15 + $0x8] sm:$0xf]
    %v2088 = vld [vmem:[#allocation15 + $0xc] sm:$0xf]
    %v2089 = vld [vmem:[#allocation15 + $0x10] sm:$0xf]
    %v2090 = vld [vmem:[#allocation15 + $0x14] sm:$0xf]
    %v2091 = vld [vmem:[#allocation15 + $0x18] sm:$0xf]
    %v2092 = vld [vmem:[#allocation15 + $0x1c] sm:$0xf]
    %v2093 = vld [vmem:[#allocation15 + $0x20] sm:$0xf]
    %v2094 = vld [vmem:[#allocation15 + $0x24] sm:$0xf]
    %v2095 = vld [vmem:[#allocation15 + $0x28] sm:$0xf]
    %v2096 = vld [vmem:[#allocation15 + $0x2c] sm:$0xf]
    %v2097 = vld [vmem:[#allocation15 + $0x30] sm:$0xf]
    %v2098 = vld [vmem:[#allocation15 + $0x34] sm:$0xf]
    %v2099 = vld [vmem:[#allocation15 + $0x38] sm:$0xf]
    %v2100 = vld [vmem:[#allocation15 + $0x3c] sm:$0xf]
    %v2117 = vunpack.c.l.b16 %v2085
    %v2118 = vunpack.c.l.b16 %v2086
    %v2119 = vunpack.c.l.b16 %v2087
    %v2120 = vunpack.c.l.b16 %v2088
    %v2121 = vunpack.c.l.b16 %v2089
    %v2122 = vunpack.c.l.b16 %v2090
    %v2123 = vunpack.c.l.b16 %v2091
    %v2124 = vunpack.c.l.b16 %v2092
    %v2125 = vunpack.c.l.b16 %v2093
    %v2126 = vunpack.c.l.b16 %v2094
    %v2127 = vunpack.c.l.b16 %v2095
    %v2128 = vunpack.c.l.b16 %v2096
    %v2129 = vunpack.c.l.b16 %v2097
    %v2130 = vunpack.c.l.b16 %v2098
    %v2131 = vunpack.c.l.b16 %v2099
    %v2132 = vunpack.c.l.b16 %v2100
    %v2133 = vpack.c.b16 %v2118, %v2117
    %v2134 = vpack.c.b16 %v2120, %v2119
    %v2135 = vpack.c.b16 %v2122, %v2121
    %v2136 = vpack.c.b16 %v2124, %v2123
    %v2137 = vpack.c.b16 %v2126, %v2125
    %v2138 = vpack.c.b16 %v2128, %v2127
    %v2139 = vpack.c.b16 %v2130, %v2129
    %v2140 = vpack.c.b16 %v2132, %v2131
    %2149 = vmatpush.bf16.msra.mxu0 %v2140
    %2150 = vmatpush.bf16.msra.mxu0 %v2139
    %2151 = vmatpush.bf16.msra.mxu0 %v2138
    %2152 = vmatpush.bf16.msra.mxu0 %v2137
    %2153 = vmatpush.bf16.msra.mxu0 %v2136
    %2154 = vmatpush.bf16.msra.mxu0 %v2135
    %2155 = vmatpush.bf16.msra.mxu0 %v2134
    %2156 = vmatpush.bf16.msra.mxu0 %v2133
    %2157 = vmatmul.bf16.gmra.mxu0 %v2084
    %v2158 = vpop.f32.mrf.mxu0
    %v2159 = vadd.f32 %v2082, %v2158
    %v2160 = vpop.f32.mrf.mxu0
    %2161 = vdwg.mxu0
    %v2162 = vadd.f32 %v2159, %v1554
    %v2163 = vtanh.pop %v2162
    %v2164 = vpack.c.bf16 %v2163, %v2163
    %v2165 = vld [vmem:[#allocation19] sm:$0xf]
    %v2166 = vld [vmem:[#allocation19 + $0x4] sm:$0xf]
    %v2167 = vld [vmem:[#allocation19 + $0x8] sm:$0xf]
    %v2168 = vld [vmem:[#allocation19 + $0xc] sm:$0xf]
    %v2169 = vld [vmem:[#allocation19 + $0x10] sm:$0xf]
    %v2170 = vld [vmem:[#allocation19 + $0x14] sm:$0xf]
    %v2171 = vld [vmem:[#allocation19 + $0x18] sm:$0xf]
    %v2172 = vld [vmem:[#allocation19 + $0x1c] sm:$0xf]
    %v2173 = vld [vmem:[#allocation19 + $0x20] sm:$0xf]
    %v2174 = vld [vmem:[#allocation19 + $0x24] sm:$0xf]
    %v2175 = vld [vmem:[#allocation19 + $0x28] sm:$0xf]
    %v2176 = vld [vmem:[#allocation19 + $0x2c] sm:$0xf]
    %v2177 = vld [vmem:[#allocation19 + $0x30] sm:$0xf]
    %v2178 = vld [vmem:[#allocation19 + $0x34] sm:$0xf]
    %v2179 = vld [vmem:[#allocation19 + $0x38] sm:$0xf]
    %v2180 = vld [vmem:[#allocation19 + $0x3c] sm:$0xf]
    %v2197 = vunpack.c.l.b16 %v2165
    %v2198 = vunpack.c.l.b16 %v2166
    %v2199 = vunpack.c.l.b16 %v2167
    %v2200 = vunpack.c.l.b16 %v2168
    %v2201 = vunpack.c.l.b16 %v2169
    %v2202 = vunpack.c.l.b16 %v2170
    %v2203 = vunpack.c.l.b16 %v2171
    %v2204 = vunpack.c.l.b16 %v2172
    %v2205 = vunpack.c.l.b16 %v2173
    %v2206 = vunpack.c.l.b16 %v2174
    %v2207 = vunpack.c.l.b16 %v2175
    %v2208 = vunpack.c.l.b16 %v2176
    %v2209 = vunpack.c.l.b16 %v2177
    %v2210 = vunpack.c.l.b16 %v2178
    %v2211 = vunpack.c.l.b16 %v2179
    %v2212 = vunpack.c.l.b16 %v2180
    %v2213 = vpack.c.b16 %v2198, %v2197
    %v2214 = vpack.c.b16 %v2200, %v2199
    %v2215 = vpack.c.b16 %v2202, %v2201
    %v2216 = vpack.c.b16 %v2204, %v2203
    %v2217 = vpack.c.b16 %v2206, %v2205
    %v2218 = vpack.c.b16 %v2208, %v2207
    %v2219 = vpack.c.b16 %v2210, %v2209
    %v2220 = vpack.c.b16 %v2212, %v2211
    %2229 = vmatpush.bf16.msra.mxu0 %v2220
    %2230 = vmatpush.bf16.msra.mxu0 %v2219
    %2231 = vmatpush.bf16.msra.mxu0 %v2218
    %2232 = vmatpush.bf16.msra.mxu0 %v2217
    %2233 = vmatpush.bf16.msra.mxu0 %v2216
    %2234 = vmatpush.bf16.msra.mxu0 %v2215
    %2235 = vmatpush.bf16.msra.mxu0 %v2214
    %2236 = vmatpush.bf16.msra.mxu0 %v2213
    %2237 = vmatmul.bf16.gmra.mxu0 %v2164
    %v2238 = vpop.f32.mrf.mxu0
    %v2239 = vadd.f32 %v1555, %v2238
    %v2240 = vpop.f32.mrf.mxu0
    %2241 = vdwg.mxu0
    %vm2242 = vcmask 1040384
    %v2243 = vsel %vm2242, %v2239, -inf
    %2244 = vmax.xlane.f32.xlu0 %v2243
    %v2245 = vpop.xlane.xlu0 %2244
    %vm2246 = vcmp.ge.f32.partialorder %v2239, %v2245
    %v2247 = vsel %vm2246, %v229, 128
    %v2248 = vsel %vm2242, %v2247, 2147483647
    %v2249 = vand.u32 %v2248, 65535
    %v2250 = vshra.s32 %v2248, 16
    %v2251 = vcvt.s32.f32 %v2249
    %v2252 = vcvt.s32.f32 %v2250
    %2253 = vmin.xlane.f32.xlu0 %v2252
    %v2254 = vpop.xlane.xlu0 %2253
    %vm2255 = vcmp.eq.f32.partialorder %v2252, %v2254
    %v2256 = vsel %vm2255, %v2251, inf
    %2257 = vmin.xlane.f32.xlu0 %v2256
    %v2258 = vpop.xlane.xlu0 %2257
    %v2259 = vcvt.f32.s32 %v2258
    %v2260 = vcvt.f32.s32 %v2254
    %v2261 = vshll.u32 %v2260, 16
    %v2262 = vadd.s32 %v2261, %v2259
    %v2263 = vsub.f32 %v2239, %v2245
    %v2264 = vmul.f32 %v2263, 1.442695
    %v2265 = vpow.pop %v2264
    %v2266 = vsel %vm2242, %v2265, 0.0
    %2267 = vadd.xlane.f32.xlu0 %v2266
    %v2268 = vpop.xlane.xlu0 %2267
    %v2269 = vrcp.pop %v2268
    %v2270 = vmul.f32 %v2268, %v2269
    %v2271 = vsub.f32 1.0, %v2270
    %v2272 = vmul.f32 %v2269, %v2271
    %v2273 = vadd.f32 %v2269, %v2272
    %vm2274 = vweird.f32 %v2268
    %vm2275 = vweird.f32 %v2269
    %vm2276 = vmor %vm2274, %vm2275
    %v2277 = vsel %vm2276, %v2269, %v2273
    %v2278 = vand.u32 2147483647, %v2268
    %vm2279 = vcmp.eq.f32.partialorder %v2278, 8.507059e+37
    %v2280 = vand.u32 %v2268, 2147483648
    %v2281 = vor.u32 1.1754944e-38, %v2280
    %v2282 = vsel %vm2279, %v2281, %v2277
    %vm2283 = vcmp.eq.s32.totalorder %v229, 0
    %v2284 = vsel %vm2283, %v2262, 0
    %v2285 = vsel %vm2283, %v2282, 0.0
    %vm2286 = vcmp.eq.s32.totalorder %v2262, 2
    %v2287 = vsel %vm2286, 1, 0
    %vm2288 = vcmp.eq.s32.totalorder %v2287, 0
    %vm2289 = vcmp.eq.s32.totalorder %v229, %v2262
    %v2290 = vsel %vm2289, 1, 0
    %v2291 = vcvt.s32.f32 %v2290
    %v2292 = vpack.c.bf16 %v2291, %v2291
    %2293 = vmatpush.bf16.msra.mxu0 %v1693
    %2294 = vmatpush.bf16.msra.mxu0 %v1690
    %2295 = vmatpush.bf16.msra.mxu0 %v1687
    %2296 = vmatpush.bf16.msra.mxu0 %v1684
    %2297 = vmatpush.bf16.msra.mxu0 %v1681
    %2298 = vmatpush.bf16.msra.mxu0 %v1678
    %2299 = vmatpush.bf16.msra.mxu0 %v1675
    %2300 = vmatpush.bf16.msra.mxu0 %v1672
    %2301 = vmatmul.bf16.gmra.mxu0 %v2292
    %v2302 = vpop.f32.mrf.mxu0
    %v2303 = vadd.f32 %v1721, %v2302
    %v2304 = vpop.f32.mrf.mxu0
    %2305 = vdwg.mxu0
    %2306 = vmatpush.bf16.msra.mxu0 %v1694
    %2307 = vmatpush.bf16.msra.mxu0 %v1691
    %2308 = vmatpush.bf16.msra.mxu0 %v1688
    %2309 = vmatpush.bf16.msra.mxu0 %v1685
    %2310 = vmatpush.bf16.msra.mxu0 %v1682
    %2311 = vmatpush.bf16.msra.mxu0 %v1679
    %2312 = vmatpush.bf16.msra.mxu0 %v1676
    %2313 = vmatpush.bf16.msra.mxu0 %v1673
    %2314 = vmatmul.bf16.gmra.mxu0 %v2292
    %v2315 = vpop.f32.mrf.mxu0
    %v2316 = vadd.f32 %v1722, %v2315
    %v2317 = vpop.f32.mrf.mxu0
    %2318 = vdwg.mxu0
    %2319 = vmatpush.bf16.msra.mxu0 %v1695
    %2320 = vmatpush.bf16.msra.mxu0 %v1692
    %2321 = vmatpush.bf16.msra.mxu0 %v1689
    %2322 = vmatpush.bf16.msra.mxu0 %v1686
    %2323 = vmatpush.bf16.msra.mxu0 %v1683
    %2324 = vmatpush.bf16.msra.mxu0 %v1680
    %2325 = vmatpush.bf16.msra.mxu0 %v1677
    %2326 = vmatpush.bf16.msra.mxu0 %v1674
    %2327 = vmatmul.bf16.gmra.mxu0 %v2292
    %v2328 = vpop.f32.mrf.mxu0
    %v2329 = vadd.f32 %v1723, %v2328
    %v2330 = vpop.f32.mrf.mxu0
    %2331 = vdwg.mxu0
    %2332 = vmatpush.bf16.msra.mxu0 %v1905
    %2333 = vmatpush.bf16.msra.mxu0 %v1902
    %2334 = vmatpush.bf16.msra.mxu0 %v1899
    %2335 = vmatpush.bf16.msra.mxu0 %v1896
    %2336 = vmatpush.bf16.msra.mxu0 %v1893
    %2337 = vmatpush.bf16.msra.mxu0 %v1890
    %2338 = vmatpush.bf16.msra.mxu0 %v1887
    %2339 = vmatpush.bf16.msra.mxu0 %v1884
    %2340 = vmatmul.bf16.gmra.mxu0 %v2084
    %v2341 = vpop.f32.mrf.mxu0
    %v2342 = vadd.f32 %v1933, %v2341
    %v2343 = vpop.f32.mrf.mxu0
    %2344 = vdwg.mxu0
    %2345 = vmatpush.bf16.msra.mxu0 %v1906
    %2346 = vmatpush.bf16.msra.mxu0 %v1903
    %2347 = vmatpush.bf16.msra.mxu0 %v1900
    %2348 = vmatpush.bf16.msra.mxu0 %v1897
    %2349 = vmatpush.bf16.msra.mxu0 %v1894
    %2350 = vmatpush.bf16.msra.mxu0 %v1891
    %2351 = vmatpush.bf16.msra.mxu0 %v1888
    %2352 = vmatpush.bf16.msra.mxu0 %v1885
    %2353 = vmatmul.bf16.gmra.mxu0 %v2084
    %v2354 = vpop.f32.mrf.mxu0
    %v2355 = vadd.f32 %v1934, %v2354
    %v2356 = vpop.f32.mrf.mxu0
    %2357 = vdwg.mxu0
    %2358 = vmatpush.bf16.msra.mxu0 %v1907
    %2359 = vmatpush.bf16.msra.mxu0 %v1904
    %2360 = vmatpush.bf16.msra.mxu0 %v1901
    %2361 = vmatpush.bf16.msra.mxu0 %v1898
    %2362 = vmatpush.bf16.msra.mxu0 %v1895
    %2363 = vmatpush.bf16.msra.mxu0 %v1892
    %2364 = vmatpush.bf16.msra.mxu0 %v1889
    %2365 = vmatpush.bf16.msra.mxu0 %v1886
    %2366 = vmatmul.bf16.gmra.mxu0 %v2084
    %v2367 = vpop.f32.mrf.mxu0
    %v2368 = vadd.f32 %v1935, %v2367
    %v2369 = vpop.f32.mrf.mxu0
    %2370 = vdwg.mxu0
    %v2371 = vadd.f32 %v2303, %v2342
    %v2372 = vxor.u32 %v2371, 2147483648
    %v2373 = vmul.f32 %v2372, 1.442695
    %v2374 = vpow.pop %v2373
    %v2375 = vadd.f32 %v2374, 1.0
    %v2376 = vrcp.pop %v2375
    %v2377 = vmul.f32 %v2375, %v2376
    %v2378 = vsub.f32 1.0, %v2377
    %v2379 = vmul.f32 %v2376, %v2378
    %v2380 = vadd.f32 %v2376, %v2379
    %vm2381 = vweird.f32 %v2375
    %vm2382 = vweird.f32 %v2376
    %vm2383 = vmor %vm2381, %vm2382
    %v2384 = vsel %vm2383, %v2376, %v2380
    %v2385 = vand.u32 2147483647, %v2375
    %vm2386 = vcmp.eq.f32.partialorder %v2385, 8.507059e+37
    %v2387 = vand.u32 %v2375, 2147483648
    %v2388 = vor.u32 1.1754944e-38, %v2387
    %v2389 = vsel %vm2386, %v2388, %v2384
    %v2390 = vmul.f32 1.0, %v2389
    %v2391 = vadd.f32 %v2316, %v2355
    %v2392 = vxor.u32 %v2391, 2147483648
    %v2393 = vmul.f32 %v2392, 1.442695
    %v2394 = vpow.pop %v2393
    %v2395 = vadd.f32 %v2394, 1.0
    %v2396 = vrcp.pop %v2395
    %v2397 = vmul.f32 %v2395, %v2396
    %v2398 = vsub.f32 1.0, %v2397
    %v2399 = vmul.f32 %v2396, %v2398
    %v2400 = vadd.f32 %v2396, %v2399
    %vm2401 = vweird.f32 %v2395
    %vm2402 = vweird.f32 %v2396
    %vm2403 = vmor %vm2401, %vm2402
    %v2404 = vsel %vm2403, %v2396, %v2400
    %v2405 = vand.u32 2147483647, %v2395
    %vm2406 = vcmp.eq.f32.partialorder %v2405, 8.507059e+37
    %v2407 = vand.u32 %v2395, 2147483648
    %v2408 = vor.u32 1.1754944e-38, %v2407
    %v2409 = vsel %vm2406, %v2408, %v2404
    %v2410 = vmul.f32 1.0, %v2409
    %v2411 = vmul.f32 %v2390, %v2368
    %v2412 = vadd.f32 %v2329, %v2411
    %v2413 = vtanh.pop %v2412
    %v2414 = vsub.f32 1.0, %v2410
    %v2415 = vmul.f32 %v2414, %v2413
    %v2416 = vmul.f32 %v2410, %v2027
    %v2417 = vadd.f32 %v2415, %v2416
    %2418 = vmatpush.xpose.msra.mxu0 0.0
    %2419 = vmatpush.xpose.msra.mxu0 0.0
    %2420 = vmatpush.xpose.msra.mxu0 0.0
    %2421 = vmatpush.xpose.msra.mxu0 0.0
    %2422 = vmatpush.xpose.msra.mxu0 0.0
    %2423 = vmatpush.xpose.msra.mxu0 0.0
    %2424 = vmatpush.xpose.msra.mxu0 0.0
    %2425 = vmatpush.xpose.msra.mxu0 0.0
    %2426 = vmatpush.xpose.msra.mxu0 0.0
    %2427 = vmatpush.xpose.msra.mxu0 0.0
    %2428 = vmatpush.xpose.msra.mxu0 0.0
    %2429 = vmatpush.xpose.msra.mxu0 0.0
    %2430 = vmatpush.xpose.msra.mxu0 0.0
    %2431 = vmatpush.xpose.msra.mxu0 0.0
    %2432 = vmatpush.xpose.msra.mxu0 0.0
    %2433 = vmatpush.xpose.msra.mxu0 %v1473
    %2434 = vmatmul.f32.gmra.mxu0 %v2417
    %v2435 = vpop.f32.mrf.mxu0
    %v2436 = vadd.f32 0.0, %v2435
    %2437 = vdwg.mxu0
    %v2438 = vsel %vm2048, %v2436, -inf
    %2439 = vmax.xlane.f32.xlu0 %v2438
    %v2440 = vpop.xlane.xlu0 %2439
    %v2441 = vsub.f32 %v2436, %v2440
    %v2442 = vmul.f32 %v2441, 1.442695
    %v2443 = vpow.pop %v2442
    %v2444 = vsel %vm2048, %v2443, 0.0
    %2445 = vadd.xlane.f32.xlu0 %v2444
    %v2446 = vpop.xlane.xlu0 %2445
    %v2447 = vrcp.pop %v2446
    %v2448 = vmul.f32 %v2443, %v2447
    %v2450 = vsel %vm2060, %v2448, 0
    %2452 = vmatpush.msra.mxu0 0.0
    %2453 = vmatpush.msra.mxu0 0.0
    %2454 = vmatpush.msra.mxu0 0.0
    %2455 = vmatpush.msra.mxu0 0.0
    %2456 = vmatpush.msra.mxu0 0.0
    %2457 = vmatpush.msra.mxu0 0.0
    %2458 = vmatpush.msra.mxu0 0.0
    %2459 = vmatpush.msra.mxu0 0.0
    %2460 = vmatpush.msra.mxu0 0.0
    %2461 = vmatpush.msra.mxu0 0.0
    %2462 = vmatpush.msra.mxu0 0.0
    %2463 = vmatpush.msra.mxu0 0.0
    %2464 = vmatpush.msra.mxu0 0.0
    %2465 = vmatpush.msra.mxu0 0.0
    %2466 = vmatpush.msra.mxu0 0.0
    %2467 = vmatpush.msra.mxu0 %v1549
    %2468 = vmatmul.f32.gmra.mxu0 %v2450
    %v2469 = vpop.f32.mrf.mxu0
    %v2470 = vadd.f32 0.0, %v2469
    %2471 = vdwg.mxu0
    %v2472 = vpack.c.bf16 %v2417, %v2417
    %2473 = vmatpush.bf16.msra.mxu0 %v2140
    %2474 = vmatpush.bf16.msra.mxu0 %v2139
    %2475 = vmatpush.bf16.msra.mxu0 %v2138
    %2476 = vmatpush.bf16.msra.mxu0 %v2137
    %2477 = vmatpush.bf16.msra.mxu0 %v2136
    %2478 = vmatpush.bf16.msra.mxu0 %v2135
    %2479 = vmatpush.bf16.msra.mxu0 %v2134
    %2480 = vmatpush.bf16.msra.mxu0 %v2133
    %2481 = vmatmul.bf16.gmra.mxu0 %v2472
    %v2482 = vpop.f32.mrf.mxu0
    %v2483 = vadd.f32 %v2470, %v2482
    %v2484 = vpop.f32.mrf.mxu0
    %2485 = vdwg.mxu0
    %v2486 = vadd.f32 %v2483, %v1554
    %v2487 = vtanh.pop %v2486
    %v2488 = vpack.c.bf16 %v2487, %v2487
    %2489 = vmatpush.bf16.msra.mxu0 %v2220
    %2490 = vmatpush.bf16.msra.mxu0 %v2219
    %2491 = vmatpush.bf16.msra.mxu0 %v2218
    %2492 = vmatpush.bf16.msra.mxu0 %v2217
    %2493 = vmatpush.bf16.msra.mxu0 %v2216
    %2494 = vmatpush.bf16.msra.mxu0 %v2215
    %2495 = vmatpush.bf16.msra.mxu0 %v2214
    %2496 = vmatpush.bf16.msra.mxu0 %v2213
    %2497 = vmatmul.bf16.gmra.mxu0 %v2488
    %v2498 = vpop.f32.mrf.mxu0
    %v2499 = vadd.f32 %v1555, %v2498
    %v2500 = vpop.f32.mrf.mxu0
    %2501 = vdwg.mxu0
    %v2502 = vsel %vm2242, %v2499, -inf
    %2503 = vmax.xlane.f32.xlu0 %v2502
    %v2504 = vpop.xlane.xlu0 %2503
    %vm2505 = vcmp.ge.f32.partialorder %v2499, %v2504
    %v2506 = vsel %vm2505, %v229, 128
    %v2507 = vsel %vm2242, %v2506, 2147483647
    %v2508 = vand.u32 %v2507, 65535
    %v2509 = vshra.s32 %v2507, 16
    %v2510 = vcvt.s32.f32 %v2508
    %v2511 = vcvt.s32.f32 %v2509
    %2512 = vmin.xlane.f32.xlu0 %v2511
    %v2513 = vpop.xlane.xlu0 %2512
    %vm2514 = vcmp.eq.f32.partialorder %v2511, %v2513
    %v2515 = vsel %vm2514, %v2510, inf
    %2516 = vmin.xlane.f32.xlu0 %v2515
    %v2517 = vpop.xlane.xlu0 %2516
    %v2518 = vcvt.f32.s32 %v2517
    %v2519 = vcvt.f32.s32 %v2513
    %v2520 = vshll.u32 %v2519, 16
    %v2521 = vadd.s32 %v2520, %v2518
    %v2522 = vsub.f32 %v2499, %v2504
    %v2523 = vmul.f32 %v2522, 1.442695
    %v2524 = vpow.pop %v2523
    %v2525 = vsel %vm2242, %v2524, 0.0
    %2526 = vadd.xlane.f32.xlu0 %v2525
    %v2527 = vpop.xlane.xlu0 %2526
    %v2528 = vrcp.pop %v2527
    %v2529 = vmul.f32 %v2527, %v2528
    %v2530 = vsub.f32 1.0, %v2529
    %v2531 = vmul.f32 %v2528, %v2530
    %v2532 = vadd.f32 %v2528, %v2531
    %vm2533 = vweird.f32 %v2527
    %vm2534 = vweird.f32 %v2528
    %vm2535 = vmor %vm2533, %vm2534
    %v2536 = vsel %vm2535, %v2528, %v2532
    %v2537 = vand.u32 2147483647, %v2527
    %vm2538 = vcmp.eq.f32.partialorder %v2537, 8.507059e+37
    %v2539 = vand.u32 %v2527, 2147483648
    %v2540 = vor.u32 1.1754944e-38, %v2539
    %v2541 = vsel %vm2538, %v2540, %v2536
    %v2542 = vsel %vm2288, 1, 0
    %vm2543 = vcmp.eq.s32.totalorder %v2542, 1
    %vm2544 = vmand %vm1556, %vm2543
    %v2545 = vsel %vm2544, %v2521, %v2284
    %v2546 = vsel %vm2544, %v2541, %v2285
    %vm2547 = vcmp.eq.s32.totalorder %v2521, 2
    %vm2548 = vmand %vm2288, %vm2547
    %v2549 = vsel %vm2548, 1, %v2287
    %v2550 = vsel %vm2543, %v2417, %v2027
    %v2551 = vsel %vm2288, %v2521, %v2262
    %vm2552 = vcmp.eq.s32.totalorder %v2549, 0
    %vm2553 = vcmp.eq.s32.totalorder %v229, %v2551
    %v2554 = vsel %vm2553, 1, 0
    %v2555 = vcvt.s32.f32 %v2554
    %v2556 = vpack.c.bf16 %v2555, %v2555
    %2557 = vmatpush.bf16.msra.mxu0 %v1693
    %2558 = vmatpush.bf16.msra.mxu0 %v1690
    %2559 = vmatpush.bf16.msra.mxu0 %v1687
    %2560 = vmatpush.bf16.msra.mxu0 %v1684
    %2561 = vmatpush.bf16.msra.mxu0 %v1681
    %2562 = vmatpush.bf16.msra.mxu0 %v1678
    %2563 = vmatpush.bf16.msra.mxu0 %v1675
    %2564 = vmatpush.bf16.msra.mxu0 %v1672
    %2565 = vmatmul.bf16.gmra.mxu0 %v2556
    %v2566 = vpop.f32.mrf.mxu0
    %v2567 = vadd.f32 %v1721, %v2566
    %v2568 = vpop.f32.mrf.mxu0
    %2569 = vdwg.mxu0
    %2570 = vmatpush.bf16.msra.mxu0 %v1694
    %2571 = vmatpush.bf16.msra.mxu0 %v1691
    %2572 = vmatpush.bf16.msra.mxu0 %v1688
    %2573 = vmatpush.bf16.msra.mxu0 %v1685
    %2574 = vmatpush.bf16.msra.mxu0 %v1682
    %2575 = vmatpush.bf16.msra.mxu0 %v1679
    %2576 = vmatpush.bf16.msra.mxu0 %v1676
    %2577 = vmatpush.bf16.msra.mxu0 %v1673
    %2578 = vmatmul.bf16.gmra.mxu0 %v2556
    %v2579 = vpop.f32.mrf.mxu0
    %v2580 = vadd.f32 %v1722, %v2579
    %v2581 = vpop.f32.mrf.mxu0
    %2582 = vdwg.mxu0
    %2583 = vmatpush.bf16.msra.mxu0 %v1695
    %2584 = vmatpush.bf16.msra.mxu0 %v1692
    %2585 = vmatpush.bf16.msra.mxu0 %v1689
    %2586 = vmatpush.bf16.msra.mxu0 %v1686
    %2587 = vmatpush.bf16.msra.mxu0 %v1683
    %2588 = vmatpush.bf16.msra.mxu0 %v1680
    %2589 = vmatpush.bf16.msra.mxu0 %v1677
    %2590 = vmatpush.bf16.msra.mxu0 %v1674
    %2591 = vmatmul.bf16.gmra.mxu0 %v2556
    %v2592 = vpop.f32.mrf.mxu0
    %v2593 = vadd.f32 %v1723, %v2592
    %v2594 = vpop.f32.mrf.mxu0
    %2595 = vdwg.mxu0
    %v2596 = vpack.c.bf16 %v2550, %v2550
    %2597 = vmatpush.bf16.msra.mxu0 %v1905
    %2598 = vmatpush.bf16.msra.mxu0 %v1902
    %2599 = vmatpush.bf16.msra.mxu0 %v1899
    %2600 = vmatpush.bf16.msra.mxu0 %v1896
    %2601 = vmatpush.bf16.msra.mxu0 %v1893
    %2602 = vmatpush.bf16.msra.mxu0 %v1890
    %2603 = vmatpush.bf16.msra.mxu0 %v1887
    %2604 = vmatpush.bf16.msra.mxu0 %v1884
    %2605 = vmatmul.bf16.gmra.mxu0 %v2596
    %v2606 = vpop.f32.mrf.mxu0
    %v2607 = vadd.f32 %v1933, %v2606
    %v2608 = vpop.f32.mrf.mxu0
    %2609 = vdwg.mxu0
    %2610 = vmatpush.bf16.msra.mxu0 %v1906
    %2611 = vmatpush.bf16.msra.mxu0 %v1903
    %2612 = vmatpush.bf16.msra.mxu0 %v1900
    %2613 = vmatpush.bf16.msra.mxu0 %v1897
    %2614 = vmatpush.bf16.msra.mxu0 %v1894
    %2615 = vmatpush.bf16.msra.mxu0 %v1891
    %2616 = vmatpush.bf16.msra.mxu0 %v1888
    %2617 = vmatpush.bf16.msra.mxu0 %v1885
    %2618 = vmatmul.bf16.gmra.mxu0 %v2596
    %v2619 = vpop.f32.mrf.mxu0
    %v2620 = vadd.f32 %v1934, %v2619
    %v2621 = vpop.f32.mrf.mxu0
    %2622 = vdwg.mxu0
    %2623 = vmatpush.bf16.msra.mxu0 %v1907
    %2624 = vmatpush.bf16.msra.mxu0 %v1904
    %2625 = vmatpush.bf16.msra.mxu0 %v1901
    %2626 = vmatpush.bf16.msra.mxu0 %v1898
    %2627 = vmatpush.bf16.msra.mxu0 %v1895
    %2628 = vmatpush.bf16.msra.mxu0 %v1892
    %2629 = vmatpush.bf16.msra.mxu0 %v1889
    %2630 = vmatpush.bf16.msra.mxu0 %v1886
    %2631 = vmatmul.bf16.gmra.mxu0 %v2596
    %v2632 = vpop.f32.mrf.mxu0
    %v2633 = vadd.f32 %v1935, %v2632
    %v2634 = vpop.f32.mrf.mxu0
    %2635 = vdwg.mxu0
    %v2636 = vadd.f32 %v2567, %v2607
    %v2637 = vxor.u32 %v2636, 2147483648
    %v2638 = vmul.f32 %v2637, 1.442695
    %v2639 = vpow.pop %v2638
    %v2640 = vadd.f32 %v2639, 1.0
    %v2641 = vrcp.pop %v2640
    %v2642 = vmul.f32 %v2640, %v2641
    %v2643 = vsub.f32 1.0, %v2642
    %v2644 = vmul.f32 %v2641, %v2643
    %v2645 = vadd.f32 %v2641, %v2644
    %vm2646 = vweird.f32 %v2640
    %vm2647 = vweird.f32 %v2641
    %vm2648 = vmor %vm2646, %vm2647
    %v2649 = vsel %vm2648, %v2641, %v2645
    %v2650 = vand.u32 2147483647, %v2640
    %vm2651 = vcmp.eq.f32.partialorder %v2650, 8.507059e+37
    %v2652 = vand.u32 %v2640, 2147483648
    %v2653 = vor.u32 1.1754944e-38, %v2652
    %v2654 = vsel %vm2651, %v2653, %v2649
    %v2655 = vmul.f32 1.0, %v2654
    %v2656 = vadd.f32 %v2580, %v2620
    %v2657 = vxor.u32 %v2656, 2147483648
    %v2658 = vmul.f32 %v2657, 1.442695
    %v2659 = vpow.pop %v2658
    %v2660 = vadd.f32 %v2659, 1.0
    %v2661 = vrcp.pop %v2660
    %v2662 = vmul.f32 %v2660, %v2661
    %v2663 = vsub.f32 1.0, %v2662
    %v2664 = vmul.f32 %v2661, %v2663
    %v2665 = vadd.f32 %v2661, %v2664
    %vm2666 = vweird.f32 %v2660
    %vm2667 = vweird.f32 %v2661
    %vm2668 = vmor %vm2666, %vm2667
    %v2669 = vsel %vm2668, %v2661, %v2665
    %v2670 = vand.u32 2147483647, %v2660
    %vm2671 = vcmp.eq.f32.partialorder %v2670, 8.507059e+37
    %v2672 = vand.u32 %v2660, 2147483648
    %v2673 = vor.u32 1.1754944e-38, %v2672
    %v2674 = vsel %vm2671, %v2673, %v2669
    %v2675 = vmul.f32 1.0, %v2674
    %v2676 = vmul.f32 %v2655, %v2633
    %v2677 = vadd.f32 %v2593, %v2676
    %v2678 = vtanh.pop %v2677
    %v2679 = vsub.f32 1.0, %v2675
    %v2680 = vmul.f32 %v2679, %v2678
    %v2681 = vmul.f32 %v2675, %v2550
    %v2682 = vadd.f32 %v2680, %v2681
    %2683 = vmatpush.xpose.msra.mxu0 0.0
    %2684 = vmatpush.xpose.msra.mxu0 0.0
    %2685 = vmatpush.xpose.msra.mxu0 0.0
    %2686 = vmatpush.xpose.msra.mxu0 0.0
    %2687 = vmatpush.xpose.msra.mxu0 0.0
    %2688 = vmatpush.xpose.msra.mxu0 0.0
    %2689 = vmatpush.xpose.msra.mxu0 0.0
    %2690 = vmatpush.xpose.msra.mxu0 0.0
    %2691 = vmatpush.xpose.msra.mxu0 0.0
    %2692 = vmatpush.xpose.msra.mxu0 0.0
    %2693 = vmatpush.xpose.msra.mxu0 0.0
    %2694 = vmatpush.xpose.msra.mxu0 0.0
    %2695 = vmatpush.xpose.msra.mxu0 0.0
    %2696 = vmatpush.xpose.msra.mxu0 0.0
    %2697 = vmatpush.xpose.msra.mxu0 0.0
    %2698 = vmatpush.xpose.msra.mxu0 %v1473
    %2699 = vmatmul.f32.gmra.mxu0 %v2682
    %v2700 = vpop.f32.mrf.mxu0
    %v2701 = vadd.f32 0.0, %v2700
    %2702 = vdwg.mxu0
    %v2703 = vsel %vm2048, %v2701, -inf
    %2704 = vmax.xlane.f32.xlu0 %v2703
    %v2705 = vpop.xlane.xlu0 %2704
    %v2706 = vsub.f32 %v2701, %v2705
    %v2707 = vmul.f32 %v2706, 1.442695
    %v2708 = vpow.pop %v2707
    %v2709 = vsel %vm2048, %v2708, 0.0
    %2710 = vadd.xlane.f32.xlu0 %v2709
    %v2711 = vpop.xlane.xlu0 %2710
    %v2712 = vrcp.pop %v2711
    %v2713 = vmul.f32 %v2708, %v2712
    %v2715 = vsel %vm2060, %v2713, 0
    %2717 = vmatpush.msra.mxu0 0.0
    %2718 = vmatpush.msra.mxu0 0.0
    %2719 = vmatpush.msra.mxu0 0.0
    %2720 = vmatpush.msra.mxu0 0.0
    %2721 = vmatpush.msra.mxu0 0.0
    %2722 = vmatpush.msra.mxu0 0.0
    %2723 = vmatpush.msra.mxu0 0.0
    %2724 = vmatpush.msra.mxu0 0.0
    %2725 = vmatpush.msra.mxu0 0.0
    %2726 = vmatpush.msra.mxu0 0.0
    %2727 = vmatpush.msra.mxu0 0.0
    %2728 = vmatpush.msra.mxu0 0.0
    %2729 = vmatpush.msra.mxu0 0.0
    %2730 = vmatpush.msra.mxu0 0.0
    %2731 = vmatpush.msra.mxu0 0.0
    %2732 = vmatpush.msra.mxu0 %v1549
    %2733 = vmatmul.f32.gmra.mxu0 %v2715
    %v2734 = vpop.f32.mrf.mxu0
    %v2735 = vadd.f32 0.0, %v2734
    %2736 = vdwg.mxu0
    %v2737 = vpack.c.bf16 %v2682, %v2682
    %2738 = vmatpush.bf16.msra.mxu0 %v2140
    %2739 = vmatpush.bf16.msra.mxu0 %v2139
    %2740 = vmatpush.bf16.msra.mxu0 %v2138
    %2741 = vmatpush.bf16.msra.mxu0 %v2137
    %2742 = vmatpush.bf16.msra.mxu0 %v2136
    %2743 = vmatpush.bf16.msra.mxu0 %v2135
    %2744 = vmatpush.bf16.msra.mxu0 %v2134
    %2745 = vmatpush.bf16.msra.mxu0 %v2133
    %2746 = vmatmul.bf16.gmra.mxu0 %v2737
    %v2747 = vpop.f32.mrf.mxu0
    %v2748 = vadd.f32 %v2735, %v2747
    %v2749 = vpop.f32.mrf.mxu0
    %2750 = vdwg.mxu0
    %v2751 = vadd.f32 %v2748, %v1554
    %v2752 = vtanh.pop %v2751
    %v2753 = vpack.c.bf16 %v2752, %v2752
    %2754 = vmatpush.bf16.msra.mxu0 %v2220
    %2755 = vmatpush.bf16.msra.mxu0 %v2219
    %2756 = vmatpush.bf16.msra.mxu0 %v2218
    %2757 = vmatpush.bf16.msra.mxu0 %v2217
    %2758 = vmatpush.bf16.msra.mxu0 %v2216
    %2759 = vmatpush.bf16.msra.mxu0 %v2215
    %2760 = vmatpush.bf16.msra.mxu0 %v2214
    %2761 = vmatpush.bf16.msra.mxu0 %v2213
    %2762 = vmatmul.bf16.gmra.mxu0 %v2753
    %v2763 = vpop.f32.mrf.mxu0
    %v2764 = vadd.f32 %v1555, %v2763
    %v2765 = vpop.f32.mrf.mxu0
    %2766 = vdwg.mxu0
    %v2767 = vsel %vm2242, %v2764, -inf
    %2768 = vmax.xlane.f32.xlu0 %v2767
    %v2769 = vpop.xlane.xlu0 %2768
    %vm2770 = vcmp.ge.f32.partialorder %v2764, %v2769
    %v2771 = vsel %vm2770, %v229, 128
    %v2772 = vsel %vm2242, %v2771, 2147483647
    %v2773 = vand.u32 %v2772, 65535
    %v2774 = vshra.s32 %v2772, 16
    %v2775 = vcvt.s32.f32 %v2773
    %v2776 = vcvt.s32.f32 %v2774
    %2777 = vmin.xlane.f32.xlu0 %v2776
    %v2778 = vpop.xlane.xlu0 %2777
    %vm2779 = vcmp.eq.f32.partialorder %v2776, %v2778
    %v2780 = vsel %vm2779, %v2775, inf
    %2781 = vmin.xlane.f32.xlu0 %v2780
    %v2782 = vpop.xlane.xlu0 %2781
    %v2783 = vcvt.f32.s32 %v2782
    %v2784 = vcvt.f32.s32 %v2778
    %v2785 = vshll.u32 %v2784, 16
    %v2786 = vadd.s32 %v2785, %v2783
    %v2787 = vsub.f32 %v2764, %v2769
    %v2788 = vmul.f32 %v2787, 1.442695
    %v2789 = vpow.pop %v2788
    %v2790 = vsel %vm2242, %v2789, 0.0
    %2791 = vadd.xlane.f32.xlu0 %v2790
    %v2792 = vpop.xlane.xlu0 %2791
    %v2793 = vrcp.pop %v2792
    %v2794 = vmul.f32 %v2792, %v2793
    %v2795 = vsub.f32 1.0, %v2794
    %v2796 = vmul.f32 %v2793, %v2795
    %v2797 = vadd.f32 %v2793, %v2796
    %vm2798 = vweird.f32 %v2792
    %vm2799 = vweird.f32 %v2793
    %vm2800 = vmor %vm2798, %vm2799
    %v2801 = vsel %vm2800, %v2793, %v2797
    %v2802 = vand.u32 2147483647, %v2792
    %vm2803 = vcmp.eq.f32.partialorder %v2802, 8.507059e+37
    %v2804 = vand.u32 %v2792, 2147483648
    %v2805 = vor.u32 1.1754944e-38, %v2804
    %v2806 = vsel %vm2803, %v2805, %v2801
    %vm2807 = vcmp.eq.s32.totalorder %v229, 2
    %v2808 = vsel %vm2552, 1, 0
    %vm2809 = vcmp.eq.s32.totalorder %v2808, 1
    %vm2810 = vmand %vm2807, %vm2809
    %v2811 = vsel %vm2810, %v2786, %v2545
    %v2812 = vsel %vm2810, %v2806, %v2546
    %vm2813 = vcmp.eq.s32.totalorder %v2786, 2
    %vm2814 = vmand %vm2552, %vm2813
    %v2815 = vsel %vm2814, 1, %v2549
    %v2816 = vsel %vm2809, %v2682, %v2550
    %v2817 = vsel %vm2552, %v2786, %v2551
    %vm2818 = vcmp.eq.s32.totalorder %v2815, 0
    %vm2819 = vcmp.eq.s32.totalorder %v229, %v2817
    %v2820 = vsel %vm2819, 1, 0
    %v2821 = vcvt.s32.f32 %v2820
    %v2822 = vpack.c.bf16 %v2821, %v2821
    %2823 = vmatpush.bf16.msra.mxu0 %v1693
    %2824 = vmatpush.bf16.msra.mxu0 %v1690
    %2825 = vmatpush.bf16.msra.mxu0 %v1687
    %2826 = vmatpush.bf16.msra.mxu0 %v1684
    %2827 = vmatpush.bf16.msra.mxu0 %v1681
    %2828 = vmatpush.bf16.msra.mxu0 %v1678
    %2829 = vmatpush.bf16.msra.mxu0 %v1675
    %2830 = vmatpush.bf16.msra.mxu0 %v1672
    %2831 = vmatmul.bf16.gmra.mxu0 %v2822
    %v2832 = vpop.f32.mrf.mxu0
    %v2833 = vadd.f32 %v1721, %v2832
    %v2834 = vpop.f32.mrf.mxu0
    %2835 = vdwg.mxu0
    %2836 = vmatpush.bf16.msra.mxu0 %v1694
    %2837 = vmatpush.bf16.msra.mxu0 %v1691
    %2838 = vmatpush.bf16.msra.mxu0 %v1688
    %2839 = vmatpush.bf16.msra.mxu0 %v1685
    %2840 = vmatpush.bf16.msra.mxu0 %v1682
    %2841 = vmatpush.bf16.msra.mxu0 %v1679
    %2842 = vmatpush.bf16.msra.mxu0 %v1676
    %2843 = vmatpush.bf16.msra.mxu0 %v1673
    %2844 = vmatmul.bf16.gmra.mxu0 %v2822
    %v2845 = vpop.f32.mrf.mxu0
    %v2846 = vadd.f32 %v1722, %v2845
    %v2847 = vpop.f32.mrf.mxu0
    %2848 = vdwg.mxu0
    %2849 = vmatpush.bf16.msra.mxu0 %v1695
    %2850 = vmatpush.bf16.msra.mxu0 %v1692
    %2851 = vmatpush.bf16.msra.mxu0 %v1689
    %2852 = vmatpush.bf16.msra.mxu0 %v1686
    %2853 = vmatpush.bf16.msra.mxu0 %v1683
    %2854 = vmatpush.bf16.msra.mxu0 %v1680
    %2855 = vmatpush.bf16.msra.mxu0 %v1677
    %2856 = vmatpush.bf16.msra.mxu0 %v1674
    %2857 = vmatmul.bf16.gmra.mxu0 %v2822
    %v2858 = vpop.f32.mrf.mxu0
    %v2859 = vadd.f32 %v1723, %v2858
    %v2860 = vpop.f32.mrf.mxu0
    %2861 = vdwg.mxu0
    %v2862 = vpack.c.bf16 %v2816, %v2816
    %2863 = vmatpush.bf16.msra.mxu0 %v1905
    %2864 = vmatpush.bf16.msra.mxu0 %v1902
    %2865 = vmatpush.bf16.msra.mxu0 %v1899
    %2866 = vmatpush.bf16.msra.mxu0 %v1896
    %2867 = vmatpush.bf16.msra.mxu0 %v1893
    %2868 = vmatpush.bf16.msra.mxu0 %v1890
    %2869 = vmatpush.bf16.msra.mxu0 %v1887
    %2870 = vmatpush.bf16.msra.mxu0 %v1884
    %2871 = vmatmul.bf16.gmra.mxu0 %v2862
    %v2872 = vpop.f32.mrf.mxu0
    %v2873 = vadd.f32 %v1933, %v2872
    %v2874 = vpop.f32.mrf.mxu0
    %2875 = vdwg.mxu0
    %2876 = vmatpush.bf16.msra.mxu0 %v1906
    %2877 = vmatpush.bf16.msra.mxu0 %v1903
    %2878 = vmatpush.bf16.msra.mxu0 %v1900
    %2879 = vmatpush.bf16.msra.mxu0 %v1897
    %2880 = vmatpush.bf16.msra.mxu0 %v1894
    %2881 = vmatpush.bf16.msra.mxu0 %v1891
    %2882 = vmatpush.bf16.msra.mxu0 %v1888
    %2883 = vmatpush.bf16.msra.mxu0 %v1885
    %2884 = vmatmul.bf16.gmra.mxu0 %v2862
    %v2885 = vpop.f32.mrf.mxu0
    %v2886 = vadd.f32 %v1934, %v2885
    %v2887 = vpop.f32.mrf.mxu0
    %2888 = vdwg.mxu0
    %2889 = vmatpush.bf16.msra.mxu0 %v1907
    %2890 = vmatpush.bf16.msra.mxu0 %v1904
    %2891 = vmatpush.bf16.msra.mxu0 %v1901
    %2892 = vmatpush.bf16.msra.mxu0 %v1898
    %2893 = vmatpush.bf16.msra.mxu0 %v1895
    %2894 = vmatpush.bf16.msra.mxu0 %v1892
    %2895 = vmatpush.bf16.msra.mxu0 %v1889
    %2896 = vmatpush.bf16.msra.mxu0 %v1886
    %2897 = vmatmul.bf16.gmra.mxu0 %v2862
    %v2898 = vpop.f32.mrf.mxu0
    %v2899 = vadd.f32 %v1935, %v2898
    %v2900 = vpop.f32.mrf.mxu0
    %2901 = vdwg.mxu0
    %v2902 = vadd.f32 %v2833, %v2873
    %v2903 = vxor.u32 %v2902, 2147483648
    %v2904 = vmul.f32 %v2903, 1.442695
    %v2905 = vpow.pop %v2904
    %v2906 = vadd.f32 %v2905, 1.0
    %v2907 = vrcp.pop %v2906
    %v2908 = vmul.f32 %v2906, %v2907
    %v2909 = vsub.f32 1.0, %v2908
    %v2910 = vmul.f32 %v2907, %v2909
    %v2911 = vadd.f32 %v2907, %v2910
    %vm2912 = vweird.f32 %v2906
    %vm2913 = vweird.f32 %v2907
    %vm2914 = vmor %vm2912, %vm2913
    %v2915 = vsel %vm2914, %v2907, %v2911
    %v2916 = vand.u32 2147483647, %v2906
    %vm2917 = vcmp.eq.f32.partialorder %v2916, 8.507059e+37
    %v2918 = vand.u32 %v2906, 2147483648
    %v2919 = vor.u32 1.1754944e-38, %v2918
    %v2920 = vsel %vm2917, %v2919, %v2915
    %v2921 = vmul.f32 1.0, %v2920
    %v2922 = vadd.f32 %v2846, %v2886
    %v2923 = vxor.u32 %v2922, 2147483648
    %v2924 = vmul.f32 %v2923, 1.442695
    %v2925 = vpow.pop %v2924
    %v2926 = vadd.f32 %v2925, 1.0
    %v2927 = vrcp.pop %v2926
    %v2928 = vmul.f32 %v2926, %v2927
    %v2929 = vsub.f32 1.0, %v2928
    %v2930 = vmul.f32 %v2927, %v2929
    %v2931 = vadd.f32 %v2927, %v2930
    %vm2932 = vweird.f32 %v2926
    %vm2933 = vweird.f32 %v2927
    %vm2934 = vmor %vm2932, %vm2933
    %v2935 = vsel %vm2934, %v2927, %v2931
    %v2936 = vand.u32 2147483647, %v2926
    %vm2937 = vcmp.eq.f32.partialorder %v2936, 8.507059e+37
    %v2938 = vand.u32 %v2926, 2147483648
    %v2939 = vor.u32 1.1754944e-38, %v2938
    %v2940 = vsel %vm2937, %v2939, %v2935
    %v2941 = vmul.f32 1.0, %v2940
    %v2942 = vmul.f32 %v2921, %v2899
    %v2943 = vadd.f32 %v2859, %v2942
    %v2944 = vtanh.pop %v2943
    %v2945 = vsub.f32 1.0, %v2941
    %v2946 = vmul.f32 %v2945, %v2944
    %v2947 = vmul.f32 %v2941, %v2816
    %v2948 = vadd.f32 %v2946, %v2947
    %2949 = vmatpush.xpose.msra.mxu0 0.0
    %2950 = vmatpush.xpose.msra.mxu0 0.0
    %2951 = vmatpush.xpose.msra.mxu0 0.0
    %2952 = vmatpush.xpose.msra.mxu0 0.0
    %2953 = vmatpush.xpose.msra.mxu0 0.0
    %2954 = vmatpush.xpose.msra.mxu0 0.0
    %2955 = vmatpush.xpose.msra.mxu0 0.0
    %2956 = vmatpush.xpose.msra.mxu0 0.0
    %2957 = vmatpush.xpose.msra.mxu0 0.0
    %2958 = vmatpush.xpose.msra.mxu0 0.0
    %2959 = vmatpush.xpose.msra.mxu0 0.0
    %2960 = vmatpush.xpose.msra.mxu0 0.0
    %2961 = vmatpush.xpose.msra.mxu0 0.0
    %2962 = vmatpush.xpose.msra.mxu0 0.0
    %2963 = vmatpush.xpose.msra.mxu0 0.0
    %2964 = vmatpush.xpose.msra.mxu0 %v1473
    %2965 = vmatmul.f32.gmra.mxu0 %v2948
    %v2966 = vpop.f32.mrf.mxu0
    %v2967 = vadd.f32 0.0, %v2966
    %2968 = vdwg.mxu0
    %v2969 = vsel %vm2048, %v2967, -inf
    %2970 = vmax.xlane.f32.xlu0 %v2969
    %v2971 = vpop.xlane.xlu0 %2970
    %v2972 = vsub.f32 %v2967, %v2971
    %v2973 = vmul.f32 %v2972, 1.442695
    %v2974 = vpow.pop %v2973
    %v2975 = vsel %vm2048, %v2974, 0.0
    %2976 = vadd.xlane.f32.xlu0 %v2975
    %v2977 = vpop.xlane.xlu0 %2976
    %v2978 = vrcp.pop %v2977
    %v2979 = vmul.f32 %v2974, %v2978
    %v2981 = vsel %vm2060, %v2979, 0
    %2983 = vmatpush.msra.mxu0 0.0
    %2984 = vmatpush.msra.mxu0 0.0
    %2985 = vmatpush.msra.mxu0 0.0
    %2986 = vmatpush.msra.mxu0 0.0
    %2987 = vmatpush.msra.mxu0 0.0
    %2988 = vmatpush.msra.mxu0 0.0
    %2989 = vmatpush.msra.mxu0 0.0
    %2990 = vmatpush.msra.mxu0 0.0
    %2991 = vmatpush.msra.mxu0 0.0
    %2992 = vmatpush.msra.mxu0 0.0
    %2993 = vmatpush.msra.mxu0 0.0
    %2994 = vmatpush.msra.mxu0 0.0
    %2995 = vmatpush.msra.mxu0 0.0
    %2996 = vmatpush.msra.mxu0 0.0
    %2997 = vmatpush.msra.mxu0 0.0
    %2998 = vmatpush.msra.mxu0 %v1549
    %2999 = vmatmul.f32.gmra.mxu0 %v2981
    %v3000 = vpop.f32.mrf.mxu0
    %v3001 = vadd.f32 0.0, %v3000
    %3002 = vdwg.mxu0
    %v3003 = vpack.c.bf16 %v2948, %v2948
    %3004 = vmatpush.bf16.msra.mxu0 %v2140
    %3005 = vmatpush.bf16.msra.mxu0 %v2139
    %3006 = vmatpush.bf16.msra.mxu0 %v2138
    %3007 = vmatpush.bf16.msra.mxu0 %v2137
    %3008 = vmatpush.bf16.msra.mxu0 %v2136
    %3009 = vmatpush.bf16.msra.mxu0 %v2135
    %3010 = vmatpush.bf16.msra.mxu0 %v2134
    %3011 = vmatpush.bf16.msra.mxu0 %v2133
    %3012 = vmatmul.bf16.gmra.mxu0 %v3003
    %v3013 = vpop.f32.mrf.mxu0
    %v3014 = vadd.f32 %v3001, %v3013
    %v3015 = vpop.f32.mrf.mxu0
    %3016 = vdwg.mxu0
    %v3017 = vadd.f32 %v3014, %v1554
    %v3018 = vtanh.pop %v3017
    %v3019 = vpack.c.bf16 %v3018, %v3018
    %3020 = vmatpush.bf16.msra.mxu0 %v2220
    %3021 = vmatpush.bf16.msra.mxu0 %v2219
    %3022 = vmatpush.bf16.msra.mxu0 %v2218
    %3023 = vmatpush.bf16.msra.mxu0 %v2217
    %3024 = vmatpush.bf16.msra.mxu0 %v2216
    %3025 = vmatpush.bf16.msra.mxu0 %v2215
    %3026 = vmatpush.bf16.msra.mxu0 %v2214
    %3027 = vmatpush.bf16.msra.mxu0 %v2213
    %3028 = vmatmul.bf16.gmra.mxu0 %v3019
    %v3029 = vpop.f32.mrf.mxu0
    %v3030 = vadd.f32 %v1555, %v3029
    %v3031 = vpop.f32.mrf.mxu0
    %3032 = vdwg.mxu0
    %v3033 = vsel %vm2242, %v3030, -inf
    %3034 = vmax.xlane.f32.xlu0 %v3033
    %v3035 = vpop.xlane.xlu0 %3034
    %vm3036 = vcmp.ge.f32.partialorder %v3030, %v3035
    %v3037 = vsel %vm3036, %v229, 128
    %v3038 = vsel %vm2242, %v3037, 2147483647
    %v3039 = vand.u32 %v3038, 65535
    %v3040 = vshra.s32 %v3038, 16
    %v3041 = vcvt.s32.f32 %v3039
    %v3042 = vcvt.s32.f32 %v3040
    %3043 = vmin.xlane.f32.xlu0 %v3042
    %v3044 = vpop.xlane.xlu0 %3043
    %vm3045 = vcmp.eq.f32.partialorder %v3042, %v3044
    %v3046 = vsel %vm3045, %v3041, inf
    %3047 = vmin.xlane.f32.xlu0 %v3046
    %v3048 = vpop.xlane.xlu0 %3047
    %v3049 = vcvt.f32.s32 %v3048
    %v3050 = vcvt.f32.s32 %v3044
    %v3051 = vshll.u32 %v3050, 16
    %v3052 = vadd.s32 %v3051, %v3049
    %v3053 = vsub.f32 %v3030, %v3035
    %v3054 = vmul.f32 %v3053, 1.442695
    %v3055 = vpow.pop %v3054
    %v3056 = vsel %vm2242, %v3055, 0.0
    %3057 = vadd.xlane.f32.xlu0 %v3056
    %v3058 = vpop.xlane.xlu0 %3057
    %v3059 = vrcp.pop %v3058
    %v3060 = vmul.f32 %v3058, %v3059
    %v3061 = vsub.f32 1.0, %v3060
    %v3062 = vmul.f32 %v3059, %v3061
    %v3063 = vadd.f32 %v3059, %v3062
    %vm3064 = vweird.f32 %v3058
    %vm3065 = vweird.f32 %v3059
    %vm3066 = vmor %vm3064, %vm3065
    %v3067 = vsel %vm3066, %v3059, %v3063
    %v3068 = vand.u32 2147483647, %v3058
    %vm3069 = vcmp.eq.f32.partialorder %v3068, 8.507059e+37
    %v3070 = vand.u32 %v3058, 2147483648
    %v3071 = vor.u32 1.1754944e-38, %v3070
    %v3072 = vsel %vm3069, %v3071, %v3067
    %vm3073 = vcmp.eq.s32.totalorder %v229, 3
    %v3074 = vsel %vm2818, 1, 0
    %vm3075 = vcmp.eq.s32.totalorder %v3074, 1
    %vm3076 = vmand %vm3073, %vm3075
    %v3077 = vsel %vm3076, %v3052, %v2811
    %v3078 = vsel %vm3076, %v3072, %v2812
    %vm3079 = vcmp.eq.s32.totalorder %v3052, 2
    %vm3080 = vmand %vm2818, %vm3079
    %v3081 = vsel %vm3080, 1, %v2815
    %v3082 = vsel %vm3075, %v2948, %v2816
    %v3083 = vsel %vm2818, %v3052, %v2817
    %vm3084 = vcmp.eq.s32.totalorder %v3081, 0
    %vm3085 = vcmp.eq.s32.totalorder %v229, %v3083
    %v3086 = vsel %vm3085, 1, 0
    %v3087 = vcvt.s32.f32 %v3086
    %v3088 = vpack.c.bf16 %v3087, %v3087
    %3089 = vmatpush.bf16.msra.mxu0 %v1693
    %3090 = vmatpush.bf16.msra.mxu0 %v1690
    %3091 = vmatpush.bf16.msra.mxu0 %v1687
    %3092 = vmatpush.bf16.msra.mxu0 %v1684
    %3093 = vmatpush.bf16.msra.mxu0 %v1681
    %3094 = vmatpush.bf16.msra.mxu0 %v1678
    %3095 = vmatpush.bf16.msra.mxu0 %v1675
    %3096 = vmatpush.bf16.msra.mxu0 %v1672
    %3097 = vmatmul.bf16.gmra.mxu0 %v3088
    %v3098 = vpop.f32.mrf.mxu0
    %v3099 = vadd.f32 %v1721, %v3098
    %v3100 = vpop.f32.mrf.mxu0
    %3101 = vdwg.mxu0
    %3102 = vmatpush.bf16.msra.mxu0 %v1694
    %3103 = vmatpush.bf16.msra.mxu0 %v1691
    %3104 = vmatpush.bf16.msra.mxu0 %v1688
    %3105 = vmatpush.bf16.msra.mxu0 %v1685
    %3106 = vmatpush.bf16.msra.mxu0 %v1682
    %3107 = vmatpush.bf16.msra.mxu0 %v1679
    %3108 = vmatpush.bf16.msra.mxu0 %v1676
    %3109 = vmatpush.bf16.msra.mxu0 %v1673
    %3110 = vmatmul.bf16.gmra.mxu0 %v3088
    %v3111 = vpop.f32.mrf.mxu0
    %v3112 = vadd.f32 %v1722, %v3111
    %v3113 = vpop.f32.mrf.mxu0
    %3114 = vdwg.mxu0
    %3115 = vmatpush.bf16.msra.mxu0 %v1695
    %3116 = vmatpush.bf16.msra.mxu0 %v1692
    %3117 = vmatpush.bf16.msra.mxu0 %v1689
    %3118 = vmatpush.bf16.msra.mxu0 %v1686
    %3119 = vmatpush.bf16.msra.mxu0 %v1683
    %3120 = vmatpush.bf16.msra.mxu0 %v1680
    %3121 = vmatpush.bf16.msra.mxu0 %v1677
    %3122 = vmatpush.bf16.msra.mxu0 %v1674
    %3123 = vmatmul.bf16.gmra.mxu0 %v3088
    %v3124 = vpop.f32.mrf.mxu0
    %v3125 = vadd.f32 %v1723, %v3124
    %v3126 = vpop.f32.mrf.mxu0
    %3127 = vdwg.mxu0
    %v3128 = vpack.c.bf16 %v3082, %v3082
    %3129 = vmatpush.bf16.msra.mxu0 %v1905
    %3130 = vmatpush.bf16.msra.mxu0 %v1902
    %3131 = vmatpush.bf16.msra.mxu0 %v1899
    %3132 = vmatpush.bf16.msra.mxu0 %v1896
    %3133 = vmatpush.bf16.msra.mxu0 %v1893
    %3134 = vmatpush.bf16.msra.mxu0 %v1890
    %3135 = vmatpush.bf16.msra.mxu0 %v1887
    %3136 = vmatpush.bf16.msra.mxu0 %v1884
    %3137 = vmatmul.bf16.gmra.mxu0 %v3128
    %v3138 = vpop.f32.mrf.mxu0
    %v3139 = vadd.f32 %v1933, %v3138
    %v3140 = vpop.f32.mrf.mxu0
    %3141 = vdwg.mxu0
    %3142 = vmatpush.bf16.msra.mxu0 %v1906
    %3143 = vmatpush.bf16.msra.mxu0 %v1903
    %3144 = vmatpush.bf16.msra.mxu0 %v1900
    %3145 = vmatpush.bf16.msra.mxu0 %v1897
    %3146 = vmatpush.bf16.msra.mxu0 %v1894
    %3147 = vmatpush.bf16.msra.mxu0 %v1891
    %3148 = vmatpush.bf16.msra.mxu0 %v1888
    %3149 = vmatpush.bf16.msra.mxu0 %v1885
    %3150 = vmatmul.bf16.gmra.mxu0 %v3128
    %v3151 = vpop.f32.mrf.mxu0
    %v3152 = vadd.f32 %v1934, %v3151
    %v3153 = vpop.f32.mrf.mxu0
    %3154 = vdwg.mxu0
    %3155 = vmatpush.bf16.msra.mxu0 %v1907
    %3156 = vmatpush.bf16.msra.mxu0 %v1904
    %3157 = vmatpush.bf16.msra.mxu0 %v1901
    %3158 = vmatpush.bf16.msra.mxu0 %v1898
    %3159 = vmatpush.bf16.msra.mxu0 %v1895
    %3160 = vmatpush.bf16.msra.mxu0 %v1892
    %3161 = vmatpush.bf16.msra.mxu0 %v1889
    %3162 = vmatpush.bf16.msra.mxu0 %v1886
    %3163 = vmatmul.bf16.gmra.mxu0 %v3128
    %v3164 = vpop.f32.mrf.mxu0
    %v3165 = vadd.f32 %v1935, %v3164
    %v3166 = vpop.f32.mrf.mxu0
    %3167 = vdwg.mxu0
    %v3168 = vadd.f32 %v3099, %v3139
    %v3169 = vxor.u32 %v3168, 2147483648
    %v3170 = vmul.f32 %v3169, 1.442695
    %v3171 = vpow.pop %v3170
    %v3172 = vadd.f32 %v3171, 1.0
    %v3173 = vrcp.pop %v3172
    %v3174 = vmul.f32 %v3172, %v3173
    %v3175 = vsub.f32 1.0, %v3174
    %v3176 = vmul.f32 %v3173, %v3175
    %v3177 = vadd.f32 %v3173, %v3176
    %vm3178 = vweird.f32 %v3172
    %vm3179 = vweird.f32 %v3173
    %vm3180 = vmor %vm3178, %vm3179
    %v3181 = vsel %vm3180, %v3173, %v3177
    %v3182 = vand.u32 2147483647, %v3172
    %vm3183 = vcmp.eq.f32.partialorder %v3182, 8.507059e+37
    %v3184 = vand.u32 %v3172, 2147483648
    %v3185 = vor.u32 1.1754944e-38, %v3184
    %v3186 = vsel %vm3183, %v3185, %v3181
    %v3187 = vmul.f32 1.0, %v3186
    %v3188 = vadd.f32 %v3112, %v3152
    %v3189 = vxor.u32 %v3188, 2147483648
    %v3190 = vmul.f32 %v3189, 1.442695
    %v3191 = vpow.pop %v3190
    %v3192 = vadd.f32 %v3191, 1.0
    %v3193 = vrcp.pop %v3192
    %v3194 = vmul.f32 %v3192, %v3193
    %v3195 = vsub.f32 1.0, %v3194
    %v3196 = vmul.f32 %v3193, %v3195
    %v3197 = vadd.f32 %v3193, %v3196
    %vm3198 = vweird.f32 %v3192
    %vm3199 = vweird.f32 %v3193
    %vm3200 = vmor %vm3198, %vm3199
    %v3201 = vsel %vm3200, %v3193, %v3197
    %v3202 = vand.u32 2147483647, %v3192
    %vm3203 = vcmp.eq.f32.partialorder %v3202, 8.507059e+37
    %v3204 = vand.u32 %v3192, 2147483648
    %v3205 = vor.u32 1.1754944e-38, %v3204
    %v3206 = vsel %vm3203, %v3205, %v3201
    %v3207 = vmul.f32 1.0, %v3206
    %v3208 = vmul.f32 %v3187, %v3165
    %v3209 = vadd.f32 %v3125, %v3208
    %v3210 = vtanh.pop %v3209
    %v3211 = vsub.f32 1.0, %v3207
    %v3212 = vmul.f32 %v3211, %v3210
    %v3213 = vmul.f32 %v3207, %v3082
    %v3214 = vadd.f32 %v3212, %v3213
    %3215 = vmatpush.xpose.msra.mxu0 0.0
    %3216 = vmatpush.xpose.msra.mxu0 0.0
    %3217 = vmatpush.xpose.msra.mxu0 0.0
    %3218 = vmatpush.xpose.msra.mxu0 0.0
    %3219 = vmatpush.xpose.msra.mxu0 0.0
    %3220 = vmatpush.xpose.msra.mxu0 0.0
    %3221 = vmatpush.xpose.msra.mxu0 0.0
    %3222 = vmatpush.xpose.msra.mxu0 0.0
    %3223 = vmatpush.xpose.msra.mxu0 0.0
    %3224 = vmatpush.xpose.msra.mxu0 0.0
    %3225 = vmatpush.xpose.msra.mxu0 0.0
    %3226 = vmatpush.xpose.msra.mxu0 0.0
    %3227 = vmatpush.xpose.msra.mxu0 0.0
    %3228 = vmatpush.xpose.msra.mxu0 0.0
    %3229 = vmatpush.xpose.msra.mxu0 0.0
    %3230 = vmatpush.xpose.msra.mxu0 %v1473
    %3231 = vmatmul.f32.gmra.mxu0 %v3214
    %v3232 = vpop.f32.mrf.mxu0
    %v3233 = vadd.f32 0.0, %v3232
    %3234 = vdwg.mxu0
    %v3235 = vsel %vm2048, %v3233, -inf
    %3236 = vmax.xlane.f32.xlu0 %v3235
    %v3237 = vpop.xlane.xlu0 %3236
    %v3238 = vsub.f32 %v3233, %v3237
    %v3239 = vmul.f32 %v3238, 1.442695
    %v3240 = vpow.pop %v3239
    %v3241 = vsel %vm2048, %v3240, 0.0
    %3242 = vadd.xlane.f32.xlu0 %v3241
    %v3243 = vpop.xlane.xlu0 %3242
    %v3244 = vrcp.pop %v3243
    %v3245 = vmul.f32 %v3240, %v3244
    %v3247 = vsel %vm2060, %v3245, 0
    %3249 = vmatpush.msra.mxu0 0.0
    %3250 = vmatpush.msra.mxu0 0.0
    %3251 = vmatpush.msra.mxu0 0.0
    %3252 = vmatpush.msra.mxu0 0.0
    %3253 = vmatpush.msra.mxu0 0.0
    %3254 = vmatpush.msra.mxu0 0.0
    %3255 = vmatpush.msra.mxu0 0.0
    %3256 = vmatpush.msra.mxu0 0.0
    %3257 = vmatpush.msra.mxu0 0.0
    %3258 = vmatpush.msra.mxu0 0.0
    %3259 = vmatpush.msra.mxu0 0.0
    %3260 = vmatpush.msra.mxu0 0.0
    %3261 = vmatpush.msra.mxu0 0.0
    %3262 = vmatpush.msra.mxu0 0.0
    %3263 = vmatpush.msra.mxu0 0.0
    %3264 = vmatpush.msra.mxu0 %v1549
    %3265 = vmatmul.f32.gmra.mxu0 %v3247
    %v3266 = vpop.f32.mrf.mxu0
    %v3267 = vadd.f32 0.0, %v3266
    %3268 = vdwg.mxu0
    %v3269 = vpack.c.bf16 %v3214, %v3214
    %3270 = vmatpush.bf16.msra.mxu0 %v2140
    %3271 = vmatpush.bf16.msra.mxu0 %v2139
    %3272 = vmatpush.bf16.msra.mxu0 %v2138
    %3273 = vmatpush.bf16.msra.mxu0 %v2137
    %3274 = vmatpush.bf16.msra.mxu0 %v2136
    %3275 = vmatpush.bf16.msra.mxu0 %v2135
    %3276 = vmatpush.bf16.msra.mxu0 %v2134
    %3277 = vmatpush.bf16.msra.mxu0 %v2133
    %3278 = vmatmul.bf16.gmra.mxu0 %v3269
    %v3279 = vpop.f32.mrf.mxu0
    %v3280 = vadd.f32 %v3267, %v3279
    %v3281 = vpop.f32.mrf.mxu0
    %3282 = vdwg.mxu0
    %v3283 = vadd.f32 %v3280, %v1554
    %v3284 = vtanh.pop %v3283
    %v3285 = vpack.c.bf16 %v3284, %v3284
    %3286 = vmatpush.bf16.msra.mxu0 %v2220
    %3287 = vmatpush.bf16.msra.mxu0 %v2219
    %3288 = vmatpush.bf16.msra.mxu0 %v2218
    %3289 = vmatpush.bf16.msra.mxu0 %v2217
    %3290 = vmatpush.bf16.msra.mxu0 %v2216
    %3291 = vmatpush.bf16.msra.mxu0 %v2215
    %3292 = vmatpush.bf16.msra.mxu0 %v2214
    %3293 = vmatpush.bf16.msra.mxu0 %v2213
    %3294 = vmatmul.bf16.gmra.mxu0 %v3285
    %v3295 = vpop.f32.mrf.mxu0
    %v3296 = vadd.f32 %v1555, %v3295
    %v3297 = vpop.f32.mrf.mxu0
    %3298 = vdwg.mxu0
    %v3299 = vsel %vm2242, %v3296, -inf
    %3300 = vmax.xlane.f32.xlu0 %v3299
    %v3301 = vpop.xlane.xlu0 %3300
    %vm3302 = vcmp.ge.f32.partialorder %v3296, %v3301
    %v3303 = vsel %vm3302, %v229, 128
    %v3304 = vsel %vm2242, %v3303, 2147483647
    %v3305 = vand.u32 %v3304, 65535
    %v3306 = vshra.s32 %v3304, 16
    %v3307 = vcvt.s32.f32 %v3305
    %v3308 = vcvt.s32.f32 %v3306
    %3309 = vmin.xlane.f32.xlu0 %v3308
    %v3310 = vpop.xlane.xlu0 %3309
    %vm3311 = vcmp.eq.f32.partialorder %v3308, %v3310
    %v3312 = vsel %vm3311, %v3307, inf
    %3313 = vmin.xlane.f32.xlu0 %v3312
    %v3314 = vpop.xlane.xlu0 %3313
    %v3315 = vcvt.f32.s32 %v3314
    %v3316 = vcvt.f32.s32 %v3310
    %v3317 = vshll.u32 %v3316, 16
    %v3318 = vadd.s32 %v3317, %v3315
    %v3319 = vsub.f32 %v3296, %v3301
    %v3320 = vmul.f32 %v3319, 1.442695
    %v3321 = vpow.pop %v3320
    %v3322 = vsel %vm2242, %v3321, 0.0
    %3323 = vadd.xlane.f32.xlu0 %v3322
    %v3324 = vpop.xlane.xlu0 %3323
    %v3325 = vrcp.pop %v3324
    %v3326 = vmul.f32 %v3324, %v3325
    %v3327 = vsub.f32 1.0, %v3326
    %v3328 = vmul.f32 %v3325, %v3327
    %v3329 = vadd.f32 %v3325, %v3328
    %vm3330 = vweird.f32 %v3324
    %vm3331 = vweird.f32 %v3325
    %vm3332 = vmor %vm3330, %vm3331
    %v3333 = vsel %vm3332, %v3325, %v3329
    %v3334 = vand.u32 2147483647, %v3324
    %vm3335 = vcmp.eq.f32.partialorder %v3334, 8.507059e+37
    %v3336 = vand.u32 %v3324, 2147483648
    %v3337 = vor.u32 1.1754944e-38, %v3336
    %v3338 = vsel %vm3335, %v3337, %v3333
    %vm3339 = vcmp.eq.s32.totalorder %v229, 4
    %v3340 = vsel %vm3084, 1, 0
    %vm3341 = vcmp.eq.s32.totalorder %v3340, 1
    %vm3342 = vmand %vm3339, %vm3341
    %v3343 = vsel %vm3342, %v3318, %v3077
    %v3344 = vsel %vm3342, %v3338, %v3078
    %vm3345 = vcmp.eq.s32.totalorder %v3318, 2
    %vm3346 = vmand %vm3084, %vm3345
    %v3347 = vsel %vm3346, 1, %v3081
    %v3348 = vsel %vm3341, %v3214, %v3082
    %v3349 = vsel %vm3084, %v3318, %v3083
    %vm3350 = vcmp.eq.s32.totalorder %v3347, 0
    %vm3351 = vcmp.eq.s32.totalorder %v229, %v3349
    %v3352 = vsel %vm3351, 1, 0
    %v3353 = vcvt.s32.f32 %v3352
    %v3354 = vpack.c.bf16 %v3353, %v3353
    %3355 = vmatpush.bf16.msra.mxu0 %v1693
    %3356 = vmatpush.bf16.msra.mxu0 %v1690
    %3357 = vmatpush.bf16.msra.mxu0 %v1687
    %3358 = vmatpush.bf16.msra.mxu0 %v1684
    %3359 = vmatpush.bf16.msra.mxu0 %v1681
    %3360 = vmatpush.bf16.msra.mxu0 %v1678
    %3361 = vmatpush.bf16.msra.mxu0 %v1675
    %3362 = vmatpush.bf16.msra.mxu0 %v1672
    %3363 = vmatmul.bf16.gmra.mxu0 %v3354
    %v3364 = vpop.f32.mrf.mxu0
    %v3365 = vadd.f32 %v1721, %v3364
    %v3366 = vpop.f32.mrf.mxu0
    %3367 = vdwg.mxu0
    %3368 = vmatpush.bf16.msra.mxu0 %v1694
    %3369 = vmatpush.bf16.msra.mxu0 %v1691
    %3370 = vmatpush.bf16.msra.mxu0 %v1688
    %3371 = vmatpush.bf16.msra.mxu0 %v1685
    %3372 = vmatpush.bf16.msra.mxu0 %v1682
    %3373 = vmatpush.bf16.msra.mxu0 %v1679
    %3374 = vmatpush.bf16.msra.mxu0 %v1676
    %3375 = vmatpush.bf16.msra.mxu0 %v1673
    %3376 = vmatmul.bf16.gmra.mxu0 %v3354
    %v3377 = vpop.f32.mrf.mxu0
    %v3378 = vadd.f32 %v1722, %v3377
    %v3379 = vpop.f32.mrf.mxu0
    %3380 = vdwg.mxu0
    %3381 = vmatpush.bf16.msra.mxu0 %v1695
    %3382 = vmatpush.bf16.msra.mxu0 %v1692
    %3383 = vmatpush.bf16.msra.mxu0 %v1689
    %3384 = vmatpush.bf16.msra.mxu0 %v1686
    %3385 = vmatpush.bf16.msra.mxu0 %v1683
    %3386 = vmatpush.bf16.msra.mxu0 %v1680
    %3387 = vmatpush.bf16.msra.mxu0 %v1677
    %3388 = vmatpush.bf16.msra.mxu0 %v1674
    %3389 = vmatmul.bf16.gmra.mxu0 %v3354
    %v3390 = vpop.f32.mrf.mxu0
    %v3391 = vadd.f32 %v1723, %v3390
    %v3392 = vpop.f32.mrf.mxu0
    %3393 = vdwg.mxu0
    %v3394 = vpack.c.bf16 %v3348, %v3348
    %3395 = vmatpush.bf16.msra.mxu0 %v1905
    %3396 = vmatpush.bf16.msra.mxu0 %v1902
    %3397 = vmatpush.bf16.msra.mxu0 %v1899
    %3398 = vmatpush.bf16.msra.mxu0 %v1896
    %3399 = vmatpush.bf16.msra.mxu0 %v1893
    %3400 = vmatpush.bf16.msra.mxu0 %v1890
    %3401 = vmatpush.bf16.msra.mxu0 %v1887
    %3402 = vmatpush.bf16.msra.mxu0 %v1884
    %3403 = vmatmul.bf16.gmra.mxu0 %v3394
    %v3404 = vpop.f32.mrf.mxu0
    %v3405 = vadd.f32 %v1933, %v3404
    %v3406 = vpop.f32.mrf.mxu0
    %3407 = vdwg.mxu0
    %3408 = vmatpush.bf16.msra.mxu0 %v1906
    %3409 = vmatpush.bf16.msra.mxu0 %v1903
    %3410 = vmatpush.bf16.msra.mxu0 %v1900
    %3411 = vmatpush.bf16.msra.mxu0 %v1897
    %3412 = vmatpush.bf16.msra.mxu0 %v1894
    %3413 = vmatpush.bf16.msra.mxu0 %v1891
    %3414 = vmatpush.bf16.msra.mxu0 %v1888
    %3415 = vmatpush.bf16.msra.mxu0 %v1885
    %3416 = vmatmul.bf16.gmra.mxu0 %v3394
    %v3417 = vpop.f32.mrf.mxu0
    %v3418 = vadd.f32 %v1934, %v3417
    %v3419 = vpop.f32.mrf.mxu0
    %3420 = vdwg.mxu0
    %3421 = vmatpush.bf16.msra.mxu0 %v1907
    %3422 = vmatpush.bf16.msra.mxu0 %v1904
    %3423 = vmatpush.bf16.msra.mxu0 %v1901
    %3424 = vmatpush.bf16.msra.mxu0 %v1898
    %3425 = vmatpush.bf16.msra.mxu0 %v1895
    %3426 = vmatpush.bf16.msra.mxu0 %v1892
    %3427 = vmatpush.bf16.msra.mxu0 %v1889
    %3428 = vmatpush.bf16.msra.mxu0 %v1886
    %3429 = vmatmul.bf16.gmra.mxu0 %v3394
    %v3430 = vpop.f32.mrf.mxu0
    %v3431 = vadd.f32 %v1935, %v3430
    %v3432 = vpop.f32.mrf.mxu0
    %3433 = vdwg.mxu0
    %v3434 = vadd.f32 %v3365, %v3405
    %v3435 = vxor.u32 %v3434, 2147483648
    %v3436 = vmul.f32 %v3435, 1.442695
    %v3437 = vpow.pop %v3436
    %v3438 = vadd.f32 %v3437, 1.0
    %v3439 = vrcp.pop %v3438
    %v3440 = vmul.f32 %v3438, %v3439
    %v3441 = vsub.f32 1.0, %v3440
    %v3442 = vmul.f32 %v3439, %v3441
    %v3443 = vadd.f32 %v3439, %v3442
    %vm3444 = vweird.f32 %v3438
    %vm3445 = vweird.f32 %v3439
    %vm3446 = vmor %vm3444, %vm3445
    %v3447 = vsel %vm3446, %v3439, %v3443
    %v3448 = vand.u32 2147483647, %v3438
    %vm3449 = vcmp.eq.f32.partialorder %v3448, 8.507059e+37
    %v3450 = vand.u32 %v3438, 2147483648
    %v3451 = vor.u32 1.1754944e-38, %v3450
    %v3452 = vsel %vm3449, %v3451, %v3447
    %v3453 = vmul.f32 1.0, %v3452
    %v3454 = vadd.f32 %v3378, %v3418
    %v3455 = vxor.u32 %v3454, 2147483648
    %v3456 = vmul.f32 %v3455, 1.442695
    %v3457 = vpow.pop %v3456
    %v3458 = vadd.f32 %v3457, 1.0
    %v3459 = vrcp.pop %v3458
    %v3460 = vmul.f32 %v3458, %v3459
    %v3461 = vsub.f32 1.0, %v3460
    %v3462 = vmul.f32 %v3459, %v3461
    %v3463 = vadd.f32 %v3459, %v3462
    %vm3464 = vweird.f32 %v3458
    %vm3465 = vweird.f32 %v3459
    %vm3466 = vmor %vm3464, %vm3465
    %v3467 = vsel %vm3466, %v3459, %v3463
    %v3468 = vand.u32 2147483647, %v3458
    %vm3469 = vcmp.eq.f32.partialorder %v3468, 8.507059e+37
    %v3470 = vand.u32 %v3458, 2147483648
    %v3471 = vor.u32 1.1754944e-38, %v3470
    %v3472 = vsel %vm3469, %v3471, %v3467
    %v3473 = vmul.f32 1.0, %v3472
    %v3474 = vmul.f32 %v3453, %v3431
    %v3475 = vadd.f32 %v3391, %v3474
    %v3476 = vtanh.pop %v3475
    %v3477 = vsub.f32 1.0, %v3473
    %v3478 = vmul.f32 %v3477, %v3476
    %v3479 = vmul.f32 %v3473, %v3348
    %v3480 = vadd.f32 %v3478, %v3479
    %3481 = vmatpush.xpose.msra.mxu0 0.0
    %3482 = vmatpush.xpose.msra.mxu0 0.0
    %3483 = vmatpush.xpose.msra.mxu0 0.0
    %3484 = vmatpush.xpose.msra.mxu0 0.0
    %3485 = vmatpush.xpose.msra.mxu0 0.0
    %3486 = vmatpush.xpose.msra.mxu0 0.0
    %3487 = vmatpush.xpose.msra.mxu0 0.0
    %3488 = vmatpush.xpose.msra.mxu0 0.0
    %3489 = vmatpush.xpose.msra.mxu0 0.0
    %3490 = vmatpush.xpose.msra.mxu0 0.0
    %3491 = vmatpush.xpose.msra.mxu0 0.0
    %3492 = vmatpush.xpose.msra.mxu0 0.0
    %3493 = vmatpush.xpose.msra.mxu0 0.0
    %3494 = vmatpush.xpose.msra.mxu0 0.0
    %3495 = vmatpush.xpose.msra.mxu0 0.0
    %3496 = vmatpush.xpose.msra.mxu0 %v1473
    %3497 = vmatmul.f32.gmra.mxu0 %v3480
    %v3498 = vpop.f32.mrf.mxu0
    %v3499 = vadd.f32 0.0, %v3498
    %3500 = vdwg.mxu0
    %v3501 = vsel %vm2048, %v3499, -inf
    %3502 = vmax.xlane.f32.xlu0 %v3501
    %v3503 = vpop.xlane.xlu0 %3502
    %v3504 = vsub.f32 %v3499, %v3503
    %v3505 = vmul.f32 %v3504, 1.442695
    %v3506 = vpow.pop %v3505
    %v3507 = vsel %vm2048, %v3506, 0.0
    %3508 = vadd.xlane.f32.xlu0 %v3507
    %v3509 = vpop.xlane.xlu0 %3508
    %v3510 = vrcp.pop %v3509
    %v3511 = vmul.f32 %v3506, %v3510
    %v3513 = vsel %vm2060, %v3511, 0
    %3515 = vmatpush.msra.mxu0 0.0
    %3516 = vmatpush.msra.mxu0 0.0
    %3517 = vmatpush.msra.mxu0 0.0
    %3518 = vmatpush.msra.mxu0 0.0
    %3519 = vmatpush.msra.mxu0 0.0
    %3520 = vmatpush.msra.mxu0 0.0
    %3521 = vmatpush.msra.mxu0 0.0
    %3522 = vmatpush.msra.mxu0 0.0
    %3523 = vmatpush.msra.mxu0 0.0
    %3524 = vmatpush.msra.mxu0 0.0
    %3525 = vmatpush.msra.mxu0 0.0
    %3526 = vmatpush.msra.mxu0 0.0
    %3527 = vmatpush.msra.mxu0 0.0
    %3528 = vmatpush.msra.mxu0 0.0
    %3529 = vmatpush.msra.mxu0 0.0
    %3530 = vmatpush.msra.mxu0 %v1549
    %3531 = vmatmul.f32.gmra.mxu0 %v3513
    %v3532 = vpop.f32.mrf.mxu0
    %v3533 = vadd.f32 0.0, %v3532
    %3534 = vdwg.mxu0
    %v3535 = vpack.c.bf16 %v3480, %v3480
    %3536 = vmatpush.bf16.msra.mxu0 %v2140
    %3537 = vmatpush.bf16.msra.mxu0 %v2139
    %3538 = vmatpush.bf16.msra.mxu0 %v2138
    %3539 = vmatpush.bf16.msra.mxu0 %v2137
    %3540 = vmatpush.bf16.msra.mxu0 %v2136
    %3541 = vmatpush.bf16.msra.mxu0 %v2135
    %3542 = vmatpush.bf16.msra.mxu0 %v2134
    %3543 = vmatpush.bf16.msra.mxu0 %v2133
    %3544 = vmatmul.bf16.gmra.mxu0 %v3535
    %v3545 = vpop.f32.mrf.mxu0
    %v3546 = vadd.f32 %v3533, %v3545
    %v3547 = vpop.f32.mrf.mxu0
    %3548 = vdwg.mxu0
    %v3549 = vadd.f32 %v3546, %v1554
    %v3550 = vtanh.pop %v3549
    %v3551 = vpack.c.bf16 %v3550, %v3550
    %3552 = vmatpush.bf16.msra.mxu0 %v2220
    %3553 = vmatpush.bf16.msra.mxu0 %v2219
    %3554 = vmatpush.bf16.msra.mxu0 %v2218
    %3555 = vmatpush.bf16.msra.mxu0 %v2217
    %3556 = vmatpush.bf16.msra.mxu0 %v2216
    %3557 = vmatpush.bf16.msra.mxu0 %v2215
    %3558 = vmatpush.bf16.msra.mxu0 %v2214
    %3559 = vmatpush.bf16.msra.mxu0 %v2213
    %3560 = vmatmul.bf16.gmra.mxu0 %v3551
    %v3561 = vpop.f32.mrf.mxu0
    %v3562 = vadd.f32 %v1555, %v3561
    %v3563 = vpop.f32.mrf.mxu0
    %3564 = vdwg.mxu0
    %v3565 = vsel %vm2242, %v3562, -inf
    %3566 = vmax.xlane.f32.xlu0 %v3565
    %v3567 = vpop.xlane.xlu0 %3566
    %vm3568 = vcmp.ge.f32.partialorder %v3562, %v3567
    %v3569 = vsel %vm3568, %v229, 128
    %v3570 = vsel %vm2242, %v3569, 2147483647
    %v3571 = vand.u32 %v3570, 65535
    %v3572 = vshra.s32 %v3570, 16
    %v3573 = vcvt.s32.f32 %v3571
    %v3574 = vcvt.s32.f32 %v3572
    %3575 = vmin.xlane.f32.xlu0 %v3574
    %v3576 = vpop.xlane.xlu0 %3575
    %vm3577 = vcmp.eq.f32.partialorder %v3574, %v3576
    %v3578 = vsel %vm3577, %v3573, inf
    %3579 = vmin.xlane.f32.xlu0 %v3578
    %v3580 = vpop.xlane.xlu0 %3579
    %v3581 = vcvt.f32.s32 %v3580
    %v3582 = vcvt.f32.s32 %v3576
    %v3583 = vshll.u32 %v3582, 16
    %v3584 = vadd.s32 %v3583, %v3581
    %v3585 = vsub.f32 %v3562, %v3567
    %v3586 = vmul.f32 %v3585, 1.442695
    %v3587 = vpow.pop %v3586
    %v3588 = vsel %vm2242, %v3587, 0.0
    %3589 = vadd.xlane.f32.xlu0 %v3588
    %v3590 = vpop.xlane.xlu0 %3589
    %v3591 = vrcp.pop %v3590
    %v3592 = vmul.f32 %v3590, %v3591
    %v3593 = vsub.f32 1.0, %v3592
    %v3594 = vmul.f32 %v3591, %v3593
    %v3595 = vadd.f32 %v3591, %v3594
    %vm3596 = vweird.f32 %v3590
    %vm3597 = vweird.f32 %v3591
    %vm3598 = vmor %vm3596, %vm3597
    %v3599 = vsel %vm3598, %v3591, %v3595
    %v3600 = vand.u32 2147483647, %v3590
    %vm3601 = vcmp.eq.f32.partialorder %v3600, 8.507059e+37
    %v3602 = vand.u32 %v3590, 2147483648
    %v3603 = vor.u32 1.1754944e-38, %v3602
    %v3604 = vsel %vm3601, %v3603, %v3599
    %vm3605 = vcmp.eq.s32.totalorder %v229, 5
    %v3606 = vsel %vm3350, 1, 0
    %vm3607 = vcmp.eq.s32.totalorder %v3606, 1
    %vm3608 = vmand %vm3605, %vm3607
    %v3609 = vsel %vm3608, %v3584, %v3343
    %v3610 = vsel %vm3608, %v3604, %v3344
    %vm3611 = vcmask 40960
    %3612 = vst.msk [vmem:[#allocation22] sm:$0x1] %vm3611, %v3609
    %3613 = vst.msk [vmem:[#allocation23] sm:$0x1] %vm3611, %v3610
    // Predicated region
    $region106: #{_greedy_decode_device.1} parent=1 // pred_check
      _
    $region107: #{_greedy_decode_device.1} parent=1 // pred_check_branch
      %3615 = sbr.rel (0) target = $region109
    $region108: #{_greedy_decode_device.1} parent=1 // pred_region
      %3617 = vsyncadd [#allocation4], 0
      %s3619 = sshll.u32 [#allocation22], 4
      %s3620 = int_to_ptr.vmem [resolvable:$true] %s3619
      %s3621 = sshll.u32 %s14, 4
      %s3622 = int_to_ptr.hbm [resolvable:$true] %s3621
      %3624 = dma.vmem_to_hbm [thread:$0]  %s3620, 16, %s3622, [#allocation4]
    $region109: #{_greedy_decode_device.1} parent=1 // pred_fallthru
      _
    // Predicated region
    $region110: #{_greedy_decode_device.1} parent=1 // pred_check
      _
    $region111: #{_greedy_decode_device.1} parent=1 // pred_check_branch
      %3626 = sbr.rel (0) target = $region113
    $region112: #{_greedy_decode_device.1} parent=1 // pred_region
      %3628 = vsyncadd [#allocation24], 0
      %s3630 = sshll.u32 [#allocation23], 4
      %s3631 = int_to_ptr.vmem [resolvable:$true] %s3630
      %s3632 = sshll.u32 %s15, 4
      %s3633 = int_to_ptr.hbm [resolvable:$true] %s3632
      %3635 = dma.vmem_to_hbm [thread:$0]  %s3631, 16, %s3633, [#allocation24]
    $region113: #{_greedy_decode_device.1} parent=1 // pred_fallthru
      _
    // Predicated region
    $region114: #{_greedy_decode_device.1} parent=1 // pred_check
      _
    $region115: #{_greedy_decode_device.1} parent=1 // pred_check_branch
      %3637 = sbr.rel (0) target = $region117
    $region116: #{_greedy_decode_device.1} parent=1 // pred_region
      %3639 = dma.done [#allocation4], 16
    $region117: #{_greedy_decode_device.1} parent=1 // pred_fallthru
      _
    // Predicated region
    $region118: #{_greedy_decode_device.1} parent=1 // pred_check
      _
    $region119: #{_greedy_decode_device.1} parent=1 // pred_check_branch
      %3641 = sbr.rel (0) target = $region121
    $region120: #{_greedy_decode_device.1} parent=1 // pred_region
      %3643 = dma.done [#allocation24], 16
    $region121: #{_greedy_decode_device.1} parent=1 // pred_fallthru
      _
    %3644 = vsyncpa [#allocation3], 1
    %3645 = vsyncpa [#allocation8], 1
    %3646 = vsyncpa [#allocation11], 1
    %3647 = vsyncpa [#allocation14], 1
    %3648 = vsyncpa [#allocation17], 1
    %3649 = vsyncpa [#allocation20], 1
    %3650 = vsyncpa [#allocation4], 1
    %3651 = vsyncpa [#allocation24], 1
    %3652 = vsyncpa [#allocation5], 1

</llo_original>
